<compile_context>
chip_gen: v7x
topology: tpu7x:2x2x1
jax: 0.10.0
libtpu: 0.0.40
codegen_flags: <defaults>
</compile_context>

<pallas_src>
import math

import jax
import jax.numpy as jnp
from jax.experimental import pallas as pl
from jax.experimental.pallas import tpu as pltpu


# ---------------------------------------------------------------------------
# Host-side packing helpers
# ---------------------------------------------------------------------------
def _gate_perm(n_heads, H):
    """Column permutation: per-head [i,f,g,o] blocks -> gate-major [I|F|O|G],
    head-major inside each gate block (matches the packed hidden-state layout)."""
    idx = []
    for off in (0, H, 3 * H, 2 * H):           # i, f, o, g inside a head's 4H block
        for hd in range(n_heads):
            base = hd * 4 * H + off
            idx.extend(range(base, base + H))
    return jnp.asarray(idx, dtype=jnp.int32)


def _block_diag(blocks):
    n = len(blocks)
    rows = []
    for i, bi in enumerate(blocks):
        row = [bi if j == i else jnp.zeros((bi.shape[0], blocks[j].shape[1]), bi.dtype)
               for j in range(n)]
        rows.append(jnp.concatenate(row, axis=1))
    return jnp.concatenate(rows, axis=0)


def pack_params(params, seq, batch):
    """Convert per-head PyTorch-layout params to the fused-kernel operands."""
    n_heads = params["h0"].shape[0]
    num_layers = len(params["w_ih"])
    H = params["w_hh"][0].shape[-1]
    perm = _gate_perm(n_heads, H)

    wih_l, whh_l, b_l, h0_l, c0_l = [], [], [], [], []
    for l in range(num_layers):
        if l == 0:
            # all heads share the same input x -> concat along the gate axis
            w = jnp.concatenate([params["w_ih"][l][hd].T for hd in range(n_heads)], axis=1)
        else:
            # each head consumes its own previous-layer output -> block diagonal
            w = _block_diag([params["w_ih"][l][hd].T for hd in range(n_heads)])
        wih_l.append(w[:, perm])

        whh = _block_diag([params["w_hh"][l][hd].T for hd in range(n_heads)])
        whh_l.append(whh[:, perm])

        b = jnp.concatenate([params["b"][l][hd].reshape(-1) for hd in range(n_heads)])
        b_l.append(b[perm].reshape(1, -1))

        h0_l.append(jnp.concatenate([params["h0"][hd, l] for hd in range(n_heads)], axis=1))
        c0_l.append(jnp.concatenate([params["c0"][hd, l] for hd in range(n_heads)], axis=1))

    # Conv weight expanded so the kernel epilogue needs no relayout:
    # cw_full[hd*seq + t, p, b, h] = conv_w[p, hd*seq + t]
    conv_w = params["conv_w"]                       # (seq_out, n_heads*seq)
    seq_out = conv_w.shape[0]
    cw_full = jnp.tile(conv_w.T[:, :, None, None], (1, 1, batch, H))
    cb_full = jnp.tile(params["conv_b"].reshape(seq_out, 1, 1), (1, batch, H))
    return dict(wih=wih_l, whh=whh_l, b=b_l, h0=h0_l, c0=c0_l,
                conv_w=cw_full, conv_b=cb_full)


# ---------------------------------------------------------------------------
# Fused Pallas kernel (all LSTM layers + 1x1 conv epilogue, single program)
# ---------------------------------------------------------------------------
def make_lstm_block_kernel(num_layers, seq, batch, H, n_heads):
    NG = n_heads * H                                # packed hidden width

    def kernel(*refs):
        x_ref = refs[0]                             # (seq*batch, features)
        off = 1
        wih = refs[off:off + num_layers]; off += num_layers   # (in_dim_l, 4*NG)
        whh = refs[off:off + num_layers]; off += num_layers   # (NG, 4*NG)
        bias = refs[off:off + num_layers]; off += num_layers  # (1, 4*NG)
        h0 = refs[off:off + num_layers]; off += num_layers    # (batch, NG)
        c0 = refs[off:off + num_layers]; off += num_layers    # (batch, NG)
        cw_ref = refs[off]                          # (n_heads*seq, seq_out, batch, H)
        cb_ref = refs[off + 1]                      # (seq_out, batch, H)
        out_ref = refs[off + 2]                     # (seq_out, batch, H)
        gx_ref = refs[off + 3]                      # scratch (seq*batch, 4*NG)
        act_ref = refs[off + 4]                     # scratch (seq*batch, NG)

        inp = x_ref[...]                            # layer-0 input, (seq*batch, in_dim)
        for l in range(num_layers):
            # Hoisted input projection: one matmul for all heads & all timesteps.
            gx_ref[...] = (jnp.dot(inp, wih[l][...],
                                   preferred_element_type=jnp.float32)
                           + bias[l][...])
            whh_l = whh[l][...]                     # (NG, 4*NG) block-diagonal
            h = h0[l][...]                          # (batch, NG)
            c = c0[l][...]
            for t in range(seq):                    # static, fully unrolled
                gates = (gx_ref[t * batch:(t + 1) * batch, :]
                         + jnp.dot(h, whh_l, preferred_element_type=jnp.float32))
                sig = jax.nn.sigmoid(gates[:, :3 * NG])   # [I|F|O] slab
                g_g = jnp.tanh(gates[:, 3 * NG:])          # G slab
                i_g = sig[:, :NG]
                f_g = sig[:, NG:2 * NG]
                o_g = sig[:, 2 * NG:3 * NG]
                c = f_g * c + i_g * g_g
                h = o_g * jnp.tanh(c)
                act_ref[t * batch:(t + 1) * batch, :] = h
            inp = act_ref[...]                      # next layer's input (in VMEM)

        # Fused 1x1-conv epilogue:
        #   out[p,b,h] = sum_{hd,t} conv_w[p, hd*seq+t] * y[t,b,hd*H+h] + conv_b[p]
        y_all = inp                                 # final-layer activations (seq*batch, NG)
        acc = cb_ref[...]                           # (seq_out, batch, H)
        for hd in range(n_heads):
            for t in range(seq):
                y_sl = y_all[t * batch:(t + 1) * batch, hd * H:(hd + 1) * H]  # (batch, H)
                acc = acc + cw_ref[hd * seq + t] * y_sl[None, :, :]
        out_ref[...] = acc

    return kernel


# ---------------------------------------------------------------------------
# Wrapper
# ---------------------------------------------------------------------------
def lstm_block_forward(x, params):
    """x: (seq, batch, features) -> (1, n_his, batch, hidden)  (matches PyTorch)."""
    num_layers = len(params["w_ih"])
    n_heads = params["h0"].shape[0]
    seq, batch, features = x.shape
    H = params["w_hh"][0].shape[-1]
    NG = n_heads * H

    packed = pack_params(params, seq, batch)
    kernel = make_lstm_block_kernel(num_layers, seq, batch, H, n_heads)
    args = ([x.reshape(seq * batch, features)]
            + packed["wih"] + packed["whh"] + packed["b"]
            + packed["h0"] + packed["c0"]
            + [packed["conv_w"], packed["conv_b"]])

    out = pl.pallas_call(
        kernel,
        out_shape=jax.ShapeDtypeStruct((seq, batch, H), jnp.float32),
        scratch_shapes=[pltpu.VMEM((seq * batch, 4 * NG), jnp.float32),
                        pltpu.VMEM((seq * batch, NG), jnp.float32)],
    )(*args)
    return out[None]                                # (1, seq, batch, H)


# ---------------------------------------------------------------------------
# Deterministic parameter init (mirrors shapes in LSTMblock.__init__)
# ---------------------------------------------------------------------------
def init_params(key, features, hidden, num_layers, n_heads, seq, batch):
    H = hidden
    keys = iter(jax.random.split(key, 4 * num_layers + 8))
    bound = 1.0 / math.sqrt(H)                      # nn.LSTM default init
    w_ih, w_hh, bias = [], [], []
    for l in range(num_layers):
        in_dim = features if l == 0 else H
        w_ih.append(jax.random.uniform(next(keys), (n_heads, 4 * H, in_dim),
                                       jnp.float32, -bound, bound))
        w_hh.append(jax.random.uniform(next(keys), (n_heads, 4 * H, H),
                                       jnp.float32, -bound, bound))
        b_ih = jax.random.uniform(next(keys), (n_heads, 1, 4 * H),
                                  jnp.float32, -bound, bound)
        b_hh = jax.random.uniform(next(keys), (n_heads, 1, 4 * H),
                                  jnp.float32, -bound, bound)
        bias.append(b_ih + b_hh)

    # ho/co: xavier_uniform(gain=1.414) on shape (num_layers, node_num, hidden)
    gain = 1.414
    fan_in, fan_out = batch * H, num_layers * H
    xb = gain * math.sqrt(6.0 / (fan_in + fan_out))
    h0 = jax.random.uniform(next(keys), (n_heads, num_layers, batch, H),
                            jnp.float32, -xb, xb)
    c0 = jax.random.uniform(next(keys), (n_heads, num_layers, batch, H),
                            jnp.float32, -xb, xb)

    # Conv2d(n_heads*n_his -> n_his, kernel 1x1, bias=True)
    c_in = n_heads * seq
    cb = 1.0 / math.sqrt(c_in)
    conv_w = jax.random.uniform(next(keys), (seq, c_in), jnp.float32, -cb, cb)
    conv_b = jax.random.uniform(next(keys), (seq, 1), jnp.float32, -cb, cb)
    return dict(w_ih=w_ih, w_hh=w_hh, b=bias, h0=h0, c0=c0,
                conv_w=conv_w, conv_b=conv_b)


# ---------------------------------------------------------------------------
# Pure-JAX reference (same math as PyTorch, no Pallas) for correctness check
# ---------------------------------------------------------------------------
def lstm_block_reference(x, params):
    num_layers = len(params["w_ih"])
    n_heads = params["h0"].shape[0]
    seq, batch, _ = x.shape
    H = params["w_hh"][0].shape[-1]
    outs = []
    for hd in range(n_heads):
        inp = x
        for l in range(num_layers):
            wih = params["w_ih"][l][hd]
            whh = params["w_hh"][l][hd]
            b = params["b"][l][hd]
            h = params["h0"][hd, l]
            c = params["c0"][hd, l]
            ys = []
            for t in range(seq):
                gates = inp[t] @ wih.T + h @ whh.T + b
                i = jax.nn.sigmoid(gates[:, 0:H])
                f = jax.nn.sigmoid(gates[:, H:2 * H])
                g = jnp.tanh(gates[:, 2 * H:3 * H])
                o = jax.nn.sigmoid(gates[:, 3 * H:4 * H])
                c = f * c + i * g
                h = o * jnp.tanh(c)
                ys.append(h)
            inp = jnp.stack(ys)
        outs.append(inp)
    lstms_out = jnp.concatenate(outs, axis=0)
    xf = lstms_out.reshape(n_heads * seq, batch * H)
    of = params["conv_w"] @ xf + params["conv_b"]
    return of.reshape(1, seq, batch, H)


if __name__ == "__main__":
    # Small, self-consistent config:
    #   features=16, hidden=upper_T_hidden_dim=32, num_layers=upper_T_num_layers=2,
    #   n_heads=2, n_his=seq_len=8, node_num=batch=8.
    features, hidden, num_layers, n_heads = 16, 32, 2, 2
    n_his, node_num = 8, 8

    key = jax.random.PRNGKey(0)
    kx, kp = jax.random.split(key)
    x = jax.random.normal(kx, (n_his, node_num, features), jnp.float32)
    params = init_params(kp, features, hidden, num_layers, n_heads, n_his, node_num)

    out = jax.block_until_ready(lstm_block_forward(x, params))
    ref = lstm_block_reference(x, params)

    assert out.shape == (1, n_his, node_num, hidden), out.shape
    assert jnp.allclose(out, ref, atol=1e-4, rtol=1e-4), "mismatch vs reference"
    print("KERNEL_OK")
</pallas_src>

<mosaic_0001>
module attributes {stable_mosaic.version = 11 : i64} {
  func.func @kernel(%arg0: memref<64x16xf32, #tpu.memory_space<vmem>>, %arg1: memref<16x256xf32, #tpu.memory_space<vmem>>, %arg2: memref<64x256xf32, #tpu.memory_space<vmem>>, %arg3: memref<64x256xf32, #tpu.memory_space<vmem>>, %arg4: memref<64x256xf32, #tpu.memory_space<vmem>>, %arg5: memref<1x256xf32, #tpu.memory_space<vmem>>, %arg6: memref<1x256xf32, #tpu.memory_space<vmem>>, %arg7: memref<8x64xf32, #tpu.memory_space<vmem>>, %arg8: memref<8x64xf32, #tpu.memory_space<vmem>>, %arg9: memref<8x64xf32, #tpu.memory_space<vmem>>, %arg10: memref<8x64xf32, #tpu.memory_space<vmem>>, %arg11: memref<16x8x8x32xf32, #tpu.memory_space<vmem>>, %arg12: memref<8x8x32xf32, #tpu.memory_space<vmem>>, %arg13: memref<8x8x32xf32, #tpu.memory_space<vmem>>, %arg14: memref<64x256xf32, #tpu.memory_space<vmem>>, %arg15: memref<64x64xf32, #tpu.memory_space<vmem>>) attributes {dimension_semantics = [], scalar_prefetch = 0 : i64, scratch_operands = 2 : i64, tpu.core_type = #tpu.core_type<tc>} {
    %c0 = arith.constant 0 : index
    %c0_0 = arith.constant 0 : index
    %0 = vector.load %arg0[%c0, %c0_0] : memref<64x16xf32, #tpu.memory_space<vmem>>, vector<64x16xf32>
    %c0_1 = arith.constant 0 : index
    %c0_2 = arith.constant 0 : index
    %1 = vector.load %arg1[%c0_1, %c0_2] : memref<16x256xf32, #tpu.memory_space<vmem>>, vector<16x256xf32>
    %cst = arith.constant dense<0.000000e+00> : vector<64x256xf32>
    %2 = tpu.matmul %0, %1, %cst {dimension_numbers = #tpu.dot_dimension_numbers<[1], [0], [0], [1], [0, 0, 1, 1], [], []>} : vector<64x16xf32>, vector<16x256xf32>, vector<64x256xf32> -> vector<64x256xf32>
    %c0_3 = arith.constant 0 : index
    %c0_4 = arith.constant 0 : index
    %3 = vector.load %arg5[%c0_3, %c0_4] : memref<1x256xf32, #tpu.memory_space<vmem>>, vector<1x256xf32>
    %4 = vector.broadcast %3 : vector<1x256xf32> to vector<64x256xf32>
    %5 = arith.addf %2, %4 : vector<64x256xf32>
    %c0_5 = arith.constant 0 : index
    %c0_6 = arith.constant 0 : index
    %6 = vector.load %arg14[%c0_5, %c0_6] : memref<64x256xf32, #tpu.memory_space<vmem>>, vector<64x256xf32>
    tpu.vector_store %arg14[%c0_5, %c0_6], %5 {strides = array<i32>} : memref<64x256xf32, #tpu.memory_space<vmem>>, vector<64x256xf32>,
    %c0_7 = arith.constant 0 : index
    %c0_8 = arith.constant 0 : index
    %7 = vector.load %arg3[%c0_7, %c0_8] : memref<64x256xf32, #tpu.memory_space<vmem>>, vector<64x256xf32>
    %c0_9 = arith.constant 0 : index
    %c0_10 = arith.constant 0 : index
    %8 = vector.load %arg7[%c0_9, %c0_10] : memref<8x64xf32, #tpu.memory_space<vmem>>, vector<8x64xf32>
    %c0_11 = arith.constant 0 : index
    %c0_12 = arith.constant 0 : index
    %9 = vector.load %arg9[%c0_11, %c0_12] : memref<8x64xf32, #tpu.memory_space<vmem>>, vector<8x64xf32>
    %c0_13 = arith.constant 0 : index
    %c0_14 = arith.constant 0 : index
    %10 = vector.load %arg14[%c0_13, %c0_14] : memref<64x256xf32, #tpu.memory_space<vmem>>, vector<8x256xf32>
    %cst_15 = arith.constant dense<0.000000e+00> : vector<8x256xf32>
    %11 = tpu.matmul %8, %7, %cst_15 {dimension_numbers = #tpu.dot_dimension_numbers<[1], [0], [0], [1], [0, 0, 1, 1], [], []>} : vector<8x64xf32>, vector<64x256xf32>, vector<8x256xf32> -> vector<8x256xf32>
    %12 = arith.addf %10, %11 : vector<8x256xf32>
    %13 = vector.extract_strided_slice %12 {offsets = [0, 0], sizes = [8, 192], strides = [1, 1]} : vector<8x256xf32> to vector<8x192xf32>
    %14 = arith.negf %13 : vector<8x192xf32>
    %15 = math.exp %14 : vector<8x192xf32>
    %cst_16 = arith.constant 1.000000e+00 : f32
    %16 = vector.broadcast %cst_16 : f32 to vector<8x192xf32>
    %17 = arith.addf %16, %15 : vector<8x192xf32>
    %18 = arith.divf %16, %17 : vector<8x192xf32>
    %19 = vector.extract_strided_slice %12 {offsets = [0, 192], sizes = [8, 64], strides = [1, 1]} : vector<8x256xf32> to vector<8x64xf32>
    %20 = math.tanh %19 : vector<8x64xf32>
    %21 = vector.extract_strided_slice %18 {offsets = [0, 0], sizes = [8, 64], strides = [1, 1]} : vector<8x192xf32> to vector<8x64xf32>
    %22 = vector.extract_strided_slice %18 {offsets = [0, 64], sizes = [8, 64], strides = [1, 1]} : vector<8x192xf32> to vector<8x64xf32>
    %23 = vector.extract_strided_slice %18 {offsets = [0, 128], sizes = [8, 64], strides = [1, 1]} : vector<8x192xf32> to vector<8x64xf32>
    %24 = arith.mulf %22, %9 : vector<8x64xf32>
    %25 = arith.mulf %21, %20 : vector<8x64xf32>
    %26 = arith.addf %24, %25 : vector<8x64xf32>
    %27 = math.tanh %26 : vector<8x64xf32>
    %28 = arith.mulf %23, %27 : vector<8x64xf32>
    %c0_17 = arith.constant 0 : index
    %c0_18 = arith.constant 0 : index
    %29 = vector.load %arg15[%c0_17, %c0_18] : memref<64x64xf32, #tpu.memory_space<vmem>>, vector<8x64xf32>
    tpu.vector_store %arg15[%c0_17, %c0_18], %28 {strides = array<i32>} : memref<64x64xf32, #tpu.memory_space<vmem>>, vector<8x64xf32>,
    %c8 = arith.constant 8 : index
    %c0_19 = arith.constant 0 : index
    %30 = vector.load %arg14[%c8, %c0_19] : memref<64x256xf32, #tpu.memory_space<vmem>>, vector<8x256xf32>
    %cst_20 = arith.constant dense<0.000000e+00> : vector<8x256xf32>
    %31 = tpu.matmul %28, %7, %cst_20 {dimension_numbers = #tpu.dot_dimension_numbers<[1], [0], [0], [1], [0, 0, 1, 1], [], []>} : vector<8x64xf32>, vector<64x256xf32>, vector<8x256xf32> -> vector<8x256xf32>
    %32 = arith.addf %30, %31 : vector<8x256xf32>
    %33 = vector.extract_strided_slice %32 {offsets = [0, 0], sizes = [8, 192], strides = [1, 1]} : vector<8x256xf32> to vector<8x192xf32>
    %34 = arith.negf %33 : vector<8x192xf32>
    %35 = math.exp %34 : vector<8x192xf32>
    %cst_21 = arith.constant 1.000000e+00 : f32
    %36 = vector.broadcast %cst_21 : f32 to vector<8x192xf32>
    %37 = arith.addf %36, %35 : vector<8x192xf32>
    %38 = arith.divf %36, %37 : vector<8x192xf32>
    %39 = vector.extract_strided_slice %32 {offsets = [0, 192], sizes = [8, 64], strides = [1, 1]} : vector<8x256xf32> to vector<8x64xf32>
    %40 = math.tanh %39 : vector<8x64xf32>
    %41 = vector.extract_strided_slice %38 {offsets = [0, 0], sizes = [8, 64], strides = [1, 1]} : vector<8x192xf32> to vector<8x64xf32>
    %42 = vector.extract_strided_slice %38 {offsets = [0, 64], sizes = [8, 64], strides = [1, 1]} : vector<8x192xf32> to vector<8x64xf32>
    %43 = vector.extract_strided_slice %38 {offsets = [0, 128], sizes = [8, 64], strides = [1, 1]} : vector<8x192xf32> to vector<8x64xf32>
    %44 = arith.mulf %42, %26 : vector<8x64xf32>
    %45 = arith.mulf %41, %40 : vector<8x64xf32>
    %46 = arith.addf %44, %45 : vector<8x64xf32>
    %47 = math.tanh %46 : vector<8x64xf32>
    %48 = arith.mulf %43, %47 : vector<8x64xf32>
    %c8_22 = arith.constant 8 : index
    %c0_23 = arith.constant 0 : index
    %49 = vector.load %arg15[%c8_22, %c0_23] : memref<64x64xf32, #tpu.memory_space<vmem>>, vector<8x64xf32>
    tpu.vector_store %arg15[%c8_22, %c0_23], %48 {strides = array<i32>} : memref<64x64xf32, #tpu.memory_space<vmem>>, vector<8x64xf32>,
    %c16 = arith.constant 16 : index
    %c0_24 = arith.constant 0 : index
    %50 = vector.load %arg14[%c16, %c0_24] : memref<64x256xf32, #tpu.memory_space<vmem>>, vector<8x256xf32>
    %cst_25 = arith.constant dense<0.000000e+00> : vector<8x256xf32>
    %51 = tpu.matmul %48, %7, %cst_25 {dimension_numbers = #tpu.dot_dimension_numbers<[1], [0], [0], [1], [0, 0, 1, 1], [], []>} : vector<8x64xf32>, vector<64x256xf32>, vector<8x256xf32> -> vector<8x256xf32>
    %52 = arith.addf %50, %51 : vector<8x256xf32>
    %53 = vector.extract_strided_slice %52 {offsets = [0, 0], sizes = [8, 192], strides = [1, 1]} : vector<8x256xf32> to vector<8x192xf32>
    %54 = arith.negf %53 : vector<8x192xf32>
    %55 = math.exp %54 : vector<8x192xf32>
    %cst_26 = arith.constant 1.000000e+00 : f32
    %56 = vector.broadcast %cst_26 : f32 to vector<8x192xf32>
    %57 = arith.addf %56, %55 : vector<8x192xf32>
    %58 = arith.divf %56, %57 : vector<8x192xf32>
    %59 = vector.extract_strided_slice %52 {offsets = [0, 192], sizes = [8, 64], strides = [1, 1]} : vector<8x256xf32> to vector<8x64xf32>
    %60 = math.tanh %59 : vector<8x64xf32>
    %61 = vector.extract_strided_slice %58 {offsets = [0, 0], sizes = [8, 64], strides = [1, 1]} : vector<8x192xf32> to vector<8x64xf32>
    %62 = vector.extract_strided_slice %58 {offsets = [0, 64], sizes = [8, 64], strides = [1, 1]} : vector<8x192xf32> to vector<8x64xf32>
    %63 = vector.extract_strided_slice %58 {offsets = [0, 128], sizes = [8, 64], strides = [1, 1]} : vector<8x192xf32> to vector<8x64xf32>
    %64 = arith.mulf %62, %46 : vector<8x64xf32>
    %65 = arith.mulf %61, %60 : vector<8x64xf32>
    %66 = arith.addf %64, %65 : vector<8x64xf32>
    %67 = math.tanh %66 : vector<8x64xf32>
    %68 = arith.mulf %63, %67 : vector<8x64xf32>
    %c16_27 = arith.constant 16 : index
    %c0_28 = arith.constant 0 : index
    %69 = vector.load %arg15[%c16_27, %c0_28] : memref<64x64xf32, #tpu.memory_space<vmem>>, vector<8x64xf32>
    tpu.vector_store %arg15[%c16_27, %c0_28], %68 {strides = array<i32>} : memref<64x64xf32, #tpu.memory_space<vmem>>, vector<8x64xf32>,
    %c24 = arith.constant 24 : index
    %c0_29 = arith.constant 0 : index
    %70 = vector.load %arg14[%c24, %c0_29] : memref<64x256xf32, #tpu.memory_space<vmem>>, vector<8x256xf32>
    %cst_30 = arith.constant dense<0.000000e+00> : vector<8x256xf32>
    %71 = tpu.matmul %68, %7, %cst_30 {dimension_numbers = #tpu.dot_dimension_numbers<[1], [0], [0], [1], [0, 0, 1, 1], [], []>} : vector<8x64xf32>, vector<64x256xf32>, vector<8x256xf32> -> vector<8x256xf32>
    %72 = arith.addf %70, %71 : vector<8x256xf32>
    %73 = vector.extract_strided_slice %72 {offsets = [0, 0], sizes = [8, 192], strides = [1, 1]} : vector<8x256xf32> to vector<8x192xf32>
    %74 = arith.negf %73 : vector<8x192xf32>
    %75 = math.exp %74 : vector<8x192xf32>
    %cst_31 = arith.constant 1.000000e+00 : f32
    %76 = vector.broadcast %cst_31 : f32 to vector<8x192xf32>
    %77 = arith.addf %76, %75 : vector<8x192xf32>
    %78 = arith.divf %76, %77 : vector<8x192xf32>
    %79 = vector.extract_strided_slice %72 {offsets = [0, 192], sizes = [8, 64], strides = [1, 1]} : vector<8x256xf32> to vector<8x64xf32>
    %80 = math.tanh %79 : vector<8x64xf32>
    %81 = vector.extract_strided_slice %78 {offsets = [0, 0], sizes = [8, 64], strides = [1, 1]} : vector<8x192xf32> to vector<8x64xf32>
    %82 = vector.extract_strided_slice %78 {offsets = [0, 64], sizes = [8, 64], strides = [1, 1]} : vector<8x192xf32> to vector<8x64xf32>
    %83 = vector.extract_strided_slice %78 {offsets = [0, 128], sizes = [8, 64], strides = [1, 1]} : vector<8x192xf32> to vector<8x64xf32>
    %84 = arith.mulf %82, %66 : vector<8x64xf32>
    %85 = arith.mulf %81, %80 : vector<8x64xf32>
    %86 = arith.addf %84, %85 : vector<8x64xf32>
    %87 = math.tanh %86 : vector<8x64xf32>
    %88 = arith.mulf %83, %87 : vector<8x64xf32>
    %c24_32 = arith.constant 24 : index
    %c0_33 = arith.constant 0 : index
    %89 = vector.load %arg15[%c24_32, %c0_33] : memref<64x64xf32, #tpu.memory_space<vmem>>, vector<8x64xf32>
    tpu.vector_store %arg15[%c24_32, %c0_33], %88 {strides = array<i32>} : memref<64x64xf32, #tpu.memory_space<vmem>>, vector<8x64xf32>,
    %c32 = arith.constant 32 : index
    %c0_34 = arith.constant 0 : index
    %90 = vector.load %arg14[%c32, %c0_34] : memref<64x256xf32, #tpu.memory_space<vmem>>, vector<8x256xf32>
    %cst_35 = arith.constant dense<0.000000e+00> : vector<8x256xf32>
    %91 = tpu.matmul %88, %7, %cst_35 {dimension_numbers = #tpu.dot_dimension_numbers<[1], [0], [0], [1], [0, 0, 1, 1], [], []>} : vector<8x64xf32>, vector<64x256xf32>, vector<8x256xf32> -> vector<8x256xf32>
    %92 = arith.addf %90, %91 : vector<8x256xf32>
    %93 = vector.extract_strided_slice %92 {offsets = [0, 0], sizes = [8, 192], strides = [1, 1]} : vector<8x256xf32> to vector<8x192xf32>
    %94 = arith.negf %93 : vector<8x192xf32>
    %95 = math.exp %94 : vector<8x192xf32>
    %cst_36 = arith.constant 1.000000e+00 : f32
    %96 = vector.broadcast %cst_36 : f32 to vector<8x192xf32>
    %97 = arith.addf %96, %95 : vector<8x192xf32>
    %98 = arith.divf %96, %97 : vector<8x192xf32>
    %99 = vector.extract_strided_slice %92 {offsets = [0, 192], sizes = [8, 64], strides = [1, 1]} : vector<8x256xf32> to vector<8x64xf32>
    %100 = math.tanh %99 : vector<8x64xf32>
    %101 = vector.extract_strided_slice %98 {offsets = [0, 0], sizes = [8, 64], strides = [1, 1]} : vector<8x192xf32> to vector<8x64xf32>
    %102 = vector.extract_strided_slice %98 {offsets = [0, 64], sizes = [8, 64], strides = [1, 1]} : vector<8x192xf32> to vector<8x64xf32>
    %103 = vector.extract_strided_slice %98 {offsets = [0, 128], sizes = [8, 64], strides = [1, 1]} : vector<8x192xf32> to vector<8x64xf32>
    %104 = arith.mulf %102, %86 : vector<8x64xf32>
    %105 = arith.mulf %101, %100 : vector<8x64xf32>
    %106 = arith.addf %104, %105 : vector<8x64xf32>
    %107 = math.tanh %106 : vector<8x64xf32>
    %108 = arith.mulf %103, %107 : vector<8x64xf32>
    %c32_37 = arith.constant 32 : index
    %c0_38 = arith.constant 0 : index
    %109 = vector.load %arg15[%c32_37, %c0_38] : memref<64x64xf32, #tpu.memory_space<vmem>>, vector<8x64xf32>
    tpu.vector_store %arg15[%c32_37, %c0_38], %108 {strides = array<i32>} : memref<64x64xf32, #tpu.memory_space<vmem>>, vector<8x64xf32>,
    %c40 = arith.constant 40 : index
    %c0_39 = arith.constant 0 : index
    %110 = vector.load %arg14[%c40, %c0_39] : memref<64x256xf32, #tpu.memory_space<vmem>>, vector<8x256xf32>
    %cst_40 = arith.constant dense<0.000000e+00> : vector<8x256xf32>
    %111 = tpu.matmul %108, %7, %cst_40 {dimension_numbers = #tpu.dot_dimension_numbers<[1], [0], [0], [1], [0, 0, 1, 1], [], []>} : vector<8x64xf32>, vector<64x256xf32>, vector<8x256xf32> -> vector<8x256xf32>
    %112 = arith.addf %110, %111 : vector<8x256xf32>
    %113 = vector.extract_strided_slice %112 {offsets = [0, 0], sizes = [8, 192], strides = [1, 1]} : vector<8x256xf32> to vector<8x192xf32>
    %114 = arith.negf %113 : vector<8x192xf32>
    %115 = math.exp %114 : vector<8x192xf32>
    %cst_41 = arith.constant 1.000000e+00 : f32
    %116 = vector.broadcast %cst_41 : f32 to vector<8x192xf32>
    %117 = arith.addf %116, %115 : vector<8x192xf32>
    %118 = arith.divf %116, %117 : vector<8x192xf32>
    %119 = vector.extract_strided_slice %112 {offsets = [0, 192], sizes = [8, 64], strides = [1, 1]} : vector<8x256xf32> to vector<8x64xf32>
    %120 = math.tanh %119 : vector<8x64xf32>
    %121 = vector.extract_strided_slice %118 {offsets = [0, 0], sizes = [8, 64], strides = [1, 1]} : vector<8x192xf32> to vector<8x64xf32>
    %122 = vector.extract_strided_slice %118 {offsets = [0, 64], sizes = [8, 64], strides = [1, 1]} : vector<8x192xf32> to vector<8x64xf32>
    %123 = vector.extract_strided_slice %118 {offsets = [0, 128], sizes = [8, 64], strides = [1, 1]} : vector<8x192xf32> to vector<8x64xf32>
    %124 = arith.mulf %122, %106 : vector<8x64xf32>
    %125 = arith.mulf %121, %120 : vector<8x64xf32>
    %126 = arith.addf %124, %125 : vector<8x64xf32>
    %127 = math.tanh %126 : vector<8x64xf32>
    %128 = arith.mulf %123, %127 : vector<8x64xf32>
    %c40_42 = arith.constant 40 : index
    %c0_43 = arith.constant 0 : index
    %129 = vector.load %arg15[%c40_42, %c0_43] : memref<64x64xf32, #tpu.memory_space<vmem>>, vector<8x64xf32>
    tpu.vector_store %arg15[%c40_42, %c0_43], %128 {strides = array<i32>} : memref<64x64xf32, #tpu.memory_space<vmem>>, vector<8x64xf32>,
    %c48 = arith.constant 48 : index
    %c0_44 = arith.constant 0 : index
    %130 = vector.load %arg14[%c48, %c0_44] : memref<64x256xf32, #tpu.memory_space<vmem>>, vector<8x256xf32>
    %cst_45 = arith.constant dense<0.000000e+00> : vector<8x256xf32>
    %131 = tpu.matmul %128, %7, %cst_45 {dimension_numbers = #tpu.dot_dimension_numbers<[1], [0], [0], [1], [0, 0, 1, 1], [], []>} : vector<8x64xf32>, vector<64x256xf32>, vector<8x256xf32> -> vector<8x256xf32>
    %132 = arith.addf %130, %131 : vector<8x256xf32>
    %133 = vector.extract_strided_slice %132 {offsets = [0, 0], sizes = [8, 192], strides = [1, 1]} : vector<8x256xf32> to vector<8x192xf32>
    %134 = arith.negf %133 : vector<8x192xf32>
    %135 = math.exp %134 : vector<8x192xf32>
    %cst_46 = arith.constant 1.000000e+00 : f32
    %136 = vector.broadcast %cst_46 : f32 to vector<8x192xf32>
    %137 = arith.addf %136, %135 : vector<8x192xf32>
    %138 = arith.divf %136, %137 : vector<8x192xf32>
    %139 = vector.extract_strided_slice %132 {offsets = [0, 192], sizes = [8, 64], strides = [1, 1]} : vector<8x256xf32> to vector<8x64xf32>
    %140 = math.tanh %139 : vector<8x64xf32>
    %141 = vector.extract_strided_slice %138 {offsets = [0, 0], sizes = [8, 64], strides = [1, 1]} : vector<8x192xf32> to vector<8x64xf32>
    %142 = vector.extract_strided_slice %138 {offsets = [0, 64], sizes = [8, 64], strides = [1, 1]} : vector<8x192xf32> to vector<8x64xf32>
    %143 = vector.extract_strided_slice %138 {offsets = [0, 128], sizes = [8, 64], strides = [1, 1]} : vector<8x192xf32> to vector<8x64xf32>
    %144 = arith.mulf %142, %126 : vector<8x64xf32>
    %145 = arith.mulf %141, %140 : vector<8x64xf32>
    %146 = arith.addf %144, %145 : vector<8x64xf32>
    %147 = math.tanh %146 : vector<8x64xf32>
    %148 = arith.mulf %143, %147 : vector<8x64xf32>
    %c48_47 = arith.constant 48 : index
    %c0_48 = arith.constant 0 : index
    %149 = vector.load %arg15[%c48_47, %c0_48] : memref<64x64xf32, #tpu.memory_space<vmem>>, vector<8x64xf32>
    tpu.vector_store %arg15[%c48_47, %c0_48], %148 {strides = array<i32>} : memref<64x64xf32, #tpu.memory_space<vmem>>, vector<8x64xf32>,
    %c56 = arith.constant 56 : index
    %c0_49 = arith.constant 0 : index
    %150 = vector.load %arg14[%c56, %c0_49] : memref<64x256xf32, #tpu.memory_space<vmem>>, vector<8x256xf32>
    %cst_50 = arith.constant dense<0.000000e+00> : vector<8x256xf32>
    %151 = tpu.matmul %148, %7, %cst_50 {dimension_numbers = #tpu.dot_dimension_numbers<[1], [0], [0], [1], [0, 0, 1, 1], [], []>} : vector<8x64xf32>, vector<64x256xf32>, vector<8x256xf32> -> vector<8x256xf32>
    %152 = arith.addf %150, %151 : vector<8x256xf32>
    %153 = vector.extract_strided_slice %152 {offsets = [0, 0], sizes = [8, 192], strides = [1, 1]} : vector<8x256xf32> to vector<8x192xf32>
    %154 = arith.negf %153 : vector<8x192xf32>
    %155 = math.exp %154 : vector<8x192xf32>
    %cst_51 = arith.constant 1.000000e+00 : f32
    %156 = vector.broadcast %cst_51 : f32 to vector<8x192xf32>
    %157 = arith.addf %156, %155 : vector<8x192xf32>
    %158 = arith.divf %156, %157 : vector<8x192xf32>
    %159 = vector.extract_strided_slice %152 {offsets = [0, 192], sizes = [8, 64], strides = [1, 1]} : vector<8x256xf32> to vector<8x64xf32>
    %160 = math.tanh %159 : vector<8x64xf32>
    %161 = vector.extract_strided_slice %158 {offsets = [0, 0], sizes = [8, 64], strides = [1, 1]} : vector<8x192xf32> to vector<8x64xf32>
    %162 = vector.extract_strided_slice %158 {offsets = [0, 64], sizes = [8, 64], strides = [1, 1]} : vector<8x192xf32> to vector<8x64xf32>
    %163 = vector.extract_strided_slice %158 {offsets = [0, 128], sizes = [8, 64], strides = [1, 1]} : vector<8x192xf32> to vector<8x64xf32>
    %164 = arith.mulf %162, %146 : vector<8x64xf32>
    %165 = arith.mulf %161, %160 : vector<8x64xf32>
    %166 = arith.addf %164, %165 : vector<8x64xf32>
    %167 = math.tanh %166 : vector<8x64xf32>
    %168 = arith.mulf %163, %167 : vector<8x64xf32>
    %c56_52 = arith.constant 56 : index
    %c0_53 = arith.constant 0 : index
    %169 = vector.load %arg15[%c56_52, %c0_53] : memref<64x64xf32, #tpu.memory_space<vmem>>, vector<8x64xf32>
    tpu.vector_store %arg15[%c56_52, %c0_53], %168 {strides = array<i32>} : memref<64x64xf32, #tpu.memory_space<vmem>>, vector<8x64xf32>,
    %c0_54 = arith.constant 0 : index
    %c0_55 = arith.constant 0 : index
    %170 = vector.load %arg15[%c0_54, %c0_55] : memref<64x64xf32, #tpu.memory_space<vmem>>, vector<64x64xf32>
    %c0_56 = arith.constant 0 : index
    %c0_57 = arith.constant 0 : index
    %171 = vector.load %arg2[%c0_56, %c0_57] : memref<64x256xf32, #tpu.memory_space<vmem>>, vector<64x256xf32>
    %cst_58 = arith.constant dense<0.000000e+00> : vector<64x256xf32>
    %172 = tpu.matmul %170, %171, %cst_58 {dimension_numbers = #tpu.dot_dimension_numbers<[1], [0], [0], [1], [0, 0, 1, 1], [], []>} : vector<64x64xf32>, vector<64x256xf32>, vector<64x256xf32> -> vector<64x256xf32>
    %c0_59 = arith.constant 0 : index
    %c0_60 = arith.constant 0 : index
    %173 = vector.load %arg6[%c0_59, %c0_60] : memref<1x256xf32, #tpu.memory_space<vmem>>, vector<1x256xf32>
    %174 = vector.broadcast %173 : vector<1x256xf32> to vector<64x256xf32>
    %175 = arith.addf %172, %174 : vector<64x256xf32>
    %c0_61 = arith.constant 0 : index
    %c0_62 = arith.constant 0 : index
    %176 = vector.load %arg14[%c0_61, %c0_62] : memref<64x256xf32, #tpu.memory_space<vmem>>, vector<64x256xf32>
    tpu.vector_store %arg14[%c0_61, %c0_62], %175 {strides = array<i32>} : memref<64x256xf32, #tpu.memory_space<vmem>>, vector<64x256xf32>,
    %c0_63 = arith.constant 0 : index
    %c0_64 = arith.constant 0 : index
    %177 = vector.load %arg4[%c0_63, %c0_64] : memref<64x256xf32, #tpu.memory_space<vmem>>, vector<64x256xf32>
    %c0_65 = arith.constant 0 : index
    %c0_66 = arith.constant 0 : index
    %178 = vector.load %arg8[%c0_65, %c0_66] : memref<8x64xf32, #tpu.memory_space<vmem>>, vector<8x64xf32>
    %c0_67 = arith.constant 0 : index
    %c0_68 = arith.constant 0 : index
    %179 = vector.load %arg10[%c0_67, %c0_68] : memref<8x64xf32, #tpu.memory_space<vmem>>, vector<8x64xf32>
    %c0_69 = arith.constant 0 : index
    %c0_70 = arith.constant 0 : index
    %180 = vector.load %arg14[%c0_69, %c0_70] : memref<64x256xf32, #tpu.memory_space<vmem>>, vector<8x256xf32>
    %cst_71 = arith.constant dense<0.000000e+00> : vector<8x256xf32>
    %181 = tpu.matmul %178, %177, %cst_71 {dimension_numbers = #tpu.dot_dimension_numbers<[1], [0], [0], [1], [0, 0, 1, 1], [], []>} : vector<8x64xf32>, vector<64x256xf32>, vector<8x256xf32> -> vector<8x256xf32>
    %182 = arith.addf %180, %181 : vector<8x256xf32>
    %183 = vector.extract_strided_slice %182 {offsets = [0, 0], sizes = [8, 192], strides = [1, 1]} : vector<8x256xf32> to vector<8x192xf32>
    %184 = arith.negf %183 : vector<8x192xf32>
    %185 = math.exp %184 : vector<8x192xf32>
    %cst_72 = arith.constant 1.000000e+00 : f32
    %186 = vector.broadcast %cst_72 : f32 to vector<8x192xf32>
    %187 = arith.addf %186, %185 : vector<8x192xf32>
    %188 = arith.divf %186, %187 : vector<8x192xf32>
    %189 = vector.extract_strided_slice %182 {offsets = [0, 192], sizes = [8, 64], strides = [1, 1]} : vector<8x256xf32> to vector<8x64xf32>
    %190 = math.tanh %189 : vector<8x64xf32>
    %191 = vector.extract_strided_slice %188 {offsets = [0, 0], sizes = [8, 64], strides = [1, 1]} : vector<8x192xf32> to vector<8x64xf32>
    %192 = vector.extract_strided_slice %188 {offsets = [0, 64], sizes = [8, 64], strides = [1, 1]} : vector<8x192xf32> to vector<8x64xf32>
    %193 = vector.extract_strided_slice %188 {offsets = [0, 128], sizes = [8, 64], strides = [1, 1]} : vector<8x192xf32> to vector<8x64xf32>
    %194 = arith.mulf %192, %179 : vector<8x64xf32>
    %195 = arith.mulf %191, %190 : vector<8x64xf32>
    %196 = arith.addf %194, %195 : vector<8x64xf32>
    %197 = math.tanh %196 : vector<8x64xf32>
    %198 = arith.mulf %193, %197 : vector<8x64xf32>
    %c0_73 = arith.constant 0 : index
    %c0_74 = arith.constant 0 : index
    %199 = vector.load %arg15[%c0_73, %c0_74] : memref<64x64xf32, #tpu.memory_space<vmem>>, vector<8x64xf32>
    tpu.vector_store %arg15[%c0_73, %c0_74], %198 {strides = array<i32>} : memref<64x64xf32, #tpu.memory_space<vmem>>, vector<8x64xf32>,
    %c8_75 = arith.constant 8 : index
    %c0_76 = arith.constant 0 : index
    %200 = vector.load %arg14[%c8_75, %c0_76] : memref<64x256xf32, #tpu.memory_space<vmem>>, vector<8x256xf32>
    %cst_77 = arith.constant dense<0.000000e+00> : vector<8x256xf32>
    %201 = tpu.matmul %198, %177, %cst_77 {dimension_numbers = #tpu.dot_dimension_numbers<[1], [0], [0], [1], [0, 0, 1, 1], [], []>} : vector<8x64xf32>, vector<64x256xf32>, vector<8x256xf32> -> vector<8x256xf32>
    %202 = arith.addf %200, %201 : vector<8x256xf32>
    %203 = vector.extract_strided_slice %202 {offsets = [0, 0], sizes = [8, 192], strides = [1, 1]} : vector<8x256xf32> to vector<8x192xf32>
    %204 = arith.negf %203 : vector<8x192xf32>
    %205 = math.exp %204 : vector<8x192xf32>
    %cst_78 = arith.constant 1.000000e+00 : f32
    %206 = vector.broadcast %cst_78 : f32 to vector<8x192xf32>
    %207 = arith.addf %206, %205 : vector<8x192xf32>
    %208 = arith.divf %206, %207 : vector<8x192xf32>
    %209 = vector.extract_strided_slice %202 {offsets = [0, 192], sizes = [8, 64], strides = [1, 1]} : vector<8x256xf32> to vector<8x64xf32>
    %210 = math.tanh %209 : vector<8x64xf32>
    %211 = vector.extract_strided_slice %208 {offsets = [0, 0], sizes = [8, 64], strides = [1, 1]} : vector<8x192xf32> to vector<8x64xf32>
    %212 = vector.extract_strided_slice %208 {offsets = [0, 64], sizes = [8, 64], strides = [1, 1]} : vector<8x192xf32> to vector<8x64xf32>
    %213 = vector.extract_strided_slice %208 {offsets = [0, 128], sizes = [8, 64], strides = [1, 1]} : vector<8x192xf32> to vector<8x64xf32>
    %214 = arith.mulf %212, %196 : vector<8x64xf32>
    %215 = arith.mulf %211, %210 : vector<8x64xf32>
    %216 = arith.addf %214, %215 : vector<8x64xf32>
    %217 = math.tanh %216 : vector<8x64xf32>
    %218 = arith.mulf %213, %217 : vector<8x64xf32>
    %c8_79 = arith.constant 8 : index
    %c0_80 = arith.constant 0 : index
    %219 = vector.load %arg15[%c8_79, %c0_80] : memref<64x64xf32, #tpu.memory_space<vmem>>, vector<8x64xf32>
    tpu.vector_store %arg15[%c8_79, %c0_80], %218 {strides = array<i32>} : memref<64x64xf32, #tpu.memory_space<vmem>>, vector<8x64xf32>,
    %c16_81 = arith.constant 16 : index
    %c0_82 = arith.constant 0 : index
    %220 = vector.load %arg14[%c16_81, %c0_82] : memref<64x256xf32, #tpu.memory_space<vmem>>, vector<8x256xf32>
    %cst_83 = arith.constant dense<0.000000e+00> : vector<8x256xf32>
    %221 = tpu.matmul %218, %177, %cst_83 {dimension_numbers = #tpu.dot_dimension_numbers<[1], [0], [0], [1], [0, 0, 1, 1], [], []>} : vector<8x64xf32>, vector<64x256xf32>, vector<8x256xf32> -> vector<8x256xf32>
    %222 = arith.addf %220, %221 : vector<8x256xf32>
    %223 = vector.extract_strided_slice %222 {offsets = [0, 0], sizes = [8, 192], strides = [1, 1]} : vector<8x256xf32> to vector<8x192xf32>
    %224 = arith.negf %223 : vector<8x192xf32>
    %225 = math.exp %224 : vector<8x192xf32>
    %cst_84 = arith.constant 1.000000e+00 : f32
    %226 = vector.broadcast %cst_84 : f32 to vector<8x192xf32>
    %227 = arith.addf %226, %225 : vector<8x192xf32>
    %228 = arith.divf %226, %227 : vector<8x192xf32>
    %229 = vector.extract_strided_slice %222 {offsets = [0, 192], sizes = [8, 64], strides = [1, 1]} : vector<8x256xf32> to vector<8x64xf32>
    %230 = math.tanh %229 : vector<8x64xf32>
    %231 = vector.extract_strided_slice %228 {offsets = [0, 0], sizes = [8, 64], strides = [1, 1]} : vector<8x192xf32> to vector<8x64xf32>
    %232 = vector.extract_strided_slice %228 {offsets = [0, 64], sizes = [8, 64], strides = [1, 1]} : vector<8x192xf32> to vector<8x64xf32>
    %233 = vector.extract_strided_slice %228 {offsets = [0, 128], sizes = [8, 64], strides = [1, 1]} : vector<8x192xf32> to vector<8x64xf32>
    %234 = arith.mulf %232, %216 : vector<8x64xf32>
    %235 = arith.mulf %231, %230 : vector<8x64xf32>
    %236 = arith.addf %234, %235 : vector<8x64xf32>
    %237 = math.tanh %236 : vector<8x64xf32>
    %238 = arith.mulf %233, %237 : vector<8x64xf32>
    %c16_85 = arith.constant 16 : index
    %c0_86 = arith.constant 0 : index
    %239 = vector.load %arg15[%c16_85, %c0_86] : memref<64x64xf32, #tpu.memory_space<vmem>>, vector<8x64xf32>
    tpu.vector_store %arg15[%c16_85, %c0_86], %238 {strides = array<i32>} : memref<64x64xf32, #tpu.memory_space<vmem>>, vector<8x64xf32>,
    %c24_87 = arith.constant 24 : index
    %c0_88 = arith.constant 0 : index
    %240 = vector.load %arg14[%c24_87, %c0_88] : memref<64x256xf32, #tpu.memory_space<vmem>>, vector<8x256xf32>
    %cst_89 = arith.constant dense<0.000000e+00> : vector<8x256xf32>
    %241 = tpu.matmul %238, %177, %cst_89 {dimension_numbers = #tpu.dot_dimension_numbers<[1], [0], [0], [1], [0, 0, 1, 1], [], []>} : vector<8x64xf32>, vector<64x256xf32>, vector<8x256xf32> -> vector<8x256xf32>
    %242 = arith.addf %240, %241 : vector<8x256xf32>
    %243 = vector.extract_strided_slice %242 {offsets = [0, 0], sizes = [8, 192], strides = [1, 1]} : vector<8x256xf32> to vector<8x192xf32>
    %244 = arith.negf %243 : vector<8x192xf32>
    %245 = math.exp %244 : vector<8x192xf32>
    %cst_90 = arith.constant 1.000000e+00 : f32
    %246 = vector.broadcast %cst_90 : f32 to vector<8x192xf32>
    %247 = arith.addf %246, %245 : vector<8x192xf32>
    %248 = arith.divf %246, %247 : vector<8x192xf32>
    %249 = vector.extract_strided_slice %242 {offsets = [0, 192], sizes = [8, 64], strides = [1, 1]} : vector<8x256xf32> to vector<8x64xf32>
    %250 = math.tanh %249 : vector<8x64xf32>
    %251 = vector.extract_strided_slice %248 {offsets = [0, 0], sizes = [8, 64], strides = [1, 1]} : vector<8x192xf32> to vector<8x64xf32>
    %252 = vector.extract_strided_slice %248 {offsets = [0, 64], sizes = [8, 64], strides = [1, 1]} : vector<8x192xf32> to vector<8x64xf32>
    %253 = vector.extract_strided_slice %248 {offsets = [0, 128], sizes = [8, 64], strides = [1, 1]} : vector<8x192xf32> to vector<8x64xf32>
    %254 = arith.mulf %252, %236 : vector<8x64xf32>
    %255 = arith.mulf %251, %250 : vector<8x64xf32>
    %256 = arith.addf %254, %255 : vector<8x64xf32>
    %257 = math.tanh %256 : vector<8x64xf32>
    %258 = arith.mulf %253, %257 : vector<8x64xf32>
    %c24_91 = arith.constant 24 : index
    %c0_92 = arith.constant 0 : index
    %259 = vector.load %arg15[%c24_91, %c0_92] : memref<64x64xf32, #tpu.memory_space<vmem>>, vector<8x64xf32>
    tpu.vector_store %arg15[%c24_91, %c0_92], %258 {strides = array<i32>} : memref<64x64xf32, #tpu.memory_space<vmem>>, vector<8x64xf32>,
    %c32_93 = arith.constant 32 : index
    %c0_94 = arith.constant 0 : index
    %260 = vector.load %arg14[%c32_93, %c0_94] : memref<64x256xf32, #tpu.memory_space<vmem>>, vector<8x256xf32>
    %cst_95 = arith.constant dense<0.000000e+00> : vector<8x256xf32>
    %261 = tpu.matmul %258, %177, %cst_95 {dimension_numbers = #tpu.dot_dimension_numbers<[1], [0], [0], [1], [0, 0, 1, 1], [], []>} : vector<8x64xf32>, vector<64x256xf32>, vector<8x256xf32> -> vector<8x256xf32>
    %262 = arith.addf %260, %261 : vector<8x256xf32>
    %263 = vector.extract_strided_slice %262 {offsets = [0, 0], sizes = [8, 192], strides = [1, 1]} : vector<8x256xf32> to vector<8x192xf32>
    %264 = arith.negf %263 : vector<8x192xf32>
    %265 = math.exp %264 : vector<8x192xf32>
    %cst_96 = arith.constant 1.000000e+00 : f32
    %266 = vector.broadcast %cst_96 : f32 to vector<8x192xf32>
    %267 = arith.addf %266, %265 : vector<8x192xf32>
    %268 = arith.divf %266, %267 : vector<8x192xf32>
    %269 = vector.extract_strided_slice %262 {offsets = [0, 192], sizes = [8, 64], strides = [1, 1]} : vector<8x256xf32> to vector<8x64xf32>
    %270 = math.tanh %269 : vector<8x64xf32>
    %271 = vector.extract_strided_slice %268 {offsets = [0, 0], sizes = [8, 64], strides = [1, 1]} : vector<8x192xf32> to vector<8x64xf32>
    %272 = vector.extract_strided_slice %268 {offsets = [0, 64], sizes = [8, 64], strides = [1, 1]} : vector<8x192xf32> to vector<8x64xf32>
    %273 = vector.extract_strided_slice %268 {offsets = [0, 128], sizes = [8, 64], strides = [1, 1]} : vector<8x192xf32> to vector<8x64xf32>
    %274 = arith.mulf %272, %256 : vector<8x64xf32>
    %275 = arith.mulf %271, %270 : vector<8x64xf32>
    %276 = arith.addf %274, %275 : vector<8x64xf32>
    %277 = math.tanh %276 : vector<8x64xf32>
    %278 = arith.mulf %273, %277 : vector<8x64xf32>
    %c32_97 = arith.constant 32 : index
    %c0_98 = arith.constant 0 : index
    %279 = vector.load %arg15[%c32_97, %c0_98] : memref<64x64xf32, #tpu.memory_space<vmem>>, vector<8x64xf32>
    tpu.vector_store %arg15[%c32_97, %c0_98], %278 {strides = array<i32>} : memref<64x64xf32, #tpu.memory_space<vmem>>, vector<8x64xf32>,
    %c40_99 = arith.constant 40 : index
    %c0_100 = arith.constant 0 : index
    %280 = vector.load %arg14[%c40_99, %c0_100] : memref<64x256xf32, #tpu.memory_space<vmem>>, vector<8x256xf32>
    %cst_101 = arith.constant dense<0.000000e+00> : vector<8x256xf32>
    %281 = tpu.matmul %278, %177, %cst_101 {dimension_numbers = #tpu.dot_dimension_numbers<[1], [0], [0], [1], [0, 0, 1, 1], [], []>} : vector<8x64xf32>, vector<64x256xf32>, vector<8x256xf32> -> vector<8x256xf32>
    %282 = arith.addf %280, %281 : vector<8x256xf32>
    %283 = vector.extract_strided_slice %282 {offsets = [0, 0], sizes = [8, 192], strides = [1, 1]} : vector<8x256xf32> to vector<8x192xf32>
    %284 = arith.negf %283 : vector<8x192xf32>
    %285 = math.exp %284 : vector<8x192xf32>
    %cst_102 = arith.constant 1.000000e+00 : f32
    %286 = vector.broadcast %cst_102 : f32 to vector<8x192xf32>
    %287 = arith.addf %286, %285 : vector<8x192xf32>
    %288 = arith.divf %286, %287 : vector<8x192xf32>
    %289 = vector.extract_strided_slice %282 {offsets = [0, 192], sizes = [8, 64], strides = [1, 1]} : vector<8x256xf32> to vector<8x64xf32>
    %290 = math.tanh %289 : vector<8x64xf32>
    %291 = vector.extract_strided_slice %288 {offsets = [0, 0], sizes = [8, 64], strides = [1, 1]} : vector<8x192xf32> to vector<8x64xf32>
    %292 = vector.extract_strided_slice %288 {offsets = [0, 64], sizes = [8, 64], strides = [1, 1]} : vector<8x192xf32> to vector<8x64xf32>
    %293 = vector.extract_strided_slice %288 {offsets = [0, 128], sizes = [8, 64], strides = [1, 1]} : vector<8x192xf32> to vector<8x64xf32>
    %294 = arith.mulf %292, %276 : vector<8x64xf32>
    %295 = arith.mulf %291, %290 : vector<8x64xf32>
    %296 = arith.addf %294, %295 : vector<8x64xf32>
    %297 = math.tanh %296 : vector<8x64xf32>
    %298 = arith.mulf %293, %297 : vector<8x64xf32>
    %c40_103 = arith.constant 40 : index
    %c0_104 = arith.constant 0 : index
    %299 = vector.load %arg15[%c40_103, %c0_104] : memref<64x64xf32, #tpu.memory_space<vmem>>, vector<8x64xf32>
    tpu.vector_store %arg15[%c40_103, %c0_104], %298 {strides = array<i32>} : memref<64x64xf32, #tpu.memory_space<vmem>>, vector<8x64xf32>,
    %c48_105 = arith.constant 48 : index
    %c0_106 = arith.constant 0 : index
    %300 = vector.load %arg14[%c48_105, %c0_106] : memref<64x256xf32, #tpu.memory_space<vmem>>, vector<8x256xf32>
    %cst_107 = arith.constant dense<0.000000e+00> : vector<8x256xf32>
    %301 = tpu.matmul %298, %177, %cst_107 {dimension_numbers = #tpu.dot_dimension_numbers<[1], [0], [0], [1], [0, 0, 1, 1], [], []>} : vector<8x64xf32>, vector<64x256xf32>, vector<8x256xf32> -> vector<8x256xf32>
    %302 = arith.addf %300, %301 : vector<8x256xf32>
    %303 = vector.extract_strided_slice %302 {offsets = [0, 0], sizes = [8, 192], strides = [1, 1]} : vector<8x256xf32> to vector<8x192xf32>
    %304 = arith.negf %303 : vector<8x192xf32>
    %305 = math.exp %304 : vector<8x192xf32>
    %cst_108 = arith.constant 1.000000e+00 : f32
    %306 = vector.broadcast %cst_108 : f32 to vector<8x192xf32>
    %307 = arith.addf %306, %305 : vector<8x192xf32>
    %308 = arith.divf %306, %307 : vector<8x192xf32>
    %309 = vector.extract_strided_slice %302 {offsets = [0, 192], sizes = [8, 64], strides = [1, 1]} : vector<8x256xf32> to vector<8x64xf32>
    %310 = math.tanh %309 : vector<8x64xf32>
    %311 = vector.extract_strided_slice %308 {offsets = [0, 0], sizes = [8, 64], strides = [1, 1]} : vector<8x192xf32> to vector<8x64xf32>
    %312 = vector.extract_strided_slice %308 {offsets = [0, 64], sizes = [8, 64], strides = [1, 1]} : vector<8x192xf32> to vector<8x64xf32>
    %313 = vector.extract_strided_slice %308 {offsets = [0, 128], sizes = [8, 64], strides = [1, 1]} : vector<8x192xf32> to vector<8x64xf32>
    %314 = arith.mulf %312, %296 : vector<8x64xf32>
    %315 = arith.mulf %311, %310 : vector<8x64xf32>
    %316 = arith.addf %314, %315 : vector<8x64xf32>
    %317 = math.tanh %316 : vector<8x64xf32>
    %318 = arith.mulf %313, %317 : vector<8x64xf32>
    %c48_109 = arith.constant 48 : index
    %c0_110 = arith.constant 0 : index
    %319 = vector.load %arg15[%c48_109, %c0_110] : memref<64x64xf32, #tpu.memory_space<vmem>>, vector<8x64xf32>
    tpu.vector_store %arg15[%c48_109, %c0_110], %318 {strides = array<i32>} : memref<64x64xf32, #tpu.memory_space<vmem>>, vector<8x64xf32>,
    %c56_111 = arith.constant 56 : index
    %c0_112 = arith.constant 0 : index
    %320 = vector.load %arg14[%c56_111, %c0_112] : memref<64x256xf32, #tpu.memory_space<vmem>>, vector<8x256xf32>
    %cst_113 = arith.constant dense<0.000000e+00> : vector<8x256xf32>
    %321 = tpu.matmul %318, %177, %cst_113 {dimension_numbers = #tpu.dot_dimension_numbers<[1], [0], [0], [1], [0, 0, 1, 1], [], []>} : vector<8x64xf32>, vector<64x256xf32>, vector<8x256xf32> -> vector<8x256xf32>
    %322 = arith.addf %320, %321 : vector<8x256xf32>
    %323 = vector.extract_strided_slice %322 {offsets = [0, 0], sizes = [8, 192], strides = [1, 1]} : vector<8x256xf32> to vector<8x192xf32>
    %324 = arith.negf %323 : vector<8x192xf32>
    %325 = math.exp %324 : vector<8x192xf32>
    %cst_114 = arith.constant 1.000000e+00 : f32
    %326 = vector.broadcast %cst_114 : f32 to vector<8x192xf32>
    %327 = arith.addf %326, %325 : vector<8x192xf32>
    %328 = arith.divf %326, %327 : vector<8x192xf32>
    %329 = vector.extract_strided_slice %322 {offsets = [0, 192], sizes = [8, 64], strides = [1, 1]} : vector<8x256xf32> to vector<8x64xf32>
    %330 = math.tanh %329 : vector<8x64xf32>
    %331 = vector.extract_strided_slice %328 {offsets = [0, 0], sizes = [8, 64], strides = [1, 1]} : vector<8x192xf32> to vector<8x64xf32>
    %332 = vector.extract_strided_slice %328 {offsets = [0, 64], sizes = [8, 64], strides = [1, 1]} : vector<8x192xf32> to vector<8x64xf32>
    %333 = vector.extract_strided_slice %328 {offsets = [0, 128], sizes = [8, 64], strides = [1, 1]} : vector<8x192xf32> to vector<8x64xf32>
    %334 = arith.mulf %332, %316 : vector<8x64xf32>
    %335 = arith.mulf %331, %330 : vector<8x64xf32>
    %336 = arith.addf %334, %335 : vector<8x64xf32>
    %337 = math.tanh %336 : vector<8x64xf32>
    %338 = arith.mulf %333, %337 : vector<8x64xf32>
    %c56_115 = arith.constant 56 : index
    %c0_116 = arith.constant 0 : index
    %339 = vector.load %arg15[%c56_115, %c0_116] : memref<64x64xf32, #tpu.memory_space<vmem>>, vector<8x64xf32>
    tpu.vector_store %arg15[%c56_115, %c0_116], %338 {strides = array<i32>} : memref<64x64xf32, #tpu.memory_space<vmem>>, vector<8x64xf32>,
    %c0_117 = arith.constant 0 : index
    %c0_118 = arith.constant 0 : index
    %340 = vector.load %arg15[%c0_117, %c0_118] : memref<64x64xf32, #tpu.memory_space<vmem>>, vector<64x64xf32>
    %c0_119 = arith.constant 0 : index
    %c0_120 = arith.constant 0 : index
    %c0_121 = arith.constant 0 : index
    %341 = vector.load %arg12[%c0_119, %c0_120, %c0_121] : memref<8x8x32xf32, #tpu.memory_space<vmem>>, vector<8x8x32xf32>
    %342 = vector.extract_strided_slice %340 {offsets = [0, 0], sizes = [8, 32], strides = [1, 1]} : vector<64x64xf32> to vector<8x32xf32>
    %c0_122 = arith.constant 0 : index
    %c0_123 = arith.constant 0 : index
    %c0_124 = arith.constant 0 : index
    %c0_125 = arith.constant 0 : index
    %343 = vector.load %arg11[%c0_122, %c0_123, %c0_124, %c0_125] : memref<16x8x8x32xf32, #tpu.memory_space<vmem>>, vector<1x8x8x32xf32>
    %344 = vector.shape_cast %343 : vector<1x8x8x32xf32> to vector<8x8x32xf32>
    %345 = vector.shape_cast %342 : vector<8x32xf32> to vector<1x8x32xf32>
    %346 = vector.broadcast %345 : vector<1x8x32xf32> to vector<8x8x32xf32>
    %347 = arith.mulf %344, %346 : vector<8x8x32xf32>
    %348 = arith.addf %341, %347 : vector<8x8x32xf32>
    %349 = vector.extract_strided_slice %340 {offsets = [8, 0], sizes = [8, 32], strides = [1, 1]} : vector<64x64xf32> to vector<8x32xf32>
    %c1 = arith.constant 1 : index
    %c0_126 = arith.constant 0 : index
    %c0_127 = arith.constant 0 : index
    %c0_128 = arith.constant 0 : index
    %350 = vector.load %arg11[%c1, %c0_126, %c0_127, %c0_128] : memref<16x8x8x32xf32, #tpu.memory_space<vmem>>, vector<1x8x8x32xf32>
    %351 = vector.shape_cast %350 : vector<1x8x8x32xf32> to vector<8x8x32xf32>
    %352 = vector.shape_cast %349 : vector<8x32xf32> to vector<1x8x32xf32>
    %353 = vector.broadcast %352 : vector<1x8x32xf32> to vector<8x8x32xf32>
    %354 = arith.mulf %351, %353 : vector<8x8x32xf32>
    %355 = arith.addf %348, %354 : vector<8x8x32xf32>
    %356 = vector.extract_strided_slice %340 {offsets = [16, 0], sizes = [8, 32], strides = [1, 1]} : vector<64x64xf32> to vector<8x32xf32>
    %c2 = arith.constant 2 : index
    %c0_129 = arith.constant 0 : index
    %c0_130 = arith.constant 0 : index
    %c0_131 = arith.constant 0 : index
    %357 = vector.load %arg11[%c2, %c0_129, %c0_130, %c0_131] : memref<16x8x8x32xf32, #tpu.memory_space<vmem>>, vector<1x8x8x32xf32>
    %358 = vector.shape_cast %357 : vector<1x8x8x32xf32> to vector<8x8x32xf32>
    %359 = vector.shape_cast %356 : vector<8x32xf32> to vector<1x8x32xf32>
    %360 = vector.broadcast %359 : vector<1x8x32xf32> to vector<8x8x32xf32>
    %361 = arith.mulf %358, %360 : vector<8x8x32xf32>
    %362 = arith.addf %355, %361 : vector<8x8x32xf32>
    %363 = vector.extract_strided_slice %340 {offsets = [24, 0], sizes = [8, 32], strides = [1, 1]} : vector<64x64xf32> to vector<8x32xf32>
    %c3 = arith.constant 3 : index
    %c0_132 = arith.constant 0 : index
    %c0_133 = arith.constant 0 : index
    %c0_134 = arith.constant 0 : index
    %364 = vector.load %arg11[%c3, %c0_132, %c0_133, %c0_134] : memref<16x8x8x32xf32, #tpu.memory_space<vmem>>, vector<1x8x8x32xf32>
    %365 = vector.shape_cast %364 : vector<1x8x8x32xf32> to vector<8x8x32xf32>
    %366 = vector.shape_cast %363 : vector<8x32xf32> to vector<1x8x32xf32>
    %367 = vector.broadcast %366 : vector<1x8x32xf32> to vector<8x8x32xf32>
    %368 = arith.mulf %365, %367 : vector<8x8x32xf32>
    %369 = arith.addf %362, %368 : vector<8x8x32xf32>
    %370 = vector.extract_strided_slice %340 {offsets = [32, 0], sizes = [8, 32], strides = [1, 1]} : vector<64x64xf32> to vector<8x32xf32>
    %c4 = arith.constant 4 : index
    %c0_135 = arith.constant 0 : index
    %c0_136 = arith.constant 0 : index
    %c0_137 = arith.constant 0 : index
    %371 = vector.load %arg11[%c4, %c0_135, %c0_136, %c0_137] : memref<16x8x8x32xf32, #tpu.memory_space<vmem>>, vector<1x8x8x32xf32>
    %372 = vector.shape_cast %371 : vector<1x8x8x32xf32> to vector<8x8x32xf32>
    %373 = vector.shape_cast %370 : vector<8x32xf32> to vector<1x8x32xf32>
    %374 = vector.broadcast %373 : vector<1x8x32xf32> to vector<8x8x32xf32>
    %375 = arith.mulf %372, %374 : vector<8x8x32xf32>
    %376 = arith.addf %369, %375 : vector<8x8x32xf32>
    %377 = vector.extract_strided_slice %340 {offsets = [40, 0], sizes = [8, 32], strides = [1, 1]} : vector<64x64xf32> to vector<8x32xf32>
    %c5 = arith.constant 5 : index
    %c0_138 = arith.constant 0 : index
    %c0_139 = arith.constant 0 : index
    %c0_140 = arith.constant 0 : index
    %378 = vector.load %arg11[%c5, %c0_138, %c0_139, %c0_140] : memref<16x8x8x32xf32, #tpu.memory_space<vmem>>, vector<1x8x8x32xf32>
    %379 = vector.shape_cast %378 : vector<1x8x8x32xf32> to vector<8x8x32xf32>
    %380 = vector.shape_cast %377 : vector<8x32xf32> to vector<1x8x32xf32>
    %381 = vector.broadcast %380 : vector<1x8x32xf32> to vector<8x8x32xf32>
    %382 = arith.mulf %379, %381 : vector<8x8x32xf32>
    %383 = arith.addf %376, %382 : vector<8x8x32xf32>
    %384 = vector.extract_strided_slice %340 {offsets = [48, 0], sizes = [8, 32], strides = [1, 1]} : vector<64x64xf32> to vector<8x32xf32>
    %c6 = arith.constant 6 : index
    %c0_141 = arith.constant 0 : index
    %c0_142 = arith.constant 0 : index
    %c0_143 = arith.constant 0 : index
    %385 = vector.load %arg11[%c6, %c0_141, %c0_142, %c0_143] : memref<16x8x8x32xf32, #tpu.memory_space<vmem>>, vector<1x8x8x32xf32>
    %386 = vector.shape_cast %385 : vector<1x8x8x32xf32> to vector<8x8x32xf32>
    %387 = vector.shape_cast %384 : vector<8x32xf32> to vector<1x8x32xf32>
    %388 = vector.broadcast %387 : vector<1x8x32xf32> to vector<8x8x32xf32>
    %389 = arith.mulf %386, %388 : vector<8x8x32xf32>
    %390 = arith.addf %383, %389 : vector<8x8x32xf32>
    %391 = vector.extract_strided_slice %340 {offsets = [56, 0], sizes = [8, 32], strides = [1, 1]} : vector<64x64xf32> to vector<8x32xf32>
    %c7 = arith.constant 7 : index
    %c0_144 = arith.constant 0 : index
    %c0_145 = arith.constant 0 : index
    %c0_146 = arith.constant 0 : index
    %392 = vector.load %arg11[%c7, %c0_144, %c0_145, %c0_146] : memref<16x8x8x32xf32, #tpu.memory_space<vmem>>, vector<1x8x8x32xf32>
    %393 = vector.shape_cast %392 : vector<1x8x8x32xf32> to vector<8x8x32xf32>
    %394 = vector.shape_cast %391 : vector<8x32xf32> to vector<1x8x32xf32>
    %395 = vector.broadcast %394 : vector<1x8x32xf32> to vector<8x8x32xf32>
    %396 = arith.mulf %393, %395 : vector<8x8x32xf32>
    %397 = arith.addf %390, %396 : vector<8x8x32xf32>
    %398 = vector.extract_strided_slice %340 {offsets = [0, 32], sizes = [8, 32], strides = [1, 1]} : vector<64x64xf32> to vector<8x32xf32>
    %c8_147 = arith.constant 8 : index
    %c0_148 = arith.constant 0 : index
    %c0_149 = arith.constant 0 : index
    %c0_150 = arith.constant 0 : index
    %399 = vector.load %arg11[%c8_147, %c0_148, %c0_149, %c0_150] : memref<16x8x8x32xf32, #tpu.memory_space<vmem>>, vector<1x8x8x32xf32>
    %400 = vector.shape_cast %399 : vector<1x8x8x32xf32> to vector<8x8x32xf32>
    %401 = vector.shape_cast %398 : vector<8x32xf32> to vector<1x8x32xf32>
    %402 = vector.broadcast %401 : vector<1x8x32xf32> to vector<8x8x32xf32>
    %403 = arith.mulf %400, %402 : vector<8x8x32xf32>
    %404 = arith.addf %397, %403 : vector<8x8x32xf32>
    %405 = vector.extract_strided_slice %340 {offsets = [8, 32], sizes = [8, 32], strides = [1, 1]} : vector<64x64xf32> to vector<8x32xf32>
    %c9 = arith.constant 9 : index
    %c0_151 = arith.constant 0 : index
    %c0_152 = arith.constant 0 : index
    %c0_153 = arith.constant 0 : index
    %406 = vector.load %arg11[%c9, %c0_151, %c0_152, %c0_153] : memref<16x8x8x32xf32, #tpu.memory_space<vmem>>, vector<1x8x8x32xf32>
    %407 = vector.shape_cast %406 : vector<1x8x8x32xf32> to vector<8x8x32xf32>
    %408 = vector.shape_cast %405 : vector<8x32xf32> to vector<1x8x32xf32>
    %409 = vector.broadcast %408 : vector<1x8x32xf32> to vector<8x8x32xf32>
    %410 = arith.mulf %407, %409 : vector<8x8x32xf32>
    %411 = arith.addf %404, %410 : vector<8x8x32xf32>
    %412 = vector.extract_strided_slice %340 {offsets = [16, 32], sizes = [8, 32], strides = [1, 1]} : vector<64x64xf32> to vector<8x32xf32>
    %c10 = arith.constant 10 : index
    %c0_154 = arith.constant 0 : index
    %c0_155 = arith.constant 0 : index
    %c0_156 = arith.constant 0 : index
    %413 = vector.load %arg11[%c10, %c0_154, %c0_155, %c0_156] : memref<16x8x8x32xf32, #tpu.memory_space<vmem>>, vector<1x8x8x32xf32>
    %414 = vector.shape_cast %413 : vector<1x8x8x32xf32> to vector<8x8x32xf32>
    %415 = vector.shape_cast %412 : vector<8x32xf32> to vector<1x8x32xf32>
    %416 = vector.broadcast %415 : vector<1x8x32xf32> to vector<8x8x32xf32>
    %417 = arith.mulf %414, %416 : vector<8x8x32xf32>
    %418 = arith.addf %411, %417 : vector<8x8x32xf32>
    %419 = vector.extract_strided_slice %340 {offsets = [24, 32], sizes = [8, 32], strides = [1, 1]} : vector<64x64xf32> to vector<8x32xf32>
    %c11 = arith.constant 11 : index
    %c0_157 = arith.constant 0 : index
    %c0_158 = arith.constant 0 : index
    %c0_159 = arith.constant 0 : index
    %420 = vector.load %arg11[%c11, %c0_157, %c0_158, %c0_159] : memref<16x8x8x32xf32, #tpu.memory_space<vmem>>, vector<1x8x8x32xf32>
    %421 = vector.shape_cast %420 : vector<1x8x8x32xf32> to vector<8x8x32xf32>
    %422 = vector.shape_cast %419 : vector<8x32xf32> to vector<1x8x32xf32>
    %423 = vector.broadcast %422 : vector<1x8x32xf32> to vector<8x8x32xf32>
    %424 = arith.mulf %421, %423 : vector<8x8x32xf32>
    %425 = arith.addf %418, %424 : vector<8x8x32xf32>
    %426 = vector.extract_strided_slice %340 {offsets = [32, 32], sizes = [8, 32], strides = [1, 1]} : vector<64x64xf32> to vector<8x32xf32>
    %c12 = arith.constant 12 : index
    %c0_160 = arith.constant 0 : index
    %c0_161 = arith.constant 0 : index
    %c0_162 = arith.constant 0 : index
    %427 = vector.load %arg11[%c12, %c0_160, %c0_161, %c0_162] : memref<16x8x8x32xf32, #tpu.memory_space<vmem>>, vector<1x8x8x32xf32>
    %428 = vector.shape_cast %427 : vector<1x8x8x32xf32> to vector<8x8x32xf32>
    %429 = vector.shape_cast %426 : vector<8x32xf32> to vector<1x8x32xf32>
    %430 = vector.broadcast %429 : vector<1x8x32xf32> to vector<8x8x32xf32>
    %431 = arith.mulf %428, %430 : vector<8x8x32xf32>
    %432 = arith.addf %425, %431 : vector<8x8x32xf32>
    %433 = vector.extract_strided_slice %340 {offsets = [40, 32], sizes = [8, 32], strides = [1, 1]} : vector<64x64xf32> to vector<8x32xf32>
    %c13 = arith.constant 13 : index
    %c0_163 = arith.constant 0 : index
    %c0_164 = arith.constant 0 : index
    %c0_165 = arith.constant 0 : index
    %434 = vector.load %arg11[%c13, %c0_163, %c0_164, %c0_165] : memref<16x8x8x32xf32, #tpu.memory_space<vmem>>, vector<1x8x8x32xf32>
    %435 = vector.shape_cast %434 : vector<1x8x8x32xf32> to vector<8x8x32xf32>
    %436 = vector.shape_cast %433 : vector<8x32xf32> to vector<1x8x32xf32>
    %437 = vector.broadcast %436 : vector<1x8x32xf32> to vector<8x8x32xf32>
    %438 = arith.mulf %435, %437 : vector<8x8x32xf32>
    %439 = arith.addf %432, %438 : vector<8x8x32xf32>
    %440 = vector.extract_strided_slice %340 {offsets = [48, 32], sizes = [8, 32], strides = [1, 1]} : vector<64x64xf32> to vector<8x32xf32>
    %c14 = arith.constant 14 : index
    %c0_166 = arith.constant 0 : index
    %c0_167 = arith.constant 0 : index
    %c0_168 = arith.constant 0 : index
    %441 = vector.load %arg11[%c14, %c0_166, %c0_167, %c0_168] : memref<16x8x8x32xf32, #tpu.memory_space<vmem>>, vector<1x8x8x32xf32>
    %442 = vector.shape_cast %441 : vector<1x8x8x32xf32> to vector<8x8x32xf32>
    %443 = vector.shape_cast %440 : vector<8x32xf32> to vector<1x8x32xf32>
    %444 = vector.broadcast %443 : vector<1x8x32xf32> to vector<8x8x32xf32>
    %445 = arith.mulf %442, %444 : vector<8x8x32xf32>
    %446 = arith.addf %439, %445 : vector<8x8x32xf32>
    %447 = vector.extract_strided_slice %340 {offsets = [56, 32], sizes = [8, 32], strides = [1, 1]} : vector<64x64xf32> to vector<8x32xf32>
    %c15 = arith.constant 15 : index
    %c0_169 = arith.constant 0 : index
    %c0_170 = arith.constant 0 : index
    %c0_171 = arith.constant 0 : index
    %448 = vector.load %arg11[%c15, %c0_169, %c0_170, %c0_171] : memref<16x8x8x32xf32, #tpu.memory_space<vmem>>, vector<1x8x8x32xf32>
    %449 = vector.shape_cast %448 : vector<1x8x8x32xf32> to vector<8x8x32xf32>
    %450 = vector.shape_cast %447 : vector<8x32xf32> to vector<1x8x32xf32>
    %451 = vector.broadcast %450 : vector<1x8x32xf32> to vector<8x8x32xf32>
    %452 = arith.mulf %449, %451 : vector<8x8x32xf32>
    %453 = arith.addf %446, %452 : vector<8x8x32xf32>
    %c0_172 = arith.constant 0 : index
    %c0_173 = arith.constant 0 : index
    %c0_174 = arith.constant 0 : index
    %454 = vector.load %arg13[%c0_172, %c0_173, %c0_174] : memref<8x8x32xf32, #tpu.memory_space<vmem>>, vector<8x8x32xf32>
    tpu.vector_store %arg13[%c0_172, %c0_173, %c0_174], %453 {strides = array<i32>} : memref<8x8x32xf32, #tpu.memory_space<vmem>>, vector<8x8x32xf32>,
    return
  }
}

</mosaic_0001>

<llo_original>
// kernel: tpu_custom_call.1
$region0: #{tpu_custom_call.1}
  #allocation0 [shape = 'u32[]', space=smem, size = 0x4, offset = 0x4, fixed_abs, tag = 'smem constant byte address 0x4 - core index']
  #allocation1 [shape = 'u32[144,128]{1,0:T(1,128)}', space=vmem, size = 0x12000, scoped, tag = 'internal scratch']
  #allocation2 [shape = 'f32[64,256]{1,0:T(8,128)}', space=vmem, size = 0x10000, scoped, tag = 'scratch operand']
  #allocation3 [shape = 'f32[64,64]{1,0:T(8,128)}', space=vmem, size = 0x8000, scoped, tag = 'scratch operand']
  %s0 = inlined_call_operand.vmem [shape: f32[64,16], index: 0, kind: input, shape index: {}]
  %s1 = inlined_call_operand.vmem [shape: f32[16,256], index: 1, kind: input, shape index: {}]
  %s2 = inlined_call_operand.hbm [shape: f32[64,256], index: 2, kind: input, shape index: {}]
  %s3 = inlined_call_operand.hbm [shape: f32[64,256], index: 3, kind: input, shape index: {}]
  %s4 = inlined_call_operand.hbm [shape: f32[64,256], index: 4, kind: input, shape index: {}]
  %s5 = inlined_call_operand.vmem [shape: f32[1,256], index: 5, kind: input, shape index: {}]
  %s6 = inlined_call_operand.vmem [shape: f32[1,256], index: 6, kind: input, shape index: {}]
  %s7 = inlined_call_operand.vmem [shape: f32[8,64], index: 7, kind: input, shape index: {}]
  %s8 = inlined_call_operand.vmem [shape: f32[8,64], index: 8, kind: input, shape index: {}]
  %s9 = inlined_call_operand.vmem [shape: f32[8,64], index: 9, kind: input, shape index: {}]
  %s10 = inlined_call_operand.hbm [shape: f32[8,64], index: 10, kind: input, shape index: {}]
  %s11 = inlined_call_operand.hbm [shape: f32[16,8,8,32], index: 11, kind: input, shape index: {}]
  %s12 = inlined_call_operand.vmem [shape: f32[8,8,32], index: 12, kind: input, shape index: {}]
  %s13 = inlined_call_operand.hbm [shape: f32[8,8,32], index: 13, kind: output, shape index: {}]
  %s14 = sld [smem:[#allocation0]]
  $region82: #{tpu_custom_call.1} parent=0
    _
  %s16 = ssub.s32 1, %s14
  %s17 = scalar_select 0, %s16, %s14
  $region1: #{tpu_custom_call.1} parent=0
    #allocation4 [shape = 'u8[65536]{0}', space=vmem, size = 0x10000, scoped, tag = 'input window, operand 2, single buffered']
    #allocation5 [shape = 's32[1]{0}', space=sflag, size = 0x4, scoped, tag = 'scoped memory for tpu_custom_call.1']
    #allocation6 [shape = 's32[1]{0}', space=sflag, size = 0x4, scoped, tag = 'scoped memory for tpu_custom_call.1']
    #allocation7 [shape = 'u8[65536]{0}', space=vmem, size = 0x10000, scoped, tag = 'input window, operand 3, single buffered']
    #allocation8 [shape = 's32[1]{0}', space=sflag, size = 0x4, scoped, tag = 'scoped memory for tpu_custom_call.1']
    #allocation9 [shape = 'u8[65536]{0}', space=vmem, size = 0x10000, scoped, tag = 'input window, operand 4, single buffered']
    #allocation10 [shape = 'u8[4096]{0}', space=vmem, size = 0x1000, scoped, tag = 'input window, operand 10, single buffered']
    #allocation11 [shape = 's32[1]{0}', space=sflag, size = 0x4, scoped, tag = 'scoped memory for tpu_custom_call.1']
    #allocation12 [shape = 'u8[524288]{0}', space=vmem, size = 0x80000, scoped, tag = 'input window, operand 11, single buffered']
    #allocation13 [shape = 'u8[32768]{0}', space=vmem, size = 0x8000, scoped, tag = 'output window, operand 0, single buffered']
    %18 = vsyncpa [#allocation5], 0
    %19 = vsyncpa [#allocation8], 0
    %20 = vsyncpa [#allocation11], 0
    %21 = vsyncpa [#allocation6], 0
    // Predicated region
    $region2: #{tpu_custom_call.1} parent=1 // pred_check
      _
    $region3: #{tpu_custom_call.1} parent=1 // pred_check_branch
      %23 = sbr.rel (0) target = $region5
    $region4: #{tpu_custom_call.1} parent=1 // pred_region
      _
    $region5: #{tpu_custom_call.1} parent=1 // pred_fallthru
      _
    // Predicated region
    $region6: #{tpu_custom_call.1} parent=1 // pred_check
      _
    $region7: #{tpu_custom_call.1} parent=1 // pred_check_branch
      %25 = sbr.rel (0) target = $region9
    $region8: #{tpu_custom_call.1} parent=1 // pred_region
      _
    $region9: #{tpu_custom_call.1} parent=1 // pred_fallthru
      _
    // Predicated region
    $region10: #{tpu_custom_call.1} parent=1 // pred_check
      _
    $region11: #{tpu_custom_call.1} parent=1 // pred_check_branch
      %27 = sbr.rel (0) target = $region13
    $region12: #{tpu_custom_call.1} parent=1 // pred_region
      %s29 = ssub.s32 2048, 2048
      %30 = vsyncadd [#allocation5], %s29
      %s31 = sshll.u32 [#allocation4], 4
      %s32 = int_to_ptr.vmem [resolvable:$true] %s31
      %37 = dma.hbm_to_vmem [thread:$0]  %s2, 2048, %s32, [#allocation5], 256, 256, 16
    $region13: #{tpu_custom_call.1} parent=1 // pred_fallthru
      _
    // Predicated region
    $region14: #{tpu_custom_call.1} parent=1 // pred_check
      _
    $region15: #{tpu_custom_call.1} parent=1 // pred_check_branch
      %39 = sbr.rel (0) target = $region17
    $region16: #{tpu_custom_call.1} parent=1 // pred_region
      %s41 = ssub.s32 2048, 2048
      %42 = vsyncadd [#allocation8], %s41
      %s43 = sshll.u32 [#allocation7], 4
      %s44 = int_to_ptr.vmem [resolvable:$true] %s43
      %49 = dma.hbm_to_vmem [thread:$0]  %s3, 2048, %s44, [#allocation8], 256, 256, 16
    $region17: #{tpu_custom_call.1} parent=1 // pred_fallthru
      _
    // Predicated region
    $region18: #{tpu_custom_call.1} parent=1 // pred_check
      _
    $region19: #{tpu_custom_call.1} parent=1 // pred_check_branch
      %51 = sbr.rel (0) target = $region21
    $region20: #{tpu_custom_call.1} parent=1 // pred_region
      %s53 = ssub.s32 2048, 2048
      %54 = vsyncadd [#allocation8], %s53
      %s55 = sshll.u32 [#allocation9], 4
      %s56 = int_to_ptr.vmem [resolvable:$true] %s55
      %61 = dma.hbm_to_vmem [thread:$0]  %s4, 2048, %s56, [#allocation8], 256, 256, 16
    $region21: #{tpu_custom_call.1} parent=1 // pred_fallthru
      _
    // Predicated region
    $region22: #{tpu_custom_call.1} parent=1 // pred_check
      _
    $region23: #{tpu_custom_call.1} parent=1 // pred_check_branch
      %63 = sbr.rel (0) target = $region25
    $region24: #{tpu_custom_call.1} parent=1 // pred_region
      _
    $region25: #{tpu_custom_call.1} parent=1 // pred_fallthru
      _
    // Predicated region
    $region26: #{tpu_custom_call.1} parent=1 // pred_check
      _
    $region27: #{tpu_custom_call.1} parent=1 // pred_check_branch
      %65 = sbr.rel (0) target = $region29
    $region28: #{tpu_custom_call.1} parent=1 // pred_region
      _
    $region29: #{tpu_custom_call.1} parent=1 // pred_fallthru
      _
    // Predicated region
    $region30: #{tpu_custom_call.1} parent=1 // pred_check
      _
    $region31: #{tpu_custom_call.1} parent=1 // pred_check_branch
      %67 = sbr.rel (0) target = $region33
    $region32: #{tpu_custom_call.1} parent=1 // pred_region
      _
    $region33: #{tpu_custom_call.1} parent=1 // pred_fallthru
      _
    // Predicated region
    $region34: #{tpu_custom_call.1} parent=1 // pred_check
      _
    $region35: #{tpu_custom_call.1} parent=1 // pred_check_branch
      %69 = sbr.rel (0) target = $region37
    $region36: #{tpu_custom_call.1} parent=1 // pred_region
      _
    $region37: #{tpu_custom_call.1} parent=1 // pred_fallthru
      _
    // Predicated region
    $region38: #{tpu_custom_call.1} parent=1 // pred_check
      _
    $region39: #{tpu_custom_call.1} parent=1 // pred_check_branch
      %71 = sbr.rel (0) target = $region41
    $region40: #{tpu_custom_call.1} parent=1 // pred_region
      _
    $region41: #{tpu_custom_call.1} parent=1 // pred_fallthru
      _
    // Predicated region
    $region42: #{tpu_custom_call.1} parent=1 // pred_check
      _
    $region43: #{tpu_custom_call.1} parent=1 // pred_check_branch
      %73 = sbr.rel (0) target = $region45
    $region44: #{tpu_custom_call.1} parent=1 // pred_region
      %s75 = ssub.s32 128, 128
      %76 = vsyncadd [#allocation11], %s75
      %s78 = sshll.u32 [#allocation10], 4
      %s79 = int_to_ptr.vmem [resolvable:$true] %s78
      %81 = dma.hbm_to_vmem [thread:$0]  %s10, 128, %s79, [#allocation11]
    $region45: #{tpu_custom_call.1} parent=1 // pred_fallthru
      _
    // Predicated region
    $region46: #{tpu_custom_call.1} parent=1 // pred_check
      _
    $region47: #{tpu_custom_call.1} parent=1 // pred_check_branch
      %83 = sbr.rel (0) target = $region49
    $region48: #{tpu_custom_call.1} parent=1 // pred_region
      %s85 = ssub.s32 16384, 16384
      %86 = vsyncadd [#allocation11], %s85
      %s87 = sshll.u32 [#allocation12], 4
      %s88 = int_to_ptr.vmem [resolvable:$true] %s87
      %93 = dma.hbm_to_vmem [thread:$0]  %s11, 16384, %s88, [#allocation11], 128, 128, 8
    $region49: #{tpu_custom_call.1} parent=1 // pred_fallthru
      _
    // Predicated region
    $region50: #{tpu_custom_call.1} parent=1 // pred_check
      _
    $region51: #{tpu_custom_call.1} parent=1 // pred_check_branch
      %95 = sbr.rel (0) target = $region53
    $region52: #{tpu_custom_call.1} parent=1 // pred_region
      _
    $region53: #{tpu_custom_call.1} parent=1 // pred_fallthru
      _
    // Predicated region
    $region54: #{tpu_custom_call.1} parent=1 // pred_check
      _
    $region55: #{tpu_custom_call.1} parent=1 // pred_check_branch
      %97 = sbr.rel (0) target = $region57
    $region56: #{tpu_custom_call.1} parent=1 // pred_region
      %98 = dma.done [#allocation5], 2048
    $region57: #{tpu_custom_call.1} parent=1 // pred_fallthru
      _
    // Predicated region
    $region58: #{tpu_custom_call.1} parent=1 // pred_check
      _
    $region59: #{tpu_custom_call.1} parent=1 // pred_check_branch
      %100 = sbr.rel (0) target = $region61
    $region60: #{tpu_custom_call.1} parent=1 // pred_region
      %101 = dma.done [#allocation8], 2048
    $region61: #{tpu_custom_call.1} parent=1 // pred_fallthru
      _
    // Predicated region
    $region62: #{tpu_custom_call.1} parent=1 // pred_check
      _
    $region63: #{tpu_custom_call.1} parent=1 // pred_check_branch
      %103 = sbr.rel (0) target = $region65
    $region64: #{tpu_custom_call.1} parent=1 // pred_region
      %104 = dma.done [#allocation8], 2048
    $region65: #{tpu_custom_call.1} parent=1 // pred_fallthru
      _
    // Predicated region
    $region66: #{tpu_custom_call.1} parent=1 // pred_check
      _
    $region67: #{tpu_custom_call.1} parent=1 // pred_check_branch
      %106 = sbr.rel (0) target = $region69
    $region68: #{tpu_custom_call.1} parent=1 // pred_region
      %107 = dma.done [#allocation11], 128
    $region69: #{tpu_custom_call.1} parent=1 // pred_fallthru
      _
    // Predicated region
    $region70: #{tpu_custom_call.1} parent=1 // pred_check
      _
    $region71: #{tpu_custom_call.1} parent=1 // pred_check_branch
      %109 = sbr.rel (0) target = $region73
    $region72: #{tpu_custom_call.1} parent=1 // pred_region
      %110 = dma.done [#allocation11], 16384
    $region73: #{tpu_custom_call.1} parent=1 // pred_fallthru
      _
    %v111 = vld [vmem:[%s0] sm:$0xff]
    %v112 = vld [vmem:[%s0 + $0x8] sm:$0xff]
    %v113 = vld [vmem:[%s0 + $0x10] sm:$0xff]
    %v114 = vld [vmem:[%s0 + $0x18] sm:$0xff]
    %v115 = vld [vmem:[%s0 + $0x20] sm:$0xff]
    %v116 = vld [vmem:[%s0 + $0x28] sm:$0xff]
    %v117 = vld [vmem:[%s0 + $0x30] sm:$0xff]
    %v118 = vld [vmem:[%s0 + $0x38] sm:$0xff]
    %v119 = vld [vmem:[%s1] sm:$0xff]
    %v120 = vld [vmem:[%s1 + $0x8] sm:$0xff]
    %v121 = vld [vmem:[%s1 + $0x10] sm:$0xff]
    %v122 = vld [vmem:[%s1 + $0x18] sm:$0xff]
    %v123 = vld [vmem:[%s5] sm:$0x3]
    %v125 = vlaneseq
    %v126 = vshrl.u32 %v125, 7
    %v127 = vsub.s32 0, %v126
    %v128 = vrot.slane %v123, %v127
    %v129 = vlaneseq
    %v130 = vshrl.u32 %v129, 7
    %v131 = vsub.s32 1, %v130
    %v132 = vrot.slane %v123, %v131
    %vm135 = vcmask 130048
    %v137 = vsel %vm135, %v111, 0
    %v140 = vsel %vm135, %v112, 0
    %v143 = vsel %vm135, %v113, 0
    %v146 = vsel %vm135, %v114, 0
    %v149 = vsel %vm135, %v115, 0
    %v152 = vsel %vm135, %v116, 0
    %v155 = vsel %vm135, %v117, 0
    %v158 = vsel %vm135, %v118, 0
    %160 = vmatprep.subr.mxu0 %v120
    %161 = vmatpush1.msra.mxu0 %v119
    %162 = vmatprep.subr.mxu0 %v122
    %163 = vmatpush1.msra.mxu0 %v121
    %164 = vmatprep.subr.mxu0 0.0
    %165 = vmatpush1.msra.mxu0 0.0
    %166 = vmatprep.subr.mxu0 0.0
    %167 = vmatpush1.msra.mxu0 0.0
    %168 = vmatprep.subr.mxu0 0.0
    %169 = vmatpush1.msra.mxu0 0.0
    %170 = vmatprep.subr.mxu0 0.0
    %171 = vmatpush1.msra.mxu0 0.0
    %172 = vmatprep.subr.mxu0 0.0
    %173 = vmatpush1.msra.mxu0 0.0
    %174 = vmatprep.subr.mxu0 0.0
    %175 = vmatpush1.msra.mxu0 0.0
    %176 = vmatprep.subr.mxu0 0.0
    %177 = vmatpush1.msra.mxu0 0.0
    %178 = vmatprep.subr.mxu0 0.0
    %179 = vmatpush1.msra.mxu0 0.0
    %180 = vmatprep.subr.mxu0 0.0
    %181 = vmatpush1.msra.mxu0 0.0
    %182 = vmatprep.subr.mxu0 0.0
    %183 = vmatpush1.msra.mxu0 0.0
    %184 = vmatprep.subr.mxu0 0.0
    %185 = vmatpush1.msra.mxu0 0.0
    %186 = vmatprep.subr.mxu0 0.0
    %187 = vmatpush1.msra.mxu0 0.0
    %188 = vmatprep.subr.mxu0 0.0
    %189 = vmatpush1.msra.mxu0 0.0
    %190 = vmatprep.subr.mxu0 0.0
    %191 = vmatpush1.msra.mxu0 0.0
    %192 = vmatprep.subr.mxu0 0.0
    %193 = vmatpush1.msra.mxu0 0.0
    %194 = vmatprep.subr.mxu0 0.0
    %195 = vmatpush1.msra.mxu0 0.0
    %196 = vmatprep.subr.mxu0 0.0
    %197 = vmatpush1.msra.mxu0 0.0
    %198 = vmatprep.subr.mxu0 0.0
    %199 = vmatpush1.msra.mxu0 0.0
    %200 = vmatprep.subr.mxu0 0.0
    %201 = vmatpush1.msra.mxu0 0.0
    %202 = vmatprep.subr.mxu0 0.0
    %203 = vmatpush1.msra.mxu0 0.0
    %204 = vmatprep.subr.mxu0 0.0
    %205 = vmatpush1.msra.mxu0 0.0
    %206 = vmatprep.subr.mxu0 0.0
    %207 = vmatpush1.msra.mxu0 0.0
    %208 = vmatprep.subr.mxu0 0.0
    %209 = vmatpush1.msra.mxu0 0.0
    %210 = vmatprep.subr.mxu0 0.0
    %211 = vmatpush1.msra.mxu0 0.0
    %212 = vmatprep.subr.mxu0 0.0
    %213 = vmatpush1.msra.mxu0 0.0
    %214 = vmatprep.subr.mxu0 0.0
    %215 = vmatpush1.msra.mxu0 0.0
    %216 = vmatprep.subr.mxu0 0.0
    %217 = vmatpush1.msra.mxu0 0.0
    %218 = vmatprep.subr.mxu0 0.0
    %219 = vmatpush1.msra.mxu0 0.0
    %220 = vmatprep.subr.mxu0 0.0
    %221 = vmatpush1.msra.mxu0 0.0
    %222 = vmatprep.subr.mxu0 0.0
    %223 = vmatpush1.msra.mxu0 0.0
    %224 = vmatprep.mubr.f32.mxu0 0.0
    %225 = vmatmul.mubr.f32.gmra.mrb[0].mxu0 %v137
    %v226 = vpop.f32.mrb[0].mxu0
    %v227 = vadd.f32 %v128, %v226
    %v228 = vpop.f32.mrb[0].mxu0
    %v229 = vadd.f32 %v132, %v228
    %230 = vmatprep.mubr.f32.mxu0 0.0
    %231 = vmatmul.mubr.f32.gmra.mrb[0].mxu0 %v140
    %v232 = vpop.f32.mrb[0].mxu0
    %v233 = vadd.f32 %v128, %v232
    %v234 = vpop.f32.mrb[0].mxu0
    %v235 = vadd.f32 %v132, %v234
    %236 = vmatprep.mubr.f32.mxu0 0.0
    %237 = vmatmul.mubr.f32.gmra.mrb[0].mxu0 %v143
    %v238 = vpop.f32.mrb[0].mxu0
    %v239 = vadd.f32 %v128, %v238
    %v240 = vpop.f32.mrb[0].mxu0
    %v241 = vadd.f32 %v132, %v240
    %242 = vmatprep.mubr.f32.mxu0 0.0
    %243 = vmatmul.mubr.f32.gmra.mrb[0].mxu0 %v146
    %v244 = vpop.f32.mrb[0].mxu0
    %v245 = vadd.f32 %v128, %v244
    %v246 = vpop.f32.mrb[0].mxu0
    %v247 = vadd.f32 %v132, %v246
    %248 = vmatprep.mubr.f32.mxu0 0.0
    %249 = vmatmul.mubr.f32.gmra.mrb[0].mxu0 %v149
    %v250 = vpop.f32.mrb[0].mxu0
    %v251 = vadd.f32 %v128, %v250
    %v252 = vpop.f32.mrb[0].mxu0
    %v253 = vadd.f32 %v132, %v252
    %254 = vmatprep.mubr.f32.mxu0 0.0
    %255 = vmatmul.mubr.f32.gmra.mrb[0].mxu0 %v152
    %v256 = vpop.f32.mrb[0].mxu0
    %v257 = vadd.f32 %v128, %v256
    %v258 = vpop.f32.mrb[0].mxu0
    %v259 = vadd.f32 %v132, %v258
    %260 = vmatprep.mubr.f32.mxu0 0.0
    %261 = vmatmul.mubr.f32.gmra.mrb[0].mxu0 %v155
    %v262 = vpop.f32.mrb[0].mxu0
    %v263 = vadd.f32 %v128, %v262
    %v264 = vpop.f32.mrb[0].mxu0
    %v265 = vadd.f32 %v132, %v264
    %266 = vmatprep.mubr.f32.mxu0 0.0
    %267 = vmatmul.mubr.f32.gmra.mrb[0].mxu0 %v158
    %v268 = vpop.f32.mrb[0].mxu0
    %v269 = vadd.f32 %v128, %v268
    %v270 = vpop.f32.mrb[0].mxu0
    %v271 = vadd.f32 %v132, %v270
    %272 = vdwg.mxu0
    %273 = vst [vmem:[#allocation2] sm:$0xff] %v227
    %274 = vst [vmem:[#allocation2 + $0x8] sm:$0xff] %v229
    %275 = vst [vmem:[#allocation2 + $0x10] sm:$0xff] %v233
    %276 = vst [vmem:[#allocation2 + $0x18] sm:$0xff] %v235
    %277 = vst [vmem:[#allocation2 + $0x20] sm:$0xff] %v239
    %278 = vst [vmem:[#allocation2 + $0x28] sm:$0xff] %v241
    %279 = vst [vmem:[#allocation2 + $0x30] sm:$0xff] %v245
    %280 = vst [vmem:[#allocation2 + $0x38] sm:$0xff] %v247
    %281 = vst [vmem:[#allocation2 + $0x40] sm:$0xff] %v251
    %282 = vst [vmem:[#allocation2 + $0x48] sm:$0xff] %v253
    %283 = vst [vmem:[#allocation2 + $0x50] sm:$0xff] %v257
    %284 = vst [vmem:[#allocation2 + $0x58] sm:$0xff] %v259
    %285 = vst [vmem:[#allocation2 + $0x60] sm:$0xff] %v263
    %286 = vst [vmem:[#allocation2 + $0x68] sm:$0xff] %v265
    %287 = vst [vmem:[#allocation2 + $0x70] sm:$0xff] %v269
    %288 = vst [vmem:[#allocation2 + $0x78] sm:$0xff] %v271
    %v289 = vld [vmem:[#allocation7] sm:$0xff]
    %v290 = vld [vmem:[#allocation7 + $0x8] sm:$0xff]
    %v291 = vld [vmem:[#allocation7 + $0x10] sm:$0xff]
    %v292 = vld [vmem:[#allocation7 + $0x18] sm:$0xff]
    %v293 = vld [vmem:[#allocation7 + $0x20] sm:$0xff]
    %v294 = vld [vmem:[#allocation7 + $0x28] sm:$0xff]
    %v295 = vld [vmem:[#allocation7 + $0x30] sm:$0xff]
    %v296 = vld [vmem:[#allocation7 + $0x38] sm:$0xff]
    %v297 = vld [vmem:[#allocation7 + $0x40] sm:$0xff]
    %v298 = vld [vmem:[#allocation7 + $0x48] sm:$0xff]
    %v299 = vld [vmem:[#allocation7 + $0x50] sm:$0xff]
    %v300 = vld [vmem:[#allocation7 + $0x58] sm:$0xff]
    %v301 = vld [vmem:[#allocation7 + $0x60] sm:$0xff]
    %v302 = vld [vmem:[#allocation7 + $0x68] sm:$0xff]
    %v303 = vld [vmem:[#allocation7 + $0x70] sm:$0xff]
    %v304 = vld [vmem:[#allocation7 + $0x78] sm:$0xff]
    %v305 = vld [vmem:[%s7] sm:$0xff]
    %v306 = vld [vmem:[%s9] sm:$0xff]
    %v307 = vld [vmem:[#allocation2] sm:$0xff]
    %v308 = vld [vmem:[#allocation2 + $0x8] sm:$0xff]
    %vm309 = vcmask 523264
    %v311 = vsel %vm309, %v305, 0
    %313 = vmatprep.subr.mxu0 %v290
    %314 = vmatpush1.msra.mxu0 %v289
    %315 = vmatprep.subr.mxu0 %v292
    %316 = vmatpush1.msra.mxu0 %v291
    %317 = vmatprep.subr.mxu0 %v294
    %318 = vmatpush1.msra.mxu0 %v293
    %319 = vmatprep.subr.mxu0 %v296
    %320 = vmatpush1.msra.mxu0 %v295
    %321 = vmatprep.subr.mxu0 %v298
    %322 = vmatpush1.msra.mxu0 %v297
    %323 = vmatprep.subr.mxu0 %v300
    %324 = vmatpush1.msra.mxu0 %v299
    %325 = vmatprep.subr.mxu0 %v302
    %326 = vmatpush1.msra.mxu0 %v301
    %327 = vmatprep.subr.mxu0 %v304
    %328 = vmatpush1.msra.mxu0 %v303
    %329 = vmatprep.subr.mxu0 0.0
    %330 = vmatpush1.msra.mxu0 0.0
    %331 = vmatprep.subr.mxu0 0.0
    %332 = vmatpush1.msra.mxu0 0.0
    %333 = vmatprep.subr.mxu0 0.0
    %334 = vmatpush1.msra.mxu0 0.0
    %335 = vmatprep.subr.mxu0 0.0
    %336 = vmatpush1.msra.mxu0 0.0
    %337 = vmatprep.subr.mxu0 0.0
    %338 = vmatpush1.msra.mxu0 0.0
    %339 = vmatprep.subr.mxu0 0.0
    %340 = vmatpush1.msra.mxu0 0.0
    %341 = vmatprep.subr.mxu0 0.0
    %342 = vmatpush1.msra.mxu0 0.0
    %343 = vmatprep.subr.mxu0 0.0
    %344 = vmatpush1.msra.mxu0 0.0
    %345 = vmatprep.subr.mxu0 0.0
    %346 = vmatpush1.msra.mxu0 0.0
    %347 = vmatprep.subr.mxu0 0.0
    %348 = vmatpush1.msra.mxu0 0.0
    %349 = vmatprep.subr.mxu0 0.0
    %350 = vmatpush1.msra.mxu0 0.0
    %351 = vmatprep.subr.mxu0 0.0
    %352 = vmatpush1.msra.mxu0 0.0
    %353 = vmatprep.subr.mxu0 0.0
    %354 = vmatpush1.msra.mxu0 0.0
    %355 = vmatprep.subr.mxu0 0.0
    %356 = vmatpush1.msra.mxu0 0.0
    %357 = vmatprep.subr.mxu0 0.0
    %358 = vmatpush1.msra.mxu0 0.0
    %359 = vmatprep.subr.mxu0 0.0
    %360 = vmatpush1.msra.mxu0 0.0
    %361 = vmatprep.subr.mxu0 0.0
    %362 = vmatpush1.msra.mxu0 0.0
    %363 = vmatprep.subr.mxu0 0.0
    %364 = vmatpush1.msra.mxu0 0.0
    %365 = vmatprep.subr.mxu0 0.0
    %366 = vmatpush1.msra.mxu0 0.0
    %367 = vmatprep.subr.mxu0 0.0
    %368 = vmatpush1.msra.mxu0 0.0
    %369 = vmatprep.subr.mxu0 0.0
    %370 = vmatpush1.msra.mxu0 0.0
    %371 = vmatprep.subr.mxu0 0.0
    %372 = vmatpush1.msra.mxu0 0.0
    %373 = vmatprep.subr.mxu0 0.0
    %374 = vmatpush1.msra.mxu0 0.0
    %375 = vmatprep.subr.mxu0 0.0
    %376 = vmatpush1.msra.mxu0 0.0
    %377 = vmatprep.mubr.f32.mxu0 0.0
    %378 = vmatmul.mubr.f32.gmra.mrb[0].mxu0 %v311
    %v379 = vpop.f32.mrb[0].mxu0
    %v380 = vadd.f32 0.0, %v379
    %v381 = vpop.f32.mrb[0].mxu0
    %v382 = vadd.f32 0.0, %v381
    %383 = vdwg.mxu0
    %v384 = vadd.f32 %v307, %v380
    %v385 = vadd.f32 %v308, %v382
    %v386 = vxor.u32 %v384, 2147483648
    %v387 = vxor.u32 %v385, 2147483648
    %v388 = vmul.f32 %v386, 1.442695
    %v389 = vpow.pop %v388
    %v390 = vmul.f32 %v387, 1.442695
    %v391 = vpow.pop %v390
    %v392 = vadd.f32 %v389, 1.0
    %v393 = vadd.f32 %v391, 1.0
    %v394 = vrcp.pop %v392
    %v395 = vmul.f32 1.0, %v394
    %v396 = vrcp.pop %v393
    %v397 = vmul.f32 1.0, %v396
    %v398 = vtanh.pop %v385
    %400 = vrot.lane.b32.xlu0 %v306, 64
    %v401 = vpop.permute.xlu0 %400
    %v403 = vmul.f32 %v395, %v401
    %405 = vrot.lane.b32.xlu0 %v398, 64
    %v406 = vpop.permute.xlu0 %405
    %v408 = vmul.f32 %v395, %v406
    %410 = vrot.lane.b32.xlu0 %v408, 64
    %v411 = vpop.permute.xlu0 %410
    %v413 = vadd.f32 %v403, %v411
    %v414 = vtanh.pop %v413
    %416 = vrot.lane.b32.xlu0 %v414, 64
    %v417 = vpop.permute.xlu0 %416
    %v419 = vmul.f32 %v397, %v417
    %420 = vst.msk [vmem:[#allocation3] sm:$0xff] %vm309, %v419
    %v421 = vld [vmem:[#allocation2 + $0x10] sm:$0xff]
    %v422 = vld [vmem:[#allocation2 + $0x18] sm:$0xff]
    %v424 = vsel %vm309, %v419, 0
    %426 = vmatprep.subr.mxu0 %v290
    %427 = vmatpush1.msra.mxu0 %v289
    %428 = vmatprep.subr.mxu0 %v292
    %429 = vmatpush1.msra.mxu0 %v291
    %430 = vmatprep.subr.mxu0 %v294
    %431 = vmatpush1.msra.mxu0 %v293
    %432 = vmatprep.subr.mxu0 %v296
    %433 = vmatpush1.msra.mxu0 %v295
    %434 = vmatprep.subr.mxu0 %v298
    %435 = vmatpush1.msra.mxu0 %v297
    %436 = vmatprep.subr.mxu0 %v300
    %437 = vmatpush1.msra.mxu0 %v299
    %438 = vmatprep.subr.mxu0 %v302
    %439 = vmatpush1.msra.mxu0 %v301
    %440 = vmatprep.subr.mxu0 %v304
    %441 = vmatpush1.msra.mxu0 %v303
    %442 = vmatprep.subr.mxu0 0.0
    %443 = vmatpush1.msra.mxu0 0.0
    %444 = vmatprep.subr.mxu0 0.0
    %445 = vmatpush1.msra.mxu0 0.0
    %446 = vmatprep.subr.mxu0 0.0
    %447 = vmatpush1.msra.mxu0 0.0
    %448 = vmatprep.subr.mxu0 0.0
    %449 = vmatpush1.msra.mxu0 0.0
    %450 = vmatprep.subr.mxu0 0.0
    %451 = vmatpush1.msra.mxu0 0.0
    %452 = vmatprep.subr.mxu0 0.0
    %453 = vmatpush1.msra.mxu0 0.0
    %454 = vmatprep.subr.mxu0 0.0
    %455 = vmatpush1.msra.mxu0 0.0
    %456 = vmatprep.subr.mxu0 0.0
    %457 = vmatpush1.msra.mxu0 0.0
    %458 = vmatprep.subr.mxu0 0.0
    %459 = vmatpush1.msra.mxu0 0.0
    %460 = vmatprep.subr.mxu0 0.0
    %461 = vmatpush1.msra.mxu0 0.0
    %462 = vmatprep.subr.mxu0 0.0
    %463 = vmatpush1.msra.mxu0 0.0
    %464 = vmatprep.subr.mxu0 0.0
    %465 = vmatpush1.msra.mxu0 0.0
    %466 = vmatprep.subr.mxu0 0.0
    %467 = vmatpush1.msra.mxu0 0.0
    %468 = vmatprep.subr.mxu0 0.0
    %469 = vmatpush1.msra.mxu0 0.0
    %470 = vmatprep.subr.mxu0 0.0
    %471 = vmatpush1.msra.mxu0 0.0
    %472 = vmatprep.subr.mxu0 0.0
    %473 = vmatpush1.msra.mxu0 0.0
    %474 = vmatprep.subr.mxu0 0.0
    %475 = vmatpush1.msra.mxu0 0.0
    %476 = vmatprep.subr.mxu0 0.0
    %477 = vmatpush1.msra.mxu0 0.0
    %478 = vmatprep.subr.mxu0 0.0
    %479 = vmatpush1.msra.mxu0 0.0
    %480 = vmatprep.subr.mxu0 0.0
    %481 = vmatpush1.msra.mxu0 0.0
    %482 = vmatprep.subr.mxu0 0.0
    %483 = vmatpush1.msra.mxu0 0.0
    %484 = vmatprep.subr.mxu0 0.0
    %485 = vmatpush1.msra.mxu0 0.0
    %486 = vmatprep.subr.mxu0 0.0
    %487 = vmatpush1.msra.mxu0 0.0
    %488 = vmatprep.subr.mxu0 0.0
    %489 = vmatpush1.msra.mxu0 0.0
    %490 = vmatprep.mubr.f32.mxu0 0.0
    %491 = vmatmul.mubr.f32.gmra.mrb[0].mxu0 %v424
    %v492 = vpop.f32.mrb[0].mxu0
    %v493 = vadd.f32 0.0, %v492
    %v494 = vpop.f32.mrb[0].mxu0
    %v495 = vadd.f32 0.0, %v494
    %496 = vdwg.mxu0
    %v497 = vadd.f32 %v421, %v493
    %v498 = vadd.f32 %v422, %v495
    %v499 = vxor.u32 %v497, 2147483648
    %v500 = vxor.u32 %v498, 2147483648
    %v501 = vmul.f32 %v499, 1.442695
    %v502 = vpow.pop %v501
    %v503 = vmul.f32 %v500, 1.442695
    %v504 = vpow.pop %v503
    %v505 = vadd.f32 %v502, 1.0
    %v506 = vadd.f32 %v504, 1.0
    %v507 = vrcp.pop %v505
    %v508 = vmul.f32 1.0, %v507
    %v509 = vrcp.pop %v506
    %v510 = vmul.f32 1.0, %v509
    %v511 = vtanh.pop %v498
    %v512 = vmul.f32 %v508, %v413
    %514 = vrot.lane.b32.xlu0 %v511, 64
    %v515 = vpop.permute.xlu0 %514
    %v517 = vmul.f32 %v508, %v515
    %519 = vrot.lane.b32.xlu0 %v517, 64
    %v520 = vpop.permute.xlu0 %519
    %v522 = vadd.f32 %v512, %v520
    %v523 = vtanh.pop %v522
    %525 = vrot.lane.b32.xlu0 %v523, 64
    %v526 = vpop.permute.xlu0 %525
    %v528 = vmul.f32 %v510, %v526
    %529 = vst.msk [vmem:[#allocation3 + $0x8] sm:$0xff] %vm309, %v528
    %v530 = vld [vmem:[#allocation2 + $0x20] sm:$0xff]
    %v531 = vld [vmem:[#allocation2 + $0x28] sm:$0xff]
    %v533 = vsel %vm309, %v528, 0
    %535 = vmatprep.subr.mxu0 %v290
    %536 = vmatpush1.msra.mxu0 %v289
    %537 = vmatprep.subr.mxu0 %v292
    %538 = vmatpush1.msra.mxu0 %v291
    %539 = vmatprep.subr.mxu0 %v294
    %540 = vmatpush1.msra.mxu0 %v293
    %541 = vmatprep.subr.mxu0 %v296
    %542 = vmatpush1.msra.mxu0 %v295
    %543 = vmatprep.subr.mxu0 %v298
    %544 = vmatpush1.msra.mxu0 %v297
    %545 = vmatprep.subr.mxu0 %v300
    %546 = vmatpush1.msra.mxu0 %v299
    %547 = vmatprep.subr.mxu0 %v302
    %548 = vmatpush1.msra.mxu0 %v301
    %549 = vmatprep.subr.mxu0 %v304
    %550 = vmatpush1.msra.mxu0 %v303
    %551 = vmatprep.subr.mxu0 0.0
    %552 = vmatpush1.msra.mxu0 0.0
    %553 = vmatprep.subr.mxu0 0.0
    %554 = vmatpush1.msra.mxu0 0.0
    %555 = vmatprep.subr.mxu0 0.0
    %556 = vmatpush1.msra.mxu0 0.0
    %557 = vmatprep.subr.mxu0 0.0
    %558 = vmatpush1.msra.mxu0 0.0
    %559 = vmatprep.subr.mxu0 0.0
    %560 = vmatpush1.msra.mxu0 0.0
    %561 = vmatprep.subr.mxu0 0.0
    %562 = vmatpush1.msra.mxu0 0.0
    %563 = vmatprep.subr.mxu0 0.0
    %564 = vmatpush1.msra.mxu0 0.0
    %565 = vmatprep.subr.mxu0 0.0
    %566 = vmatpush1.msra.mxu0 0.0
    %567 = vmatprep.subr.mxu0 0.0
    %568 = vmatpush1.msra.mxu0 0.0
    %569 = vmatprep.subr.mxu0 0.0
    %570 = vmatpush1.msra.mxu0 0.0
    %571 = vmatprep.subr.mxu0 0.0
    %572 = vmatpush1.msra.mxu0 0.0
    %573 = vmatprep.subr.mxu0 0.0
    %574 = vmatpush1.msra.mxu0 0.0
    %575 = vmatprep.subr.mxu0 0.0
    %576 = vmatpush1.msra.mxu0 0.0
    %577 = vmatprep.subr.mxu0 0.0
    %578 = vmatpush1.msra.mxu0 0.0
    %579 = vmatprep.subr.mxu0 0.0
    %580 = vmatpush1.msra.mxu0 0.0
    %581 = vmatprep.subr.mxu0 0.0
    %582 = vmatpush1.msra.mxu0 0.0
    %583 = vmatprep.subr.mxu0 0.0
    %584 = vmatpush1.msra.mxu0 0.0
    %585 = vmatprep.subr.mxu0 0.0
    %586 = vmatpush1.msra.mxu0 0.0
    %587 = vmatprep.subr.mxu0 0.0
    %588 = vmatpush1.msra.mxu0 0.0
    %589 = vmatprep.subr.mxu0 0.0
    %590 = vmatpush1.msra.mxu0 0.0
    %591 = vmatprep.subr.mxu0 0.0
    %592 = vmatpush1.msra.mxu0 0.0
    %593 = vmatprep.subr.mxu0 0.0
    %594 = vmatpush1.msra.mxu0 0.0
    %595 = vmatprep.subr.mxu0 0.0
    %596 = vmatpush1.msra.mxu0 0.0
    %597 = vmatprep.subr.mxu0 0.0
    %598 = vmatpush1.msra.mxu0 0.0
    %599 = vmatprep.mubr.f32.mxu0 0.0
    %600 = vmatmul.mubr.f32.gmra.mrb[0].mxu0 %v533
    %v601 = vpop.f32.mrb[0].mxu0
    %v602 = vadd.f32 0.0, %v601
    %v603 = vpop.f32.mrb[0].mxu0
    %v604 = vadd.f32 0.0, %v603
    %605 = vdwg.mxu0
    %v606 = vadd.f32 %v530, %v602
    %v607 = vadd.f32 %v531, %v604
    %v608 = vxor.u32 %v606, 2147483648
    %v609 = vxor.u32 %v607, 2147483648
    %v610 = vmul.f32 %v608, 1.442695
    %v611 = vpow.pop %v610
    %v612 = vmul.f32 %v609, 1.442695
    %v613 = vpow.pop %v612
    %v614 = vadd.f32 %v611, 1.0
    %v615 = vadd.f32 %v613, 1.0
    %v616 = vrcp.pop %v614
    %v617 = vmul.f32 1.0, %v616
    %v618 = vrcp.pop %v615
    %v619 = vmul.f32 1.0, %v618
    %v620 = vtanh.pop %v607
    %v621 = vmul.f32 %v617, %v522
    %623 = vrot.lane.b32.xlu0 %v620, 64
    %v624 = vpop.permute.xlu0 %623
    %v626 = vmul.f32 %v617, %v624
    %628 = vrot.lane.b32.xlu0 %v626, 64
    %v629 = vpop.permute.xlu0 %628
    %v631 = vadd.f32 %v621, %v629
    %v632 = vtanh.pop %v631
    %634 = vrot.lane.b32.xlu0 %v632, 64
    %v635 = vpop.permute.xlu0 %634
    %v637 = vmul.f32 %v619, %v635
    %638 = vst.msk [vmem:[#allocation3 + $0x10] sm:$0xff] %vm309, %v637
    %v639 = vld [vmem:[#allocation2 + $0x30] sm:$0xff]
    %v640 = vld [vmem:[#allocation2 + $0x38] sm:$0xff]
    %v642 = vsel %vm309, %v637, 0
    %644 = vmatprep.subr.mxu0 %v290
    %645 = vmatpush1.msra.mxu0 %v289
    %646 = vmatprep.subr.mxu0 %v292
    %647 = vmatpush1.msra.mxu0 %v291
    %648 = vmatprep.subr.mxu0 %v294
    %649 = vmatpush1.msra.mxu0 %v293
    %650 = vmatprep.subr.mxu0 %v296
    %651 = vmatpush1.msra.mxu0 %v295
    %652 = vmatprep.subr.mxu0 %v298
    %653 = vmatpush1.msra.mxu0 %v297
    %654 = vmatprep.subr.mxu0 %v300
    %655 = vmatpush1.msra.mxu0 %v299
    %656 = vmatprep.subr.mxu0 %v302
    %657 = vmatpush1.msra.mxu0 %v301
    %658 = vmatprep.subr.mxu0 %v304
    %659 = vmatpush1.msra.mxu0 %v303
    %660 = vmatprep.subr.mxu0 0.0
    %661 = vmatpush1.msra.mxu0 0.0
    %662 = vmatprep.subr.mxu0 0.0
    %663 = vmatpush1.msra.mxu0 0.0
    %664 = vmatprep.subr.mxu0 0.0
    %665 = vmatpush1.msra.mxu0 0.0
    %666 = vmatprep.subr.mxu0 0.0
    %667 = vmatpush1.msra.mxu0 0.0
    %668 = vmatprep.subr.mxu0 0.0
    %669 = vmatpush1.msra.mxu0 0.0
    %670 = vmatprep.subr.mxu0 0.0
    %671 = vmatpush1.msra.mxu0 0.0
    %672 = vmatprep.subr.mxu0 0.0
    %673 = vmatpush1.msra.mxu0 0.0
    %674 = vmatprep.subr.mxu0 0.0
    %675 = vmatpush1.msra.mxu0 0.0
    %676 = vmatprep.subr.mxu0 0.0
    %677 = vmatpush1.msra.mxu0 0.0
    %678 = vmatprep.subr.mxu0 0.0
    %679 = vmatpush1.msra.mxu0 0.0
    %680 = vmatprep.subr.mxu0 0.0
    %681 = vmatpush1.msra.mxu0 0.0
    %682 = vmatprep.subr.mxu0 0.0
    %683 = vmatpush1.msra.mxu0 0.0
    %684 = vmatprep.subr.mxu0 0.0
    %685 = vmatpush1.msra.mxu0 0.0
    %686 = vmatprep.subr.mxu0 0.0
    %687 = vmatpush1.msra.mxu0 0.0
    %688 = vmatprep.subr.mxu0 0.0
    %689 = vmatpush1.msra.mxu0 0.0
    %690 = vmatprep.subr.mxu0 0.0
    %691 = vmatpush1.msra.mxu0 0.0
    %692 = vmatprep.subr.mxu0 0.0
    %693 = vmatpush1.msra.mxu0 0.0
    %694 = vmatprep.subr.mxu0 0.0
    %695 = vmatpush1.msra.mxu0 0.0
    %696 = vmatprep.subr.mxu0 0.0
    %697 = vmatpush1.msra.mxu0 0.0
    %698 = vmatprep.subr.mxu0 0.0
    %699 = vmatpush1.msra.mxu0 0.0
    %700 = vmatprep.subr.mxu0 0.0
    %701 = vmatpush1.msra.mxu0 0.0
    %702 = vmatprep.subr.mxu0 0.0
    %703 = vmatpush1.msra.mxu0 0.0
    %704 = vmatprep.subr.mxu0 0.0
    %705 = vmatpush1.msra.mxu0 0.0
    %706 = vmatprep.subr.mxu0 0.0
    %707 = vmatpush1.msra.mxu0 0.0
    %708 = vmatprep.mubr.f32.mxu0 0.0
    %709 = vmatmul.mubr.f32.gmra.mrb[0].mxu0 %v642
    %v710 = vpop.f32.mrb[0].mxu0
    %v711 = vadd.f32 0.0, %v710
    %v712 = vpop.f32.mrb[0].mxu0
    %v713 = vadd.f32 0.0, %v712
    %714 = vdwg.mxu0
    %v715 = vadd.f32 %v639, %v711
    %v716 = vadd.f32 %v640, %v713
    %v717 = vxor.u32 %v715, 2147483648
    %v718 = vxor.u32 %v716, 2147483648
    %v719 = vmul.f32 %v717, 1.442695
    %v720 = vpow.pop %v719
    %v721 = vmul.f32 %v718, 1.442695
    %v722 = vpow.pop %v721
    %v723 = vadd.f32 %v720, 1.0
    %v724 = vadd.f32 %v722, 1.0
    %v725 = vrcp.pop %v723
    %v726 = vmul.f32 1.0, %v725
    %v727 = vrcp.pop %v724
    %v728 = vmul.f32 1.0, %v727
    %v729 = vtanh.pop %v716
    %v730 = vmul.f32 %v726, %v631
    %732 = vrot.lane.b32.xlu0 %v729, 64
    %v733 = vpop.permute.xlu0 %732
    %v735 = vmul.f32 %v726, %v733
    %737 = vrot.lane.b32.xlu0 %v735, 64
    %v738 = vpop.permute.xlu0 %737
    %v740 = vadd.f32 %v730, %v738
    %v741 = vtanh.pop %v740
    %743 = vrot.lane.b32.xlu0 %v741, 64
    %v744 = vpop.permute.xlu0 %743
    %v746 = vmul.f32 %v728, %v744
    %747 = vst.msk [vmem:[#allocation3 + $0x18] sm:$0xff] %vm309, %v746
    %v748 = vld [vmem:[#allocation2 + $0x40] sm:$0xff]
    %v749 = vld [vmem:[#allocation2 + $0x48] sm:$0xff]
    %v751 = vsel %vm309, %v746, 0
    %753 = vmatprep.subr.mxu0 %v290
    %754 = vmatpush1.msra.mxu0 %v289
    %755 = vmatprep.subr.mxu0 %v292
    %756 = vmatpush1.msra.mxu0 %v291
    %757 = vmatprep.subr.mxu0 %v294
    %758 = vmatpush1.msra.mxu0 %v293
    %759 = vmatprep.subr.mxu0 %v296
    %760 = vmatpush1.msra.mxu0 %v295
    %761 = vmatprep.subr.mxu0 %v298
    %762 = vmatpush1.msra.mxu0 %v297
    %763 = vmatprep.subr.mxu0 %v300
    %764 = vmatpush1.msra.mxu0 %v299
    %765 = vmatprep.subr.mxu0 %v302
    %766 = vmatpush1.msra.mxu0 %v301
    %767 = vmatprep.subr.mxu0 %v304
    %768 = vmatpush1.msra.mxu0 %v303
    %769 = vmatprep.subr.mxu0 0.0
    %770 = vmatpush1.msra.mxu0 0.0
    %771 = vmatprep.subr.mxu0 0.0
    %772 = vmatpush1.msra.mxu0 0.0
    %773 = vmatprep.subr.mxu0 0.0
    %774 = vmatpush1.msra.mxu0 0.0
    %775 = vmatprep.subr.mxu0 0.0
    %776 = vmatpush1.msra.mxu0 0.0
    %777 = vmatprep.subr.mxu0 0.0
    %778 = vmatpush1.msra.mxu0 0.0
    %779 = vmatprep.subr.mxu0 0.0
    %780 = vmatpush1.msra.mxu0 0.0
    %781 = vmatprep.subr.mxu0 0.0
    %782 = vmatpush1.msra.mxu0 0.0
    %783 = vmatprep.subr.mxu0 0.0
    %784 = vmatpush1.msra.mxu0 0.0
    %785 = vmatprep.subr.mxu0 0.0
    %786 = vmatpush1.msra.mxu0 0.0
    %787 = vmatprep.subr.mxu0 0.0
    %788 = vmatpush1.msra.mxu0 0.0
    %789 = vmatprep.subr.mxu0 0.0
    %790 = vmatpush1.msra.mxu0 0.0
    %791 = vmatprep.subr.mxu0 0.0
    %792 = vmatpush1.msra.mxu0 0.0
    %793 = vmatprep.subr.mxu0 0.0
    %794 = vmatpush1.msra.mxu0 0.0
    %795 = vmatprep.subr.mxu0 0.0
    %796 = vmatpush1.msra.mxu0 0.0
    %797 = vmatprep.subr.mxu0 0.0
    %798 = vmatpush1.msra.mxu0 0.0
    %799 = vmatprep.subr.mxu0 0.0
    %800 = vmatpush1.msra.mxu0 0.0
    %801 = vmatprep.subr.mxu0 0.0
    %802 = vmatpush1.msra.mxu0 0.0
    %803 = vmatprep.subr.mxu0 0.0
    %804 = vmatpush1.msra.mxu0 0.0
    %805 = vmatprep.subr.mxu0 0.0
    %806 = vmatpush1.msra.mxu0 0.0
    %807 = vmatprep.subr.mxu0 0.0
    %808 = vmatpush1.msra.mxu0 0.0
    %809 = vmatprep.subr.mxu0 0.0
    %810 = vmatpush1.msra.mxu0 0.0
    %811 = vmatprep.subr.mxu0 0.0
    %812 = vmatpush1.msra.mxu0 0.0
    %813 = vmatprep.subr.mxu0 0.0
    %814 = vmatpush1.msra.mxu0 0.0
    %815 = vmatprep.subr.mxu0 0.0
    %816 = vmatpush1.msra.mxu0 0.0
    %817 = vmatprep.mubr.f32.mxu0 0.0
    %818 = vmatmul.mubr.f32.gmra.mrb[0].mxu0 %v751
    %v819 = vpop.f32.mrb[0].mxu0
    %v820 = vadd.f32 0.0, %v819
    %v821 = vpop.f32.mrb[0].mxu0
    %v822 = vadd.f32 0.0, %v821
    %823 = vdwg.mxu0
    %v824 = vadd.f32 %v748, %v820
    %v825 = vadd.f32 %v749, %v822
    %v826 = vxor.u32 %v824, 2147483648
    %v827 = vxor.u32 %v825, 2147483648
    %v828 = vmul.f32 %v826, 1.442695
    %v829 = vpow.pop %v828
    %v830 = vmul.f32 %v827, 1.442695
    %v831 = vpow.pop %v830
    %v832 = vadd.f32 %v829, 1.0
    %v833 = vadd.f32 %v831, 1.0
    %v834 = vrcp.pop %v832
    %v835 = vmul.f32 1.0, %v834
    %v836 = vrcp.pop %v833
    %v837 = vmul.f32 1.0, %v836
    %v838 = vtanh.pop %v825
    %v839 = vmul.f32 %v835, %v740
    %841 = vrot.lane.b32.xlu0 %v838, 64
    %v842 = vpop.permute.xlu0 %841
    %v844 = vmul.f32 %v835, %v842
    %846 = vrot.lane.b32.xlu0 %v844, 64
    %v847 = vpop.permute.xlu0 %846
    %v849 = vadd.f32 %v839, %v847
    %v850 = vtanh.pop %v849
    %852 = vrot.lane.b32.xlu0 %v850, 64
    %v853 = vpop.permute.xlu0 %852
    %v855 = vmul.f32 %v837, %v853
    %856 = vst.msk [vmem:[#allocation3 + $0x20] sm:$0xff] %vm309, %v855
    %v857 = vld [vmem:[#allocation2 + $0x50] sm:$0xff]
    %v858 = vld [vmem:[#allocation2 + $0x58] sm:$0xff]
    %v860 = vsel %vm309, %v855, 0
    %862 = vmatprep.subr.mxu0 %v290
    %863 = vmatpush1.msra.mxu0 %v289
    %864 = vmatprep.subr.mxu0 %v292
    %865 = vmatpush1.msra.mxu0 %v291
    %866 = vmatprep.subr.mxu0 %v294
    %867 = vmatpush1.msra.mxu0 %v293
    %868 = vmatprep.subr.mxu0 %v296
    %869 = vmatpush1.msra.mxu0 %v295
    %870 = vmatprep.subr.mxu0 %v298
    %871 = vmatpush1.msra.mxu0 %v297
    %872 = vmatprep.subr.mxu0 %v300
    %873 = vmatpush1.msra.mxu0 %v299
    %874 = vmatprep.subr.mxu0 %v302
    %875 = vmatpush1.msra.mxu0 %v301
    %876 = vmatprep.subr.mxu0 %v304
    %877 = vmatpush1.msra.mxu0 %v303
    %878 = vmatprep.subr.mxu0 0.0
    %879 = vmatpush1.msra.mxu0 0.0
    %880 = vmatprep.subr.mxu0 0.0
    %881 = vmatpush1.msra.mxu0 0.0
    %882 = vmatprep.subr.mxu0 0.0
    %883 = vmatpush1.msra.mxu0 0.0
    %884 = vmatprep.subr.mxu0 0.0
    %885 = vmatpush1.msra.mxu0 0.0
    %886 = vmatprep.subr.mxu0 0.0
    %887 = vmatpush1.msra.mxu0 0.0
    %888 = vmatprep.subr.mxu0 0.0
    %889 = vmatpush1.msra.mxu0 0.0
    %890 = vmatprep.subr.mxu0 0.0
    %891 = vmatpush1.msra.mxu0 0.0
    %892 = vmatprep.subr.mxu0 0.0
    %893 = vmatpush1.msra.mxu0 0.0
    %894 = vmatprep.subr.mxu0 0.0
    %895 = vmatpush1.msra.mxu0 0.0
    %896 = vmatprep.subr.mxu0 0.0
    %897 = vmatpush1.msra.mxu0 0.0
    %898 = vmatprep.subr.mxu0 0.0
    %899 = vmatpush1.msra.mxu0 0.0
    %900 = vmatprep.subr.mxu0 0.0
    %901 = vmatpush1.msra.mxu0 0.0
    %902 = vmatprep.subr.mxu0 0.0
    %903 = vmatpush1.msra.mxu0 0.0
    %904 = vmatprep.subr.mxu0 0.0
    %905 = vmatpush1.msra.mxu0 0.0
    %906 = vmatprep.subr.mxu0 0.0
    %907 = vmatpush1.msra.mxu0 0.0
    %908 = vmatprep.subr.mxu0 0.0
    %909 = vmatpush1.msra.mxu0 0.0
    %910 = vmatprep.subr.mxu0 0.0
    %911 = vmatpush1.msra.mxu0 0.0
    %912 = vmatprep.subr.mxu0 0.0
    %913 = vmatpush1.msra.mxu0 0.0
    %914 = vmatprep.subr.mxu0 0.0
    %915 = vmatpush1.msra.mxu0 0.0
    %916 = vmatprep.subr.mxu0 0.0
    %917 = vmatpush1.msra.mxu0 0.0
    %918 = vmatprep.subr.mxu0 0.0
    %919 = vmatpush1.msra.mxu0 0.0
    %920 = vmatprep.subr.mxu0 0.0
    %921 = vmatpush1.msra.mxu0 0.0
    %922 = vmatprep.subr.mxu0 0.0
    %923 = vmatpush1.msra.mxu0 0.0
    %924 = vmatprep.subr.mxu0 0.0
    %925 = vmatpush1.msra.mxu0 0.0
    %926 = vmatprep.mubr.f32.mxu0 0.0
    %927 = vmatmul.mubr.f32.gmra.mrb[0].mxu0 %v860
    %v928 = vpop.f32.mrb[0].mxu0
    %v929 = vadd.f32 0.0, %v928
    %v930 = vpop.f32.mrb[0].mxu0
    %v931 = vadd.f32 0.0, %v930
    %932 = vdwg.mxu0
    %v933 = vadd.f32 %v857, %v929
    %v934 = vadd.f32 %v858, %v931
    %v935 = vxor.u32 %v933, 2147483648
    %v936 = vxor.u32 %v934, 2147483648
    %v937 = vmul.f32 %v935, 1.442695
    %v938 = vpow.pop %v937
    %v939 = vmul.f32 %v936, 1.442695
    %v940 = vpow.pop %v939
    %v941 = vadd.f32 %v938, 1.0
    %v942 = vadd.f32 %v940, 1.0
    %v943 = vrcp.pop %v941
    %v944 = vmul.f32 1.0, %v943
    %v945 = vrcp.pop %v942
    %v946 = vmul.f32 1.0, %v945
    %v947 = vtanh.pop %v934
    %v948 = vmul.f32 %v944, %v849
    %950 = vrot.lane.b32.xlu0 %v947, 64
    %v951 = vpop.permute.xlu0 %950
    %v953 = vmul.f32 %v944, %v951
    %955 = vrot.lane.b32.xlu0 %v953, 64
    %v956 = vpop.permute.xlu0 %955
    %v958 = vadd.f32 %v948, %v956
    %v959 = vtanh.pop %v958
    %961 = vrot.lane.b32.xlu0 %v959, 64
    %v962 = vpop.permute.xlu0 %961
    %v964 = vmul.f32 %v946, %v962
    %965 = vst.msk [vmem:[#allocation3 + $0x28] sm:$0xff] %vm309, %v964
    %v966 = vld [vmem:[#allocation2 + $0x60] sm:$0xff]
    %v967 = vld [vmem:[#allocation2 + $0x68] sm:$0xff]
    %v969 = vsel %vm309, %v964, 0
    %971 = vmatprep.subr.mxu0 %v290
    %972 = vmatpush1.msra.mxu0 %v289
    %973 = vmatprep.subr.mxu0 %v292
    %974 = vmatpush1.msra.mxu0 %v291
    %975 = vmatprep.subr.mxu0 %v294
    %976 = vmatpush1.msra.mxu0 %v293
    %977 = vmatprep.subr.mxu0 %v296
    %978 = vmatpush1.msra.mxu0 %v295
    %979 = vmatprep.subr.mxu0 %v298
    %980 = vmatpush1.msra.mxu0 %v297
    %981 = vmatprep.subr.mxu0 %v300
    %982 = vmatpush1.msra.mxu0 %v299
    %983 = vmatprep.subr.mxu0 %v302
    %984 = vmatpush1.msra.mxu0 %v301
    %985 = vmatprep.subr.mxu0 %v304
    %986 = vmatpush1.msra.mxu0 %v303
    %987 = vmatprep.subr.mxu0 0.0
    %988 = vmatpush1.msra.mxu0 0.0
    %989 = vmatprep.subr.mxu0 0.0
    %990 = vmatpush1.msra.mxu0 0.0
    %991 = vmatprep.subr.mxu0 0.0
    %992 = vmatpush1.msra.mxu0 0.0
    %993 = vmatprep.subr.mxu0 0.0
    %994 = vmatpush1.msra.mxu0 0.0
    %995 = vmatprep.subr.mxu0 0.0
    %996 = vmatpush1.msra.mxu0 0.0
    %997 = vmatprep.subr.mxu0 0.0
    %998 = vmatpush1.msra.mxu0 0.0
    %999 = vmatprep.subr.mxu0 0.0
    %1000 = vmatpush1.msra.mxu0 0.0
    %1001 = vmatprep.subr.mxu0 0.0
    %1002 = vmatpush1.msra.mxu0 0.0
    %1003 = vmatprep.subr.mxu0 0.0
    %1004 = vmatpush1.msra.mxu0 0.0
    %1005 = vmatprep.subr.mxu0 0.0
    %1006 = vmatpush1.msra.mxu0 0.0
    %1007 = vmatprep.subr.mxu0 0.0
    %1008 = vmatpush1.msra.mxu0 0.0
    %1009 = vmatprep.subr.mxu0 0.0
    %1010 = vmatpush1.msra.mxu0 0.0
    %1011 = vmatprep.subr.mxu0 0.0
    %1012 = vmatpush1.msra.mxu0 0.0
    %1013 = vmatprep.subr.mxu0 0.0
    %1014 = vmatpush1.msra.mxu0 0.0
    %1015 = vmatprep.subr.mxu0 0.0
    %1016 = vmatpush1.msra.mxu0 0.0
    %1017 = vmatprep.subr.mxu0 0.0
    %1018 = vmatpush1.msra.mxu0 0.0
    %1019 = vmatprep.subr.mxu0 0.0
    %1020 = vmatpush1.msra.mxu0 0.0
    %1021 = vmatprep.subr.mxu0 0.0
    %1022 = vmatpush1.msra.mxu0 0.0
    %1023 = vmatprep.subr.mxu0 0.0
    %1024 = vmatpush1.msra.mxu0 0.0
    %1025 = vmatprep.subr.mxu0 0.0
    %1026 = vmatpush1.msra.mxu0 0.0
    %1027 = vmatprep.subr.mxu0 0.0
    %1028 = vmatpush1.msra.mxu0 0.0
    %1029 = vmatprep.subr.mxu0 0.0
    %1030 = vmatpush1.msra.mxu0 0.0
    %1031 = vmatprep.subr.mxu0 0.0
    %1032 = vmatpush1.msra.mxu0 0.0
    %1033 = vmatprep.subr.mxu0 0.0
    %1034 = vmatpush1.msra.mxu0 0.0
    %1035 = vmatprep.mubr.f32.mxu0 0.0
    %1036 = vmatmul.mubr.f32.gmra.mrb[0].mxu0 %v969
    %v1037 = vpop.f32.mrb[0].mxu0
    %v1038 = vadd.f32 0.0, %v1037
    %v1039 = vpop.f32.mrb[0].mxu0
    %v1040 = vadd.f32 0.0, %v1039
    %1041 = vdwg.mxu0
    %v1042 = vadd.f32 %v966, %v1038
    %v1043 = vadd.f32 %v967, %v1040
    %v1044 = vxor.u32 %v1042, 2147483648
    %v1045 = vxor.u32 %v1043, 2147483648
    %v1046 = vmul.f32 %v1044, 1.442695
    %v1047 = vpow.pop %v1046
    %v1048 = vmul.f32 %v1045, 1.442695
    %v1049 = vpow.pop %v1048
    %v1050 = vadd.f32 %v1047, 1.0
    %v1051 = vadd.f32 %v1049, 1.0
    %v1052 = vrcp.pop %v1050
    %v1053 = vmul.f32 1.0, %v1052
    %v1054 = vrcp.pop %v1051
    %v1055 = vmul.f32 1.0, %v1054
    %v1056 = vtanh.pop %v1043
    %v1057 = vmul.f32 %v1053, %v958
    %1059 = vrot.lane.b32.xlu0 %v1056, 64
    %v1060 = vpop.permute.xlu0 %1059
    %v1062 = vmul.f32 %v1053, %v1060
    %1064 = vrot.lane.b32.xlu0 %v1062, 64
    %v1065 = vpop.permute.xlu0 %1064
    %v1067 = vadd.f32 %v1057, %v1065
    %v1068 = vtanh.pop %v1067
    %1070 = vrot.lane.b32.xlu0 %v1068, 64
    %v1071 = vpop.permute.xlu0 %1070
    %v1073 = vmul.f32 %v1055, %v1071
    %1074 = vst.msk [vmem:[#allocation3 + $0x30] sm:$0xff] %vm309, %v1073
    %v1075 = vld [vmem:[#allocation2 + $0x70] sm:$0xff]
    %v1076 = vld [vmem:[#allocation2 + $0x78] sm:$0xff]
    %v1078 = vsel %vm309, %v1073, 0
    %1080 = vmatprep.subr.mxu0 %v290
    %1081 = vmatpush1.msra.mxu0 %v289
    %1082 = vmatprep.subr.mxu0 %v292
    %1083 = vmatpush1.msra.mxu0 %v291
    %1084 = vmatprep.subr.mxu0 %v294
    %1085 = vmatpush1.msra.mxu0 %v293
    %1086 = vmatprep.subr.mxu0 %v296
    %1087 = vmatpush1.msra.mxu0 %v295
    %1088 = vmatprep.subr.mxu0 %v298
    %1089 = vmatpush1.msra.mxu0 %v297
    %1090 = vmatprep.subr.mxu0 %v300
    %1091 = vmatpush1.msra.mxu0 %v299
    %1092 = vmatprep.subr.mxu0 %v302
    %1093 = vmatpush1.msra.mxu0 %v301
    %1094 = vmatprep.subr.mxu0 %v304
    %1095 = vmatpush1.msra.mxu0 %v303
    %1096 = vmatprep.subr.mxu0 0.0
    %1097 = vmatpush1.msra.mxu0 0.0
    %1098 = vmatprep.subr.mxu0 0.0
    %1099 = vmatpush1.msra.mxu0 0.0
    %1100 = vmatprep.subr.mxu0 0.0
    %1101 = vmatpush1.msra.mxu0 0.0
    %1102 = vmatprep.subr.mxu0 0.0
    %1103 = vmatpush1.msra.mxu0 0.0
    %1104 = vmatprep.subr.mxu0 0.0
    %1105 = vmatpush1.msra.mxu0 0.0
    %1106 = vmatprep.subr.mxu0 0.0
    %1107 = vmatpush1.msra.mxu0 0.0
    %1108 = vmatprep.subr.mxu0 0.0
    %1109 = vmatpush1.msra.mxu0 0.0
    %1110 = vmatprep.subr.mxu0 0.0
    %1111 = vmatpush1.msra.mxu0 0.0
    %1112 = vmatprep.subr.mxu0 0.0
    %1113 = vmatpush1.msra.mxu0 0.0
    %1114 = vmatprep.subr.mxu0 0.0
    %1115 = vmatpush1.msra.mxu0 0.0
    %1116 = vmatprep.subr.mxu0 0.0
    %1117 = vmatpush1.msra.mxu0 0.0
    %1118 = vmatprep.subr.mxu0 0.0
    %1119 = vmatpush1.msra.mxu0 0.0
    %1120 = vmatprep.subr.mxu0 0.0
    %1121 = vmatpush1.msra.mxu0 0.0
    %1122 = vmatprep.subr.mxu0 0.0
    %1123 = vmatpush1.msra.mxu0 0.0
    %1124 = vmatprep.subr.mxu0 0.0
    %1125 = vmatpush1.msra.mxu0 0.0
    %1126 = vmatprep.subr.mxu0 0.0
    %1127 = vmatpush1.msra.mxu0 0.0
    %1128 = vmatprep.subr.mxu0 0.0
    %1129 = vmatpush1.msra.mxu0 0.0
    %1130 = vmatprep.subr.mxu0 0.0
    %1131 = vmatpush1.msra.mxu0 0.0
    %1132 = vmatprep.subr.mxu0 0.0
    %1133 = vmatpush1.msra.mxu0 0.0
    %1134 = vmatprep.subr.mxu0 0.0
    %1135 = vmatpush1.msra.mxu0 0.0
    %1136 = vmatprep.subr.mxu0 0.0
    %1137 = vmatpush1.msra.mxu0 0.0
    %1138 = vmatprep.subr.mxu0 0.0
    %1139 = vmatpush1.msra.mxu0 0.0
    %1140 = vmatprep.subr.mxu0 0.0
    %1141 = vmatpush1.msra.mxu0 0.0
    %1142 = vmatprep.subr.mxu0 0.0
    %1143 = vmatpush1.msra.mxu0 0.0
    %1144 = vmatprep.mubr.f32.mxu0 0.0
    %1145 = vmatmul.mubr.f32.gmra.mrb[0].mxu0 %v1078
    %v1146 = vpop.f32.mrb[0].mxu0
    %v1147 = vadd.f32 0.0, %v1146
    %v1148 = vpop.f32.mrb[0].mxu0
    %v1149 = vadd.f32 0.0, %v1148
    %1150 = vdwg.mxu0
    %v1151 = vadd.f32 %v1075, %v1147
    %v1152 = vadd.f32 %v1076, %v1149
    %v1153 = vxor.u32 %v1151, 2147483648
    %v1154 = vxor.u32 %v1152, 2147483648
    %v1155 = vmul.f32 %v1153, 1.442695
    %v1156 = vpow.pop %v1155
    %v1157 = vmul.f32 %v1154, 1.442695
    %v1158 = vpow.pop %v1157
    %v1159 = vadd.f32 %v1156, 1.0
    %v1160 = vadd.f32 %v1158, 1.0
    %v1161 = vrcp.pop %v1159
    %v1162 = vmul.f32 1.0, %v1161
    %v1163 = vrcp.pop %v1160
    %v1164 = vmul.f32 1.0, %v1163
    %v1165 = vtanh.pop %v1152
    %v1166 = vmul.f32 %v1162, %v1067
    %1168 = vrot.lane.b32.xlu0 %v1165, 64
    %v1169 = vpop.permute.xlu0 %1168
    %v1171 = vmul.f32 %v1162, %v1169
    %1173 = vrot.lane.b32.xlu0 %v1171, 64
    %v1174 = vpop.permute.xlu0 %1173
    %v1176 = vadd.f32 %v1166, %v1174
    %v1177 = vtanh.pop %v1176
    %1179 = vrot.lane.b32.xlu0 %v1177, 64
    %v1180 = vpop.permute.xlu0 %1179
    %v1182 = vmul.f32 %v1164, %v1180
    %1183 = vst.msk [vmem:[#allocation3 + $0x38] sm:$0xff] %vm309, %v1182
    %v1184 = vld [vmem:[#allocation3] sm:$0xff]
    %v1185 = vld [vmem:[#allocation3 + $0x8] sm:$0xff]
    %v1186 = vld [vmem:[#allocation3 + $0x10] sm:$0xff]
    %v1187 = vld [vmem:[#allocation3 + $0x18] sm:$0xff]
    %v1188 = vld [vmem:[#allocation3 + $0x20] sm:$0xff]
    %v1189 = vld [vmem:[#allocation3 + $0x28] sm:$0xff]
    %v1190 = vld [vmem:[#allocation3 + $0x30] sm:$0xff]
    %v1191 = vld [vmem:[#allocation3 + $0x38] sm:$0xff]
    %v1192 = vld [vmem:[#allocation4] sm:$0xff]
    %v1193 = vld [vmem:[#allocation4 + $0x8] sm:$0xff]
    %v1194 = vld [vmem:[#allocation4 + $0x10] sm:$0xff]
    %v1195 = vld [vmem:[#allocation4 + $0x18] sm:$0xff]
    %v1196 = vld [vmem:[#allocation4 + $0x20] sm:$0xff]
    %v1197 = vld [vmem:[#allocation4 + $0x28] sm:$0xff]
    %v1198 = vld [vmem:[#allocation4 + $0x30] sm:$0xff]
    %v1199 = vld [vmem:[#allocation4 + $0x38] sm:$0xff]
    %v1200 = vld [vmem:[#allocation4 + $0x40] sm:$0xff]
    %v1201 = vld [vmem:[#allocation4 + $0x48] sm:$0xff]
    %v1202 = vld [vmem:[#allocation4 + $0x50] sm:$0xff]
    %v1203 = vld [vmem:[#allocation4 + $0x58] sm:$0xff]
    %v1204 = vld [vmem:[#allocation4 + $0x60] sm:$0xff]
    %v1205 = vld [vmem:[#allocation4 + $0x68] sm:$0xff]
    %v1206 = vld [vmem:[#allocation4 + $0x70] sm:$0xff]
    %v1207 = vld [vmem:[#allocation4 + $0x78] sm:$0xff]
    %v1208 = vld [vmem:[%s6] sm:$0x3]
    %v1210 = vlaneseq
    %v1211 = vshrl.u32 %v1210, 7
    %v1212 = vsub.s32 0, %v1211
    %v1213 = vrot.slane %v1208, %v1212
    %v1214 = vlaneseq
    %v1215 = vshrl.u32 %v1214, 7
    %v1216 = vsub.s32 1, %v1215
    %v1217 = vrot.slane %v1208, %v1216
    %v1221 = vsel %vm309, %v1184, 0
    %v1224 = vsel %vm309, %v1185, 0
    %v1227 = vsel %vm309, %v1186, 0
    %v1230 = vsel %vm309, %v1187, 0
    %v1233 = vsel %vm309, %v1188, 0
    %v1236 = vsel %vm309, %v1189, 0
    %v1239 = vsel %vm309, %v1190, 0
    %v1242 = vsel %vm309, %v1191, 0
    %1244 = vmatprep.subr.mxu0 %v1193
    %1245 = vmatpush1.msra.mxu0 %v1192
    %1246 = vmatprep.subr.mxu0 %v1195
    %1247 = vmatpush1.msra.mxu0 %v1194
    %1248 = vmatprep.subr.mxu0 %v1197
    %1249 = vmatpush1.msra.mxu0 %v1196
    %1250 = vmatprep.subr.mxu0 %v1199
    %1251 = vmatpush1.msra.mxu0 %v1198
    %1252 = vmatprep.subr.mxu0 %v1201
    %1253 = vmatpush1.msra.mxu0 %v1200
    %1254 = vmatprep.subr.mxu0 %v1203
    %1255 = vmatpush1.msra.mxu0 %v1202
    %1256 = vmatprep.subr.mxu0 %v1205
    %1257 = vmatpush1.msra.mxu0 %v1204
    %1258 = vmatprep.subr.mxu0 %v1207
    %1259 = vmatpush1.msra.mxu0 %v1206
    %1260 = vmatprep.subr.mxu0 0.0
    %1261 = vmatpush1.msra.mxu0 0.0
    %1262 = vmatprep.subr.mxu0 0.0
    %1263 = vmatpush1.msra.mxu0 0.0
    %1264 = vmatprep.subr.mxu0 0.0
    %1265 = vmatpush1.msra.mxu0 0.0
    %1266 = vmatprep.subr.mxu0 0.0
    %1267 = vmatpush1.msra.mxu0 0.0
    %1268 = vmatprep.subr.mxu0 0.0
    %1269 = vmatpush1.msra.mxu0 0.0
    %1270 = vmatprep.subr.mxu0 0.0
    %1271 = vmatpush1.msra.mxu0 0.0
    %1272 = vmatprep.subr.mxu0 0.0
    %1273 = vmatpush1.msra.mxu0 0.0
    %1274 = vmatprep.subr.mxu0 0.0
    %1275 = vmatpush1.msra.mxu0 0.0
    %1276 = vmatprep.subr.mxu0 0.0
    %1277 = vmatpush1.msra.mxu0 0.0
    %1278 = vmatprep.subr.mxu0 0.0
    %1279 = vmatpush1.msra.mxu0 0.0
    %1280 = vmatprep.subr.mxu0 0.0
    %1281 = vmatpush1.msra.mxu0 0.0
    %1282 = vmatprep.subr.mxu0 0.0
    %1283 = vmatpush1.msra.mxu0 0.0
    %1284 = vmatprep.subr.mxu0 0.0
    %1285 = vmatpush1.msra.mxu0 0.0
    %1286 = vmatprep.subr.mxu0 0.0
    %1287 = vmatpush1.msra.mxu0 0.0
    %1288 = vmatprep.subr.mxu0 0.0
    %1289 = vmatpush1.msra.mxu0 0.0
    %1290 = vmatprep.subr.mxu0 0.0
    %1291 = vmatpush1.msra.mxu0 0.0
    %1292 = vmatprep.subr.mxu0 0.0
    %1293 = vmatpush1.msra.mxu0 0.0
    %1294 = vmatprep.subr.mxu0 0.0
    %1295 = vmatpush1.msra.mxu0 0.0
    %1296 = vmatprep.subr.mxu0 0.0
    %1297 = vmatpush1.msra.mxu0 0.0
    %1298 = vmatprep.subr.mxu0 0.0
    %1299 = vmatpush1.msra.mxu0 0.0
    %1300 = vmatprep.subr.mxu0 0.0
    %1301 = vmatpush1.msra.mxu0 0.0
    %1302 = vmatprep.subr.mxu0 0.0
    %1303 = vmatpush1.msra.mxu0 0.0
    %1304 = vmatprep.subr.mxu0 0.0
    %1305 = vmatpush1.msra.mxu0 0.0
    %1306 = vmatprep.subr.mxu0 0.0
    %1307 = vmatpush1.msra.mxu0 0.0
    %1308 = vmatprep.mubr.f32.mxu0 0.0
    %1309 = vmatmul.mubr.f32.gmra.mrb[0].mxu0 %v1221
    %v1310 = vpop.f32.mrb[0].mxu0
    %v1311 = vadd.f32 %v1213, %v1310
    %v1312 = vpop.f32.mrb[0].mxu0
    %v1313 = vadd.f32 %v1217, %v1312
    %1314 = vmatprep.mubr.f32.mxu0 0.0
    %1315 = vmatmul.mubr.f32.gmra.mrb[0].mxu0 %v1224
    %v1316 = vpop.f32.mrb[0].mxu0
    %v1317 = vadd.f32 %v1213, %v1316
    %v1318 = vpop.f32.mrb[0].mxu0
    %v1319 = vadd.f32 %v1217, %v1318
    %1320 = vmatprep.mubr.f32.mxu0 0.0
    %1321 = vmatmul.mubr.f32.gmra.mrb[0].mxu0 %v1227
    %v1322 = vpop.f32.mrb[0].mxu0
    %v1323 = vadd.f32 %v1213, %v1322
    %v1324 = vpop.f32.mrb[0].mxu0
    %v1325 = vadd.f32 %v1217, %v1324
    %1326 = vmatprep.mubr.f32.mxu0 0.0
    %1327 = vmatmul.mubr.f32.gmra.mrb[0].mxu0 %v1230
    %v1328 = vpop.f32.mrb[0].mxu0
    %v1329 = vadd.f32 %v1213, %v1328
    %v1330 = vpop.f32.mrb[0].mxu0
    %v1331 = vadd.f32 %v1217, %v1330
    %1332 = vmatprep.mubr.f32.mxu0 0.0
    %1333 = vmatmul.mubr.f32.gmra.mrb[0].mxu0 %v1233
    %v1334 = vpop.f32.mrb[0].mxu0
    %v1335 = vadd.f32 %v1213, %v1334
    %v1336 = vpop.f32.mrb[0].mxu0
    %v1337 = vadd.f32 %v1217, %v1336
    %1338 = vmatprep.mubr.f32.mxu0 0.0
    %1339 = vmatmul.mubr.f32.gmra.mrb[0].mxu0 %v1236
    %v1340 = vpop.f32.mrb[0].mxu0
    %v1341 = vadd.f32 %v1213, %v1340
    %v1342 = vpop.f32.mrb[0].mxu0
    %v1343 = vadd.f32 %v1217, %v1342
    %1344 = vmatprep.mubr.f32.mxu0 0.0
    %1345 = vmatmul.mubr.f32.gmra.mrb[0].mxu0 %v1239
    %v1346 = vpop.f32.mrb[0].mxu0
    %v1347 = vadd.f32 %v1213, %v1346
    %v1348 = vpop.f32.mrb[0].mxu0
    %v1349 = vadd.f32 %v1217, %v1348
    %1350 = vmatprep.mubr.f32.mxu0 0.0
    %1351 = vmatmul.mubr.f32.gmra.mrb[0].mxu0 %v1242
    %v1352 = vpop.f32.mrb[0].mxu0
    %v1353 = vadd.f32 %v1213, %v1352
    %v1354 = vpop.f32.mrb[0].mxu0
    %v1355 = vadd.f32 %v1217, %v1354
    %1356 = vdwg.mxu0
    %1357 = vst [vmem:[#allocation2] sm:$0xff] %v1311
    %1358 = vst [vmem:[#allocation2 + $0x8] sm:$0xff] %v1313
    %1359 = vst [vmem:[#allocation2 + $0x10] sm:$0xff] %v1317
    %1360 = vst [vmem:[#allocation2 + $0x18] sm:$0xff] %v1319
    %1361 = vst [vmem:[#allocation2 + $0x20] sm:$0xff] %v1323
    %1362 = vst [vmem:[#allocation2 + $0x28] sm:$0xff] %v1325
    %1363 = vst [vmem:[#allocation2 + $0x30] sm:$0xff] %v1329
    %1364 = vst [vmem:[#allocation2 + $0x38] sm:$0xff] %v1331
    %1365 = vst [vmem:[#allocation2 + $0x40] sm:$0xff] %v1335
    %1366 = vst [vmem:[#allocation2 + $0x48] sm:$0xff] %v1337
    %1367 = vst [vmem:[#allocation2 + $0x50] sm:$0xff] %v1341
    %1368 = vst [vmem:[#allocation2 + $0x58] sm:$0xff] %v1343
    %1369 = vst [vmem:[#allocation2 + $0x60] sm:$0xff] %v1347
    %1370 = vst [vmem:[#allocation2 + $0x68] sm:$0xff] %v1349
    %1371 = vst [vmem:[#allocation2 + $0x70] sm:$0xff] %v1353
    %1372 = vst [vmem:[#allocation2 + $0x78] sm:$0xff] %v1355
    %v1373 = vld [vmem:[#allocation9] sm:$0xff]
    %v1374 = vld [vmem:[#allocation9 + $0x8] sm:$0xff]
    %v1375 = vld [vmem:[#allocation9 + $0x10] sm:$0xff]
    %v1376 = vld [vmem:[#allocation9 + $0x18] sm:$0xff]
    %v1377 = vld [vmem:[#allocation9 + $0x20] sm:$0xff]
    %v1378 = vld [vmem:[#allocation9 + $0x28] sm:$0xff]
    %v1379 = vld [vmem:[#allocation9 + $0x30] sm:$0xff]
    %v1380 = vld [vmem:[#allocation9 + $0x38] sm:$0xff]
    %v1381 = vld [vmem:[#allocation9 + $0x40] sm:$0xff]
    %v1382 = vld [vmem:[#allocation9 + $0x48] sm:$0xff]
    %v1383 = vld [vmem:[#allocation9 + $0x50] sm:$0xff]
    %v1384 = vld [vmem:[#allocation9 + $0x58] sm:$0xff]
    %v1385 = vld [vmem:[#allocation9 + $0x60] sm:$0xff]
    %v1386 = vld [vmem:[#allocation9 + $0x68] sm:$0xff]
    %v1387 = vld [vmem:[#allocation9 + $0x70] sm:$0xff]
    %v1388 = vld [vmem:[#allocation9 + $0x78] sm:$0xff]
    %v1389 = vld [vmem:[%s8] sm:$0xff]
    %v1390 = vld [vmem:[#allocation10] sm:$0xff]
    %v1391 = vld [vmem:[#allocation2] sm:$0xff]
    %v1392 = vld [vmem:[#allocation2 + $0x8] sm:$0xff]
    %v1394 = vsel %vm309, %v1389, 0
    %1396 = vmatprep.subr.mxu0 %v1374
    %1397 = vmatpush1.msra.mxu0 %v1373
    %1398 = vmatprep.subr.mxu0 %v1376
    %1399 = vmatpush1.msra.mxu0 %v1375
    %1400 = vmatprep.subr.mxu0 %v1378
    %1401 = vmatpush1.msra.mxu0 %v1377
    %1402 = vmatprep.subr.mxu0 %v1380
    %1403 = vmatpush1.msra.mxu0 %v1379
    %1404 = vmatprep.subr.mxu0 %v1382
    %1405 = vmatpush1.msra.mxu0 %v1381
    %1406 = vmatprep.subr.mxu0 %v1384
    %1407 = vmatpush1.msra.mxu0 %v1383
    %1408 = vmatprep.subr.mxu0 %v1386
    %1409 = vmatpush1.msra.mxu0 %v1385
    %1410 = vmatprep.subr.mxu0 %v1388
    %1411 = vmatpush1.msra.mxu0 %v1387
    %1412 = vmatprep.subr.mxu0 0.0
    %1413 = vmatpush1.msra.mxu0 0.0
    %1414 = vmatprep.subr.mxu0 0.0
    %1415 = vmatpush1.msra.mxu0 0.0
    %1416 = vmatprep.subr.mxu0 0.0
    %1417 = vmatpush1.msra.mxu0 0.0
    %1418 = vmatprep.subr.mxu0 0.0
    %1419 = vmatpush1.msra.mxu0 0.0
    %1420 = vmatprep.subr.mxu0 0.0
    %1421 = vmatpush1.msra.mxu0 0.0
    %1422 = vmatprep.subr.mxu0 0.0
    %1423 = vmatpush1.msra.mxu0 0.0
    %1424 = vmatprep.subr.mxu0 0.0
    %1425 = vmatpush1.msra.mxu0 0.0
    %1426 = vmatprep.subr.mxu0 0.0
    %1427 = vmatpush1.msra.mxu0 0.0
    %1428 = vmatprep.subr.mxu0 0.0
    %1429 = vmatpush1.msra.mxu0 0.0
    %1430 = vmatprep.subr.mxu0 0.0
    %1431 = vmatpush1.msra.mxu0 0.0
    %1432 = vmatprep.subr.mxu0 0.0
    %1433 = vmatpush1.msra.mxu0 0.0
    %1434 = vmatprep.subr.mxu0 0.0
    %1435 = vmatpush1.msra.mxu0 0.0
    %1436 = vmatprep.subr.mxu0 0.0
    %1437 = vmatpush1.msra.mxu0 0.0
    %1438 = vmatprep.subr.mxu0 0.0
    %1439 = vmatpush1.msra.mxu0 0.0
    %1440 = vmatprep.subr.mxu0 0.0
    %1441 = vmatpush1.msra.mxu0 0.0
    %1442 = vmatprep.subr.mxu0 0.0
    %1443 = vmatpush1.msra.mxu0 0.0
    %1444 = vmatprep.subr.mxu0 0.0
    %1445 = vmatpush1.msra.mxu0 0.0
    %1446 = vmatprep.subr.mxu0 0.0
    %1447 = vmatpush1.msra.mxu0 0.0
    %1448 = vmatprep.subr.mxu0 0.0
    %1449 = vmatpush1.msra.mxu0 0.0
    %1450 = vmatprep.subr.mxu0 0.0
    %1451 = vmatpush1.msra.mxu0 0.0
    %1452 = vmatprep.subr.mxu0 0.0
    %1453 = vmatpush1.msra.mxu0 0.0
    %1454 = vmatprep.subr.mxu0 0.0
    %1455 = vmatpush1.msra.mxu0 0.0
    %1456 = vmatprep.subr.mxu0 0.0
    %1457 = vmatpush1.msra.mxu0 0.0
    %1458 = vmatprep.subr.mxu0 0.0
    %1459 = vmatpush1.msra.mxu0 0.0
    %1460 = vmatprep.mubr.f32.mxu0 0.0
    %1461 = vmatmul.mubr.f32.gmra.mrb[0].mxu0 %v1394
    %v1462 = vpop.f32.mrb[0].mxu0
    %v1463 = vadd.f32 0.0, %v1462
    %v1464 = vpop.f32.mrb[0].mxu0
    %v1465 = vadd.f32 0.0, %v1464
    %1466 = vdwg.mxu0
    %v1467 = vadd.f32 %v1391, %v1463
    %v1468 = vadd.f32 %v1392, %v1465
    %v1469 = vxor.u32 %v1467, 2147483648
    %v1470 = vxor.u32 %v1468, 2147483648
    %v1471 = vmul.f32 %v1469, 1.442695
    %v1472 = vpow.pop %v1471
    %v1473 = vmul.f32 %v1470, 1.442695
    %v1474 = vpow.pop %v1473
    %v1475 = vadd.f32 %v1472, 1.0
    %v1476 = vadd.f32 %v1474, 1.0
    %v1477 = vrcp.pop %v1475
    %v1478 = vmul.f32 1.0, %v1477
    %v1479 = vrcp.pop %v1476
    %v1480 = vmul.f32 1.0, %v1479
    %v1481 = vtanh.pop %v1468
    %1483 = vrot.lane.b32.xlu0 %v1390, 64
    %v1484 = vpop.permute.xlu0 %1483
    %v1486 = vmul.f32 %v1478, %v1484
    %1488 = vrot.lane.b32.xlu0 %v1481, 64
    %v1489 = vpop.permute.xlu0 %1488
    %v1491 = vmul.f32 %v1478, %v1489
    %1493 = vrot.lane.b32.xlu0 %v1491, 64
    %v1494 = vpop.permute.xlu0 %1493
    %v1496 = vadd.f32 %v1486, %v1494
    %v1497 = vtanh.pop %v1496
    %1499 = vrot.lane.b32.xlu0 %v1497, 64
    %v1500 = vpop.permute.xlu0 %1499
    %v1502 = vmul.f32 %v1480, %v1500
    %1503 = vst.msk [vmem:[#allocation3] sm:$0xff] %vm309, %v1502
    %v1504 = vld [vmem:[#allocation2 + $0x10] sm:$0xff]
    %v1505 = vld [vmem:[#allocation2 + $0x18] sm:$0xff]
    %v1507 = vsel %vm309, %v1502, 0
    %1509 = vmatprep.subr.mxu0 %v1374
    %1510 = vmatpush1.msra.mxu0 %v1373
    %1511 = vmatprep.subr.mxu0 %v1376
    %1512 = vmatpush1.msra.mxu0 %v1375
    %1513 = vmatprep.subr.mxu0 %v1378
    %1514 = vmatpush1.msra.mxu0 %v1377
    %1515 = vmatprep.subr.mxu0 %v1380
    %1516 = vmatpush1.msra.mxu0 %v1379
    %1517 = vmatprep.subr.mxu0 %v1382
    %1518 = vmatpush1.msra.mxu0 %v1381
    %1519 = vmatprep.subr.mxu0 %v1384
    %1520 = vmatpush1.msra.mxu0 %v1383
    %1521 = vmatprep.subr.mxu0 %v1386
    %1522 = vmatpush1.msra.mxu0 %v1385
    %1523 = vmatprep.subr.mxu0 %v1388
    %1524 = vmatpush1.msra.mxu0 %v1387
    %1525 = vmatprep.subr.mxu0 0.0
    %1526 = vmatpush1.msra.mxu0 0.0
    %1527 = vmatprep.subr.mxu0 0.0
    %1528 = vmatpush1.msra.mxu0 0.0
    %1529 = vmatprep.subr.mxu0 0.0
    %1530 = vmatpush1.msra.mxu0 0.0
    %1531 = vmatprep.subr.mxu0 0.0
    %1532 = vmatpush1.msra.mxu0 0.0
    %1533 = vmatprep.subr.mxu0 0.0
    %1534 = vmatpush1.msra.mxu0 0.0
    %1535 = vmatprep.subr.mxu0 0.0
    %1536 = vmatpush1.msra.mxu0 0.0
    %1537 = vmatprep.subr.mxu0 0.0
    %1538 = vmatpush1.msra.mxu0 0.0
    %1539 = vmatprep.subr.mxu0 0.0
    %1540 = vmatpush1.msra.mxu0 0.0
    %1541 = vmatprep.subr.mxu0 0.0
    %1542 = vmatpush1.msra.mxu0 0.0
    %1543 = vmatprep.subr.mxu0 0.0
    %1544 = vmatpush1.msra.mxu0 0.0
    %1545 = vmatprep.subr.mxu0 0.0
    %1546 = vmatpush1.msra.mxu0 0.0
    %1547 = vmatprep.subr.mxu0 0.0
    %1548 = vmatpush1.msra.mxu0 0.0
    %1549 = vmatprep.subr.mxu0 0.0
    %1550 = vmatpush1.msra.mxu0 0.0
    %1551 = vmatprep.subr.mxu0 0.0
    %1552 = vmatpush1.msra.mxu0 0.0
    %1553 = vmatprep.subr.mxu0 0.0
    %1554 = vmatpush1.msra.mxu0 0.0
    %1555 = vmatprep.subr.mxu0 0.0
    %1556 = vmatpush1.msra.mxu0 0.0
    %1557 = vmatprep.subr.mxu0 0.0
    %1558 = vmatpush1.msra.mxu0 0.0
    %1559 = vmatprep.subr.mxu0 0.0
    %1560 = vmatpush1.msra.mxu0 0.0
    %1561 = vmatprep.subr.mxu0 0.0
    %1562 = vmatpush1.msra.mxu0 0.0
    %1563 = vmatprep.subr.mxu0 0.0
    %1564 = vmatpush1.msra.mxu0 0.0
    %1565 = vmatprep.subr.mxu0 0.0
    %1566 = vmatpush1.msra.mxu0 0.0
    %1567 = vmatprep.subr.mxu0 0.0
    %1568 = vmatpush1.msra.mxu0 0.0
    %1569 = vmatprep.subr.mxu0 0.0
    %1570 = vmatpush1.msra.mxu0 0.0
    %1571 = vmatprep.subr.mxu0 0.0
    %1572 = vmatpush1.msra.mxu0 0.0
    %1573 = vmatprep.mubr.f32.mxu0 0.0
    %1574 = vmatmul.mubr.f32.gmra.mrb[0].mxu0 %v1507
    %v1575 = vpop.f32.mrb[0].mxu0
    %v1576 = vadd.f32 0.0, %v1575
    %v1577 = vpop.f32.mrb[0].mxu0
    %v1578 = vadd.f32 0.0, %v1577
    %1579 = vdwg.mxu0
    %v1580 = vadd.f32 %v1504, %v1576
    %v1581 = vadd.f32 %v1505, %v1578
    %v1582 = vxor.u32 %v1580, 2147483648
    %v1583 = vxor.u32 %v1581, 2147483648
    %v1584 = vmul.f32 %v1582, 1.442695
    %v1585 = vpow.pop %v1584
    %v1586 = vmul.f32 %v1583, 1.442695
    %v1587 = vpow.pop %v1586
    %v1588 = vadd.f32 %v1585, 1.0
    %v1589 = vadd.f32 %v1587, 1.0
    %v1590 = vrcp.pop %v1588
    %v1591 = vmul.f32 1.0, %v1590
    %v1592 = vrcp.pop %v1589
    %v1593 = vmul.f32 1.0, %v1592
    %v1594 = vtanh.pop %v1581
    %v1595 = vmul.f32 %v1591, %v1496
    %1597 = vrot.lane.b32.xlu0 %v1594, 64
    %v1598 = vpop.permute.xlu0 %1597
    %v1600 = vmul.f32 %v1591, %v1598
    %1602 = vrot.lane.b32.xlu0 %v1600, 64
    %v1603 = vpop.permute.xlu0 %1602
    %v1605 = vadd.f32 %v1595, %v1603
    %v1606 = vtanh.pop %v1605
    %1608 = vrot.lane.b32.xlu0 %v1606, 64
    %v1609 = vpop.permute.xlu0 %1608
    %v1611 = vmul.f32 %v1593, %v1609
    %1612 = vst.msk [vmem:[#allocation3 + $0x8] sm:$0xff] %vm309, %v1611
    %v1613 = vld [vmem:[#allocation2 + $0x20] sm:$0xff]
    %v1614 = vld [vmem:[#allocation2 + $0x28] sm:$0xff]
    %v1616 = vsel %vm309, %v1611, 0
    %1618 = vmatprep.subr.mxu0 %v1374
    %1619 = vmatpush1.msra.mxu0 %v1373
    %1620 = vmatprep.subr.mxu0 %v1376
    %1621 = vmatpush1.msra.mxu0 %v1375
    %1622 = vmatprep.subr.mxu0 %v1378
    %1623 = vmatpush1.msra.mxu0 %v1377
    %1624 = vmatprep.subr.mxu0 %v1380
    %1625 = vmatpush1.msra.mxu0 %v1379
    %1626 = vmatprep.subr.mxu0 %v1382
    %1627 = vmatpush1.msra.mxu0 %v1381
    %1628 = vmatprep.subr.mxu0 %v1384
    %1629 = vmatpush1.msra.mxu0 %v1383
    %1630 = vmatprep.subr.mxu0 %v1386
    %1631 = vmatpush1.msra.mxu0 %v1385
    %1632 = vmatprep.subr.mxu0 %v1388
    %1633 = vmatpush1.msra.mxu0 %v1387
    %1634 = vmatprep.subr.mxu0 0.0
    %1635 = vmatpush1.msra.mxu0 0.0
    %1636 = vmatprep.subr.mxu0 0.0
    %1637 = vmatpush1.msra.mxu0 0.0
    %1638 = vmatprep.subr.mxu0 0.0
    %1639 = vmatpush1.msra.mxu0 0.0
    %1640 = vmatprep.subr.mxu0 0.0
    %1641 = vmatpush1.msra.mxu0 0.0
    %1642 = vmatprep.subr.mxu0 0.0
    %1643 = vmatpush1.msra.mxu0 0.0
    %1644 = vmatprep.subr.mxu0 0.0
    %1645 = vmatpush1.msra.mxu0 0.0
    %1646 = vmatprep.subr.mxu0 0.0
    %1647 = vmatpush1.msra.mxu0 0.0
    %1648 = vmatprep.subr.mxu0 0.0
    %1649 = vmatpush1.msra.mxu0 0.0
    %1650 = vmatprep.subr.mxu0 0.0
    %1651 = vmatpush1.msra.mxu0 0.0
    %1652 = vmatprep.subr.mxu0 0.0
    %1653 = vmatpush1.msra.mxu0 0.0
    %1654 = vmatprep.subr.mxu0 0.0
    %1655 = vmatpush1.msra.mxu0 0.0
    %1656 = vmatprep.subr.mxu0 0.0
    %1657 = vmatpush1.msra.mxu0 0.0
    %1658 = vmatprep.subr.mxu0 0.0
    %1659 = vmatpush1.msra.mxu0 0.0
    %1660 = vmatprep.subr.mxu0 0.0
    %1661 = vmatpush1.msra.mxu0 0.0
    %1662 = vmatprep.subr.mxu0 0.0
    %1663 = vmatpush1.msra.mxu0 0.0
    %1664 = vmatprep.subr.mxu0 0.0
    %1665 = vmatpush1.msra.mxu0 0.0
    %1666 = vmatprep.subr.mxu0 0.0
    %1667 = vmatpush1.msra.mxu0 0.0
    %1668 = vmatprep.subr.mxu0 0.0
    %1669 = vmatpush1.msra.mxu0 0.0
    %1670 = vmatprep.subr.mxu0 0.0
    %1671 = vmatpush1.msra.mxu0 0.0
    %1672 = vmatprep.subr.mxu0 0.0
    %1673 = vmatpush1.msra.mxu0 0.0
    %1674 = vmatprep.subr.mxu0 0.0
    %1675 = vmatpush1.msra.mxu0 0.0
    %1676 = vmatprep.subr.mxu0 0.0
    %1677 = vmatpush1.msra.mxu0 0.0
    %1678 = vmatprep.subr.mxu0 0.0
    %1679 = vmatpush1.msra.mxu0 0.0
    %1680 = vmatprep.subr.mxu0 0.0
    %1681 = vmatpush1.msra.mxu0 0.0
    %1682 = vmatprep.mubr.f32.mxu0 0.0
    %1683 = vmatmul.mubr.f32.gmra.mrb[0].mxu0 %v1616
    %v1684 = vpop.f32.mrb[0].mxu0
    %v1685 = vadd.f32 0.0, %v1684
    %v1686 = vpop.f32.mrb[0].mxu0
    %v1687 = vadd.f32 0.0, %v1686
    %1688 = vdwg.mxu0
    %v1689 = vadd.f32 %v1613, %v1685
    %v1690 = vadd.f32 %v1614, %v1687
    %v1691 = vxor.u32 %v1689, 2147483648
    %v1692 = vxor.u32 %v1690, 2147483648
    %v1693 = vmul.f32 %v1691, 1.442695
    %v1694 = vpow.pop %v1693
    %v1695 = vmul.f32 %v1692, 1.442695
    %v1696 = vpow.pop %v1695
    %v1697 = vadd.f32 %v1694, 1.0
    %v1698 = vadd.f32 %v1696, 1.0
    %v1699 = vrcp.pop %v1697
    %v1700 = vmul.f32 1.0, %v1699
    %v1701 = vrcp.pop %v1698
    %v1702 = vmul.f32 1.0, %v1701
    %v1703 = vtanh.pop %v1690
    %v1704 = vmul.f32 %v1700, %v1605
    %1706 = vrot.lane.b32.xlu0 %v1703, 64
    %v1707 = vpop.permute.xlu0 %1706
    %v1709 = vmul.f32 %v1700, %v1707
    %1711 = vrot.lane.b32.xlu0 %v1709, 64
    %v1712 = vpop.permute.xlu0 %1711
    %v1714 = vadd.f32 %v1704, %v1712
    %v1715 = vtanh.pop %v1714
    %1717 = vrot.lane.b32.xlu0 %v1715, 64
    %v1718 = vpop.permute.xlu0 %1717
    %v1720 = vmul.f32 %v1702, %v1718
    %1721 = vst.msk [vmem:[#allocation3 + $0x10] sm:$0xff] %vm309, %v1720
    %v1722 = vld [vmem:[#allocation2 + $0x30] sm:$0xff]
    %v1723 = vld [vmem:[#allocation2 + $0x38] sm:$0xff]
    %v1725 = vsel %vm309, %v1720, 0
    %1727 = vmatprep.subr.mxu0 %v1374
    %1728 = vmatpush1.msra.mxu0 %v1373
    %1729 = vmatprep.subr.mxu0 %v1376
    %1730 = vmatpush1.msra.mxu0 %v1375
    %1731 = vmatprep.subr.mxu0 %v1378
    %1732 = vmatpush1.msra.mxu0 %v1377
    %1733 = vmatprep.subr.mxu0 %v1380
    %1734 = vmatpush1.msra.mxu0 %v1379
    %1735 = vmatprep.subr.mxu0 %v1382
    %1736 = vmatpush1.msra.mxu0 %v1381
    %1737 = vmatprep.subr.mxu0 %v1384
    %1738 = vmatpush1.msra.mxu0 %v1383
    %1739 = vmatprep.subr.mxu0 %v1386
    %1740 = vmatpush1.msra.mxu0 %v1385
    %1741 = vmatprep.subr.mxu0 %v1388
    %1742 = vmatpush1.msra.mxu0 %v1387
    %1743 = vmatprep.subr.mxu0 0.0
    %1744 = vmatpush1.msra.mxu0 0.0
    %1745 = vmatprep.subr.mxu0 0.0
    %1746 = vmatpush1.msra.mxu0 0.0
    %1747 = vmatprep.subr.mxu0 0.0
    %1748 = vmatpush1.msra.mxu0 0.0
    %1749 = vmatprep.subr.mxu0 0.0
    %1750 = vmatpush1.msra.mxu0 0.0
    %1751 = vmatprep.subr.mxu0 0.0
    %1752 = vmatpush1.msra.mxu0 0.0
    %1753 = vmatprep.subr.mxu0 0.0
    %1754 = vmatpush1.msra.mxu0 0.0
    %1755 = vmatprep.subr.mxu0 0.0
    %1756 = vmatpush1.msra.mxu0 0.0
    %1757 = vmatprep.subr.mxu0 0.0
    %1758 = vmatpush1.msra.mxu0 0.0
    %1759 = vmatprep.subr.mxu0 0.0
    %1760 = vmatpush1.msra.mxu0 0.0
    %1761 = vmatprep.subr.mxu0 0.0
    %1762 = vmatpush1.msra.mxu0 0.0
    %1763 = vmatprep.subr.mxu0 0.0
    %1764 = vmatpush1.msra.mxu0 0.0
    %1765 = vmatprep.subr.mxu0 0.0
    %1766 = vmatpush1.msra.mxu0 0.0
    %1767 = vmatprep.subr.mxu0 0.0
    %1768 = vmatpush1.msra.mxu0 0.0
    %1769 = vmatprep.subr.mxu0 0.0
    %1770 = vmatpush1.msra.mxu0 0.0
    %1771 = vmatprep.subr.mxu0 0.0
    %1772 = vmatpush1.msra.mxu0 0.0
    %1773 = vmatprep.subr.mxu0 0.0
    %1774 = vmatpush1.msra.mxu0 0.0
    %1775 = vmatprep.subr.mxu0 0.0
    %1776 = vmatpush1.msra.mxu0 0.0
    %1777 = vmatprep.subr.mxu0 0.0
    %1778 = vmatpush1.msra.mxu0 0.0
    %1779 = vmatprep.subr.mxu0 0.0
    %1780 = vmatpush1.msra.mxu0 0.0
    %1781 = vmatprep.subr.mxu0 0.0
    %1782 = vmatpush1.msra.mxu0 0.0
    %1783 = vmatprep.subr.mxu0 0.0
    %1784 = vmatpush1.msra.mxu0 0.0
    %1785 = vmatprep.subr.mxu0 0.0
    %1786 = vmatpush1.msra.mxu0 0.0
    %1787 = vmatprep.subr.mxu0 0.0
    %1788 = vmatpush1.msra.mxu0 0.0
    %1789 = vmatprep.subr.mxu0 0.0
    %1790 = vmatpush1.msra.mxu0 0.0
    %1791 = vmatprep.mubr.f32.mxu0 0.0
    %1792 = vmatmul.mubr.f32.gmra.mrb[0].mxu0 %v1725
    %v1793 = vpop.f32.mrb[0].mxu0
    %v1794 = vadd.f32 0.0, %v1793
    %v1795 = vpop.f32.mrb[0].mxu0
    %v1796 = vadd.f32 0.0, %v1795
    %1797 = vdwg.mxu0
    %v1798 = vadd.f32 %v1722, %v1794
    %v1799 = vadd.f32 %v1723, %v1796
    %v1800 = vxor.u32 %v1798, 2147483648
    %v1801 = vxor.u32 %v1799, 2147483648
    %v1802 = vmul.f32 %v1800, 1.442695
    %v1803 = vpow.pop %v1802
    %v1804 = vmul.f32 %v1801, 1.442695
    %v1805 = vpow.pop %v1804
    %v1806 = vadd.f32 %v1803, 1.0
    %v1807 = vadd.f32 %v1805, 1.0
    %v1808 = vrcp.pop %v1806
    %v1809 = vmul.f32 1.0, %v1808
    %v1810 = vrcp.pop %v1807
    %v1811 = vmul.f32 1.0, %v1810
    %v1812 = vtanh.pop %v1799
    %v1813 = vmul.f32 %v1809, %v1714
    %1815 = vrot.lane.b32.xlu0 %v1812, 64
    %v1816 = vpop.permute.xlu0 %1815
    %v1818 = vmul.f32 %v1809, %v1816
    %1820 = vrot.lane.b32.xlu0 %v1818, 64
    %v1821 = vpop.permute.xlu0 %1820
    %v1823 = vadd.f32 %v1813, %v1821
    %v1824 = vtanh.pop %v1823
    %1826 = vrot.lane.b32.xlu0 %v1824, 64
    %v1827 = vpop.permute.xlu0 %1826
    %v1829 = vmul.f32 %v1811, %v1827
    %1830 = vst.msk [vmem:[#allocation3 + $0x18] sm:$0xff] %vm309, %v1829
    %v1831 = vld [vmem:[#allocation2 + $0x40] sm:$0xff]
    %v1832 = vld [vmem:[#allocation2 + $0x48] sm:$0xff]
    %v1834 = vsel %vm309, %v1829, 0
    %1836 = vmatprep.subr.mxu0 %v1374
    %1837 = vmatpush1.msra.mxu0 %v1373
    %1838 = vmatprep.subr.mxu0 %v1376
    %1839 = vmatpush1.msra.mxu0 %v1375
    %1840 = vmatprep.subr.mxu0 %v1378
    %1841 = vmatpush1.msra.mxu0 %v1377
    %1842 = vmatprep.subr.mxu0 %v1380
    %1843 = vmatpush1.msra.mxu0 %v1379
    %1844 = vmatprep.subr.mxu0 %v1382
    %1845 = vmatpush1.msra.mxu0 %v1381
    %1846 = vmatprep.subr.mxu0 %v1384
    %1847 = vmatpush1.msra.mxu0 %v1383
    %1848 = vmatprep.subr.mxu0 %v1386
    %1849 = vmatpush1.msra.mxu0 %v1385
    %1850 = vmatprep.subr.mxu0 %v1388
    %1851 = vmatpush1.msra.mxu0 %v1387
    %1852 = vmatprep.subr.mxu0 0.0
    %1853 = vmatpush1.msra.mxu0 0.0
    %1854 = vmatprep.subr.mxu0 0.0
    %1855 = vmatpush1.msra.mxu0 0.0
    %1856 = vmatprep.subr.mxu0 0.0
    %1857 = vmatpush1.msra.mxu0 0.0
    %1858 = vmatprep.subr.mxu0 0.0
    %1859 = vmatpush1.msra.mxu0 0.0
    %1860 = vmatprep.subr.mxu0 0.0
    %1861 = vmatpush1.msra.mxu0 0.0
    %1862 = vmatprep.subr.mxu0 0.0
    %1863 = vmatpush1.msra.mxu0 0.0
    %1864 = vmatprep.subr.mxu0 0.0
    %1865 = vmatpush1.msra.mxu0 0.0
    %1866 = vmatprep.subr.mxu0 0.0
    %1867 = vmatpush1.msra.mxu0 0.0
    %1868 = vmatprep.subr.mxu0 0.0
    %1869 = vmatpush1.msra.mxu0 0.0
    %1870 = vmatprep.subr.mxu0 0.0
    %1871 = vmatpush1.msra.mxu0 0.0
    %1872 = vmatprep.subr.mxu0 0.0
    %1873 = vmatpush1.msra.mxu0 0.0
    %1874 = vmatprep.subr.mxu0 0.0
    %1875 = vmatpush1.msra.mxu0 0.0
    %1876 = vmatprep.subr.mxu0 0.0
    %1877 = vmatpush1.msra.mxu0 0.0
    %1878 = vmatprep.subr.mxu0 0.0
    %1879 = vmatpush1.msra.mxu0 0.0
    %1880 = vmatprep.subr.mxu0 0.0
    %1881 = vmatpush1.msra.mxu0 0.0
    %1882 = vmatprep.subr.mxu0 0.0
    %1883 = vmatpush1.msra.mxu0 0.0
    %1884 = vmatprep.subr.mxu0 0.0
    %1885 = vmatpush1.msra.mxu0 0.0
    %1886 = vmatprep.subr.mxu0 0.0
    %1887 = vmatpush1.msra.mxu0 0.0
    %1888 = vmatprep.subr.mxu0 0.0
    %1889 = vmatpush1.msra.mxu0 0.0
    %1890 = vmatprep.subr.mxu0 0.0
    %1891 = vmatpush1.msra.mxu0 0.0
    %1892 = vmatprep.subr.mxu0 0.0
    %1893 = vmatpush1.msra.mxu0 0.0
    %1894 = vmatprep.subr.mxu0 0.0
    %1895 = vmatpush1.msra.mxu0 0.0
    %1896 = vmatprep.subr.mxu0 0.0
    %1897 = vmatpush1.msra.mxu0 0.0
    %1898 = vmatprep.subr.mxu0 0.0
    %1899 = vmatpush1.msra.mxu0 0.0
    %1900 = vmatprep.mubr.f32.mxu0 0.0
    %1901 = vmatmul.mubr.f32.gmra.mrb[0].mxu0 %v1834
    %v1902 = vpop.f32.mrb[0].mxu0
    %v1903 = vadd.f32 0.0, %v1902
    %v1904 = vpop.f32.mrb[0].mxu0
    %v1905 = vadd.f32 0.0, %v1904
    %1906 = vdwg.mxu0
    %v1907 = vadd.f32 %v1831, %v1903
    %v1908 = vadd.f32 %v1832, %v1905
    %v1909 = vxor.u32 %v1907, 2147483648
    %v1910 = vxor.u32 %v1908, 2147483648
    %v1911 = vmul.f32 %v1909, 1.442695
    %v1912 = vpow.pop %v1911
    %v1913 = vmul.f32 %v1910, 1.442695
    %v1914 = vpow.pop %v1913
    %v1915 = vadd.f32 %v1912, 1.0
    %v1916 = vadd.f32 %v1914, 1.0
    %v1917 = vrcp.pop %v1915
    %v1918 = vmul.f32 1.0, %v1917
    %v1919 = vrcp.pop %v1916
    %v1920 = vmul.f32 1.0, %v1919
    %v1921 = vtanh.pop %v1908
    %v1922 = vmul.f32 %v1918, %v1823
    %1924 = vrot.lane.b32.xlu0 %v1921, 64
    %v1925 = vpop.permute.xlu0 %1924
    %v1927 = vmul.f32 %v1918, %v1925
    %1929 = vrot.lane.b32.xlu0 %v1927, 64
    %v1930 = vpop.permute.xlu0 %1929
    %v1932 = vadd.f32 %v1922, %v1930
    %v1933 = vtanh.pop %v1932
    %1935 = vrot.lane.b32.xlu0 %v1933, 64
    %v1936 = vpop.permute.xlu0 %1935
    %v1938 = vmul.f32 %v1920, %v1936
    %1939 = vst.msk [vmem:[#allocation3 + $0x20] sm:$0xff] %vm309, %v1938
    %v1940 = vld [vmem:[#allocation2 + $0x50] sm:$0xff]
    %v1941 = vld [vmem:[#allocation2 + $0x58] sm:$0xff]
    %v1943 = vsel %vm309, %v1938, 0
    %1945 = vmatprep.subr.mxu0 %v1374
    %1946 = vmatpush1.msra.mxu0 %v1373
    %1947 = vmatprep.subr.mxu0 %v1376
    %1948 = vmatpush1.msra.mxu0 %v1375
    %1949 = vmatprep.subr.mxu0 %v1378
    %1950 = vmatpush1.msra.mxu0 %v1377
    %1951 = vmatprep.subr.mxu0 %v1380
    %1952 = vmatpush1.msra.mxu0 %v1379
    %1953 = vmatprep.subr.mxu0 %v1382
    %1954 = vmatpush1.msra.mxu0 %v1381
    %1955 = vmatprep.subr.mxu0 %v1384
    %1956 = vmatpush1.msra.mxu0 %v1383
    %1957 = vmatprep.subr.mxu0 %v1386
    %1958 = vmatpush1.msra.mxu0 %v1385
    %1959 = vmatprep.subr.mxu0 %v1388
    %1960 = vmatpush1.msra.mxu0 %v1387
    %1961 = vmatprep.subr.mxu0 0.0
    %1962 = vmatpush1.msra.mxu0 0.0
    %1963 = vmatprep.subr.mxu0 0.0
    %1964 = vmatpush1.msra.mxu0 0.0
    %1965 = vmatprep.subr.mxu0 0.0
    %1966 = vmatpush1.msra.mxu0 0.0
    %1967 = vmatprep.subr.mxu0 0.0
    %1968 = vmatpush1.msra.mxu0 0.0
    %1969 = vmatprep.subr.mxu0 0.0
    %1970 = vmatpush1.msra.mxu0 0.0
    %1971 = vmatprep.subr.mxu0 0.0
    %1972 = vmatpush1.msra.mxu0 0.0
    %1973 = vmatprep.subr.mxu0 0.0
    %1974 = vmatpush1.msra.mxu0 0.0
    %1975 = vmatprep.subr.mxu0 0.0
    %1976 = vmatpush1.msra.mxu0 0.0
    %1977 = vmatprep.subr.mxu0 0.0
    %1978 = vmatpush1.msra.mxu0 0.0
    %1979 = vmatprep.subr.mxu0 0.0
    %1980 = vmatpush1.msra.mxu0 0.0
    %1981 = vmatprep.subr.mxu0 0.0
    %1982 = vmatpush1.msra.mxu0 0.0
    %1983 = vmatprep.subr.mxu0 0.0
    %1984 = vmatpush1.msra.mxu0 0.0
    %1985 = vmatprep.subr.mxu0 0.0
    %1986 = vmatpush1.msra.mxu0 0.0
    %1987 = vmatprep.subr.mxu0 0.0
    %1988 = vmatpush1.msra.mxu0 0.0
    %1989 = vmatprep.subr.mxu0 0.0
    %1990 = vmatpush1.msra.mxu0 0.0
    %1991 = vmatprep.subr.mxu0 0.0
    %1992 = vmatpush1.msra.mxu0 0.0
    %1993 = vmatprep.subr.mxu0 0.0
    %1994 = vmatpush1.msra.mxu0 0.0
    %1995 = vmatprep.subr.mxu0 0.0
    %1996 = vmatpush1.msra.mxu0 0.0
    %1997 = vmatprep.subr.mxu0 0.0
    %1998 = vmatpush1.msra.mxu0 0.0
    %1999 = vmatprep.subr.mxu0 0.0
    %2000 = vmatpush1.msra.mxu0 0.0
    %2001 = vmatprep.subr.mxu0 0.0
    %2002 = vmatpush1.msra.mxu0 0.0
    %2003 = vmatprep.subr.mxu0 0.0
    %2004 = vmatpush1.msra.mxu0 0.0
    %2005 = vmatprep.subr.mxu0 0.0
    %2006 = vmatpush1.msra.mxu0 0.0
    %2007 = vmatprep.subr.mxu0 0.0
    %2008 = vmatpush1.msra.mxu0 0.0
    %2009 = vmatprep.mubr.f32.mxu0 0.0
    %2010 = vmatmul.mubr.f32.gmra.mrb[0].mxu0 %v1943
    %v2011 = vpop.f32.mrb[0].mxu0
    %v2012 = vadd.f32 0.0, %v2011
    %v2013 = vpop.f32.mrb[0].mxu0
    %v2014 = vadd.f32 0.0, %v2013
    %2015 = vdwg.mxu0
    %v2016 = vadd.f32 %v1940, %v2012
    %v2017 = vadd.f32 %v1941, %v2014
    %v2018 = vxor.u32 %v2016, 2147483648
    %v2019 = vxor.u32 %v2017, 2147483648
    %v2020 = vmul.f32 %v2018, 1.442695
    %v2021 = vpow.pop %v2020
    %v2022 = vmul.f32 %v2019, 1.442695
    %v2023 = vpow.pop %v2022
    %v2024 = vadd.f32 %v2021, 1.0
    %v2025 = vadd.f32 %v2023, 1.0
    %v2026 = vrcp.pop %v2024
    %v2027 = vmul.f32 1.0, %v2026
    %v2028 = vrcp.pop %v2025
    %v2029 = vmul.f32 1.0, %v2028
    %v2030 = vtanh.pop %v2017
    %v2031 = vmul.f32 %v2027, %v1932
    %2033 = vrot.lane.b32.xlu0 %v2030, 64
    %v2034 = vpop.permute.xlu0 %2033
    %v2036 = vmul.f32 %v2027, %v2034
    %2038 = vrot.lane.b32.xlu0 %v2036, 64
    %v2039 = vpop.permute.xlu0 %2038
    %v2041 = vadd.f32 %v2031, %v2039
    %v2042 = vtanh.pop %v2041
    %2044 = vrot.lane.b32.xlu0 %v2042, 64
    %v2045 = vpop.permute.xlu0 %2044
    %v2047 = vmul.f32 %v2029, %v2045
    %2048 = vst.msk [vmem:[#allocation3 + $0x28] sm:$0xff] %vm309, %v2047
    %v2049 = vld [vmem:[#allocation2 + $0x60] sm:$0xff]
    %v2050 = vld [vmem:[#allocation2 + $0x68] sm:$0xff]
    %v2052 = vsel %vm309, %v2047, 0
    %2054 = vmatprep.subr.mxu0 %v1374
    %2055 = vmatpush1.msra.mxu0 %v1373
    %2056 = vmatprep.subr.mxu0 %v1376
    %2057 = vmatpush1.msra.mxu0 %v1375
    %2058 = vmatprep.subr.mxu0 %v1378
    %2059 = vmatpush1.msra.mxu0 %v1377
    %2060 = vmatprep.subr.mxu0 %v1380
    %2061 = vmatpush1.msra.mxu0 %v1379
    %2062 = vmatprep.subr.mxu0 %v1382
    %2063 = vmatpush1.msra.mxu0 %v1381
    %2064 = vmatprep.subr.mxu0 %v1384
    %2065 = vmatpush1.msra.mxu0 %v1383
    %2066 = vmatprep.subr.mxu0 %v1386
    %2067 = vmatpush1.msra.mxu0 %v1385
    %2068 = vmatprep.subr.mxu0 %v1388
    %2069 = vmatpush1.msra.mxu0 %v1387
    %2070 = vmatprep.subr.mxu0 0.0
    %2071 = vmatpush1.msra.mxu0 0.0
    %2072 = vmatprep.subr.mxu0 0.0
    %2073 = vmatpush1.msra.mxu0 0.0
    %2074 = vmatprep.subr.mxu0 0.0
    %2075 = vmatpush1.msra.mxu0 0.0
    %2076 = vmatprep.subr.mxu0 0.0
    %2077 = vmatpush1.msra.mxu0 0.0
    %2078 = vmatprep.subr.mxu0 0.0
    %2079 = vmatpush1.msra.mxu0 0.0
    %2080 = vmatprep.subr.mxu0 0.0
    %2081 = vmatpush1.msra.mxu0 0.0
    %2082 = vmatprep.subr.mxu0 0.0
    %2083 = vmatpush1.msra.mxu0 0.0
    %2084 = vmatprep.subr.mxu0 0.0
    %2085 = vmatpush1.msra.mxu0 0.0
    %2086 = vmatprep.subr.mxu0 0.0
    %2087 = vmatpush1.msra.mxu0 0.0
    %2088 = vmatprep.subr.mxu0 0.0
    %2089 = vmatpush1.msra.mxu0 0.0
    %2090 = vmatprep.subr.mxu0 0.0
    %2091 = vmatpush1.msra.mxu0 0.0
    %2092 = vmatprep.subr.mxu0 0.0
    %2093 = vmatpush1.msra.mxu0 0.0
    %2094 = vmatprep.subr.mxu0 0.0
    %2095 = vmatpush1.msra.mxu0 0.0
    %2096 = vmatprep.subr.mxu0 0.0
    %2097 = vmatpush1.msra.mxu0 0.0
    %2098 = vmatprep.subr.mxu0 0.0
    %2099 = vmatpush1.msra.mxu0 0.0
    %2100 = vmatprep.subr.mxu0 0.0
    %2101 = vmatpush1.msra.mxu0 0.0
    %2102 = vmatprep.subr.mxu0 0.0
    %2103 = vmatpush1.msra.mxu0 0.0
    %2104 = vmatprep.subr.mxu0 0.0
    %2105 = vmatpush1.msra.mxu0 0.0
    %2106 = vmatprep.subr.mxu0 0.0
    %2107 = vmatpush1.msra.mxu0 0.0
    %2108 = vmatprep.subr.mxu0 0.0
    %2109 = vmatpush1.msra.mxu0 0.0
    %2110 = vmatprep.subr.mxu0 0.0
    %2111 = vmatpush1.msra.mxu0 0.0
    %2112 = vmatprep.subr.mxu0 0.0
    %2113 = vmatpush1.msra.mxu0 0.0
    %2114 = vmatprep.subr.mxu0 0.0
    %2115 = vmatpush1.msra.mxu0 0.0
    %2116 = vmatprep.subr.mxu0 0.0
    %2117 = vmatpush1.msra.mxu0 0.0
    %2118 = vmatprep.mubr.f32.mxu0 0.0
    %2119 = vmatmul.mubr.f32.gmra.mrb[0].mxu0 %v2052
    %v2120 = vpop.f32.mrb[0].mxu0
    %v2121 = vadd.f32 0.0, %v2120
    %v2122 = vpop.f32.mrb[0].mxu0
    %v2123 = vadd.f32 0.0, %v2122
    %2124 = vdwg.mxu0
    %v2125 = vadd.f32 %v2049, %v2121
    %v2126 = vadd.f32 %v2050, %v2123
    %v2127 = vxor.u32 %v2125, 2147483648
    %v2128 = vxor.u32 %v2126, 2147483648
    %v2129 = vmul.f32 %v2127, 1.442695
    %v2130 = vpow.pop %v2129
    %v2131 = vmul.f32 %v2128, 1.442695
    %v2132 = vpow.pop %v2131
    %v2133 = vadd.f32 %v2130, 1.0
    %v2134 = vadd.f32 %v2132, 1.0
    %v2135 = vrcp.pop %v2133
    %v2136 = vmul.f32 1.0, %v2135
    %v2137 = vrcp.pop %v2134
    %v2138 = vmul.f32 1.0, %v2137
    %v2139 = vtanh.pop %v2126
    %v2140 = vmul.f32 %v2136, %v2041
    %2142 = vrot.lane.b32.xlu0 %v2139, 64
    %v2143 = vpop.permute.xlu0 %2142
    %v2145 = vmul.f32 %v2136, %v2143
    %2147 = vrot.lane.b32.xlu0 %v2145, 64
    %v2148 = vpop.permute.xlu0 %2147
    %v2150 = vadd.f32 %v2140, %v2148
    %v2151 = vtanh.pop %v2150
    %2153 = vrot.lane.b32.xlu0 %v2151, 64
    %v2154 = vpop.permute.xlu0 %2153
    %v2156 = vmul.f32 %v2138, %v2154
    %2157 = vst.msk [vmem:[#allocation3 + $0x30] sm:$0xff] %vm309, %v2156
    %v2158 = vld [vmem:[#allocation2 + $0x70] sm:$0xff]
    %v2159 = vld [vmem:[#allocation2 + $0x78] sm:$0xff]
    %v2161 = vsel %vm309, %v2156, 0
    %2163 = vmatprep.subr.mxu0 %v1374
    %2164 = vmatpush1.msra.mxu0 %v1373
    %2165 = vmatprep.subr.mxu0 %v1376
    %2166 = vmatpush1.msra.mxu0 %v1375
    %2167 = vmatprep.subr.mxu0 %v1378
    %2168 = vmatpush1.msra.mxu0 %v1377
    %2169 = vmatprep.subr.mxu0 %v1380
    %2170 = vmatpush1.msra.mxu0 %v1379
    %2171 = vmatprep.subr.mxu0 %v1382
    %2172 = vmatpush1.msra.mxu0 %v1381
    %2173 = vmatprep.subr.mxu0 %v1384
    %2174 = vmatpush1.msra.mxu0 %v1383
    %2175 = vmatprep.subr.mxu0 %v1386
    %2176 = vmatpush1.msra.mxu0 %v1385
    %2177 = vmatprep.subr.mxu0 %v1388
    %2178 = vmatpush1.msra.mxu0 %v1387
    %2179 = vmatprep.subr.mxu0 0.0
    %2180 = vmatpush1.msra.mxu0 0.0
    %2181 = vmatprep.subr.mxu0 0.0
    %2182 = vmatpush1.msra.mxu0 0.0
    %2183 = vmatprep.subr.mxu0 0.0
    %2184 = vmatpush1.msra.mxu0 0.0
    %2185 = vmatprep.subr.mxu0 0.0
    %2186 = vmatpush1.msra.mxu0 0.0
    %2187 = vmatprep.subr.mxu0 0.0
    %2188 = vmatpush1.msra.mxu0 0.0
    %2189 = vmatprep.subr.mxu0 0.0
    %2190 = vmatpush1.msra.mxu0 0.0
    %2191 = vmatprep.subr.mxu0 0.0
    %2192 = vmatpush1.msra.mxu0 0.0
    %2193 = vmatprep.subr.mxu0 0.0
    %2194 = vmatpush1.msra.mxu0 0.0
    %2195 = vmatprep.subr.mxu0 0.0
    %2196 = vmatpush1.msra.mxu0 0.0
    %2197 = vmatprep.subr.mxu0 0.0
    %2198 = vmatpush1.msra.mxu0 0.0
    %2199 = vmatprep.subr.mxu0 0.0
    %2200 = vmatpush1.msra.mxu0 0.0
    %2201 = vmatprep.subr.mxu0 0.0
    %2202 = vmatpush1.msra.mxu0 0.0
    %2203 = vmatprep.subr.mxu0 0.0
    %2204 = vmatpush1.msra.mxu0 0.0
    %2205 = vmatprep.subr.mxu0 0.0
    %2206 = vmatpush1.msra.mxu0 0.0
    %2207 = vmatprep.subr.mxu0 0.0
    %2208 = vmatpush1.msra.mxu0 0.0
    %2209 = vmatprep.subr.mxu0 0.0
    %2210 = vmatpush1.msra.mxu0 0.0
    %2211 = vmatprep.subr.mxu0 0.0
    %2212 = vmatpush1.msra.mxu0 0.0
    %2213 = vmatprep.subr.mxu0 0.0
    %2214 = vmatpush1.msra.mxu0 0.0
    %2215 = vmatprep.subr.mxu0 0.0
    %2216 = vmatpush1.msra.mxu0 0.0
    %2217 = vmatprep.subr.mxu0 0.0
    %2218 = vmatpush1.msra.mxu0 0.0
    %2219 = vmatprep.subr.mxu0 0.0
    %2220 = vmatpush1.msra.mxu0 0.0
    %2221 = vmatprep.subr.mxu0 0.0
    %2222 = vmatpush1.msra.mxu0 0.0
    %2223 = vmatprep.subr.mxu0 0.0
    %2224 = vmatpush1.msra.mxu0 0.0
    %2225 = vmatprep.subr.mxu0 0.0
    %2226 = vmatpush1.msra.mxu0 0.0
    %2227 = vmatprep.mubr.f32.mxu0 0.0
    %2228 = vmatmul.mubr.f32.gmra.mrb[0].mxu0 %v2161
    %v2229 = vpop.f32.mrb[0].mxu0
    %v2230 = vadd.f32 0.0, %v2229
    %v2231 = vpop.f32.mrb[0].mxu0
    %v2232 = vadd.f32 0.0, %v2231
    %2233 = vdwg.mxu0
    %v2234 = vadd.f32 %v2158, %v2230
    %v2235 = vadd.f32 %v2159, %v2232
    %v2236 = vxor.u32 %v2234, 2147483648
    %v2237 = vxor.u32 %v2235, 2147483648
    %v2238 = vmul.f32 %v2236, 1.442695
    %v2239 = vpow.pop %v2238
    %v2240 = vmul.f32 %v2237, 1.442695
    %v2241 = vpow.pop %v2240
    %v2242 = vadd.f32 %v2239, 1.0
    %v2243 = vadd.f32 %v2241, 1.0
    %v2244 = vrcp.pop %v2242
    %v2245 = vmul.f32 1.0, %v2244
    %v2246 = vrcp.pop %v2243
    %v2247 = vmul.f32 1.0, %v2246
    %v2248 = vtanh.pop %v2235
    %v2249 = vmul.f32 %v2245, %v2150
    %2251 = vrot.lane.b32.xlu0 %v2248, 64
    %v2252 = vpop.permute.xlu0 %2251
    %v2254 = vmul.f32 %v2245, %v2252
    %2256 = vrot.lane.b32.xlu0 %v2254, 64
    %v2257 = vpop.permute.xlu0 %2256
    %v2259 = vadd.f32 %v2249, %v2257
    %v2260 = vtanh.pop %v2259
    %2262 = vrot.lane.b32.xlu0 %v2260, 64
    %v2263 = vpop.permute.xlu0 %2262
    %v2265 = vmul.f32 %v2247, %v2263
    %2266 = vst.msk [vmem:[#allocation3 + $0x38] sm:$0xff] %vm309, %v2265
    %v2267 = vld [vmem:[#allocation3] sm:$0xff]
    %v2268 = vld [vmem:[#allocation3 + $0x8] sm:$0xff]
    %v2269 = vld [vmem:[#allocation3 + $0x10] sm:$0xff]
    %v2270 = vld [vmem:[#allocation3 + $0x18] sm:$0xff]
    %v2271 = vld [vmem:[#allocation3 + $0x20] sm:$0xff]
    %v2272 = vld [vmem:[#allocation3 + $0x28] sm:$0xff]
    %v2273 = vld [vmem:[#allocation3 + $0x30] sm:$0xff]
    %v2274 = vld [vmem:[#allocation3 + $0x38] sm:$0xff]
    %v2275 = vld [vmem:[%s12] sm:$0xff]
    %v2276 = vld [vmem:[%s12 + $0x8] sm:$0xff]
    %v2277 = vld [vmem:[%s12 + $0x10] sm:$0xff]
    %v2278 = vld [vmem:[%s12 + $0x18] sm:$0xff]
    %v2279 = vld [vmem:[%s12 + $0x20] sm:$0xff]
    %v2280 = vld [vmem:[%s12 + $0x28] sm:$0xff]
    %v2281 = vld [vmem:[%s12 + $0x30] sm:$0xff]
    %v2282 = vld [vmem:[%s12 + $0x38] sm:$0xff]
    %v2283 = vld [vmem:[#allocation12] sm:$0xff]
    %v2284 = vld [vmem:[#allocation12 + $0x8] sm:$0xff]
    %v2285 = vld [vmem:[#allocation12 + $0x10] sm:$0xff]
    %v2286 = vld [vmem:[#allocation12 + $0x18] sm:$0xff]
    %v2287 = vld [vmem:[#allocation12 + $0x20] sm:$0xff]
    %v2288 = vld [vmem:[#allocation12 + $0x28] sm:$0xff]
    %v2289 = vld [vmem:[#allocation12 + $0x30] sm:$0xff]
    %v2290 = vld [vmem:[#allocation12 + $0x38] sm:$0xff]
    %v2291 = vmul.f32 %v2283, %v2267
    %v2292 = vmul.f32 %v2284, %v2267
    %v2293 = vmul.f32 %v2285, %v2267
    %v2294 = vmul.f32 %v2286, %v2267
    %v2295 = vmul.f32 %v2287, %v2267
    %v2296 = vmul.f32 %v2288, %v2267
    %v2297 = vmul.f32 %v2289, %v2267
    %v2298 = vmul.f32 %v2290, %v2267
    %v2299 = vadd.f32 %v2275, %v2291
    %v2300 = vadd.f32 %v2276, %v2292
    %v2301 = vadd.f32 %v2277, %v2293
    %v2302 = vadd.f32 %v2278, %v2294
    %v2303 = vadd.f32 %v2279, %v2295
    %v2304 = vadd.f32 %v2280, %v2296
    %v2305 = vadd.f32 %v2281, %v2297
    %v2306 = vadd.f32 %v2282, %v2298
    %s2307 = scalar_lea.vmem [#allocation12], 64
    %v2308 = vld [vmem:[%s2307] sm:$0xff]
    %v2309 = vld [vmem:[%s2307 + $0x8] sm:$0xff]
    %v2310 = vld [vmem:[%s2307 + $0x10] sm:$0xff]
    %v2311 = vld [vmem:[%s2307 + $0x18] sm:$0xff]
    %v2312 = vld [vmem:[%s2307 + $0x20] sm:$0xff]
    %v2313 = vld [vmem:[%s2307 + $0x28] sm:$0xff]
    %v2314 = vld [vmem:[%s2307 + $0x30] sm:$0xff]
    %v2315 = vld [vmem:[%s2307 + $0x38] sm:$0xff]
    %v2316 = vmul.f32 %v2308, %v2268
    %v2317 = vmul.f32 %v2309, %v2268
    %v2318 = vmul.f32 %v2310, %v2268
    %v2319 = vmul.f32 %v2311, %v2268
    %v2320 = vmul.f32 %v2312, %v2268
    %v2321 = vmul.f32 %v2313, %v2268
    %v2322 = vmul.f32 %v2314, %v2268
    %v2323 = vmul.f32 %v2315, %v2268
    %v2324 = vadd.f32 %v2299, %v2316
    %v2325 = vadd.f32 %v2300, %v2317
    %v2326 = vadd.f32 %v2301, %v2318
    %v2327 = vadd.f32 %v2302, %v2319
    %v2328 = vadd.f32 %v2303, %v2320
    %v2329 = vadd.f32 %v2304, %v2321
    %v2330 = vadd.f32 %v2305, %v2322
    %v2331 = vadd.f32 %v2306, %v2323
    %s2332 = scalar_lea.vmem [#allocation12], 128
    %v2333 = vld [vmem:[%s2332] sm:$0xff]
    %v2334 = vld [vmem:[%s2332 + $0x8] sm:$0xff]
    %v2335 = vld [vmem:[%s2332 + $0x10] sm:$0xff]
    %v2336 = vld [vmem:[%s2332 + $0x18] sm:$0xff]
    %v2337 = vld [vmem:[%s2332 + $0x20] sm:$0xff]
    %v2338 = vld [vmem:[%s2332 + $0x28] sm:$0xff]
    %v2339 = vld [vmem:[%s2332 + $0x30] sm:$0xff]
    %v2340 = vld [vmem:[%s2332 + $0x38] sm:$0xff]
    %v2341 = vmul.f32 %v2333, %v2269
    %v2342 = vmul.f32 %v2334, %v2269
    %v2343 = vmul.f32 %v2335, %v2269
    %v2344 = vmul.f32 %v2336, %v2269
    %v2345 = vmul.f32 %v2337, %v2269
    %v2346 = vmul.f32 %v2338, %v2269
    %v2347 = vmul.f32 %v2339, %v2269
    %v2348 = vmul.f32 %v2340, %v2269
    %v2349 = vadd.f32 %v2324, %v2341
    %v2350 = vadd.f32 %v2325, %v2342
    %v2351 = vadd.f32 %v2326, %v2343
    %v2352 = vadd.f32 %v2327, %v2344
    %v2353 = vadd.f32 %v2328, %v2345
    %v2354 = vadd.f32 %v2329, %v2346
    %v2355 = vadd.f32 %v2330, %v2347
    %v2356 = vadd.f32 %v2331, %v2348
    %s2357 = scalar_lea.vmem [#allocation12], 192
    %v2358 = vld [vmem:[%s2357] sm:$0xff]
    %v2359 = vld [vmem:[%s2357 + $0x8] sm:$0xff]
    %v2360 = vld [vmem:[%s2357 + $0x10] sm:$0xff]
    %v2361 = vld [vmem:[%s2357 + $0x18] sm:$0xff]
    %v2362 = vld [vmem:[%s2357 + $0x20] sm:$0xff]
    %v2363 = vld [vmem:[%s2357 + $0x28] sm:$0xff]
    %v2364 = vld [vmem:[%s2357 + $0x30] sm:$0xff]
    %v2365 = vld [vmem:[%s2357 + $0x38] sm:$0xff]
    %v2366 = vmul.f32 %v2358, %v2270
    %v2367 = vmul.f32 %v2359, %v2270
    %v2368 = vmul.f32 %v2360, %v2270
    %v2369 = vmul.f32 %v2361, %v2270
    %v2370 = vmul.f32 %v2362, %v2270
    %v2371 = vmul.f32 %v2363, %v2270
    %v2372 = vmul.f32 %v2364, %v2270
    %v2373 = vmul.f32 %v2365, %v2270
    %v2374 = vadd.f32 %v2349, %v2366
    %v2375 = vadd.f32 %v2350, %v2367
    %v2376 = vadd.f32 %v2351, %v2368
    %v2377 = vadd.f32 %v2352, %v2369
    %v2378 = vadd.f32 %v2353, %v2370
    %v2379 = vadd.f32 %v2354, %v2371
    %v2380 = vadd.f32 %v2355, %v2372
    %v2381 = vadd.f32 %v2356, %v2373
    %s2382 = scalar_lea.vmem [#allocation12], 256
    %v2383 = vld [vmem:[%s2382] sm:$0xff]
    %v2384 = vld [vmem:[%s2382 + $0x8] sm:$0xff]
    %v2385 = vld [vmem:[%s2382 + $0x10] sm:$0xff]
    %v2386 = vld [vmem:[%s2382 + $0x18] sm:$0xff]
    %v2387 = vld [vmem:[%s2382 + $0x20] sm:$0xff]
    %v2388 = vld [vmem:[%s2382 + $0x28] sm:$0xff]
    %v2389 = vld [vmem:[%s2382 + $0x30] sm:$0xff]
    %v2390 = vld [vmem:[%s2382 + $0x38] sm:$0xff]
    %v2391 = vmul.f32 %v2383, %v2271
    %v2392 = vmul.f32 %v2384, %v2271
    %v2393 = vmul.f32 %v2385, %v2271
    %v2394 = vmul.f32 %v2386, %v2271
    %v2395 = vmul.f32 %v2387, %v2271
    %v2396 = vmul.f32 %v2388, %v2271
    %v2397 = vmul.f32 %v2389, %v2271
    %v2398 = vmul.f32 %v2390, %v2271
    %v2399 = vadd.f32 %v2374, %v2391
    %v2400 = vadd.f32 %v2375, %v2392
    %v2401 = vadd.f32 %v2376, %v2393
    %v2402 = vadd.f32 %v2377, %v2394
    %v2403 = vadd.f32 %v2378, %v2395
    %v2404 = vadd.f32 %v2379, %v2396
    %v2405 = vadd.f32 %v2380, %v2397
    %v2406 = vadd.f32 %v2381, %v2398
    %s2407 = scalar_lea.vmem [#allocation12], 320
    %v2408 = vld [vmem:[%s2407] sm:$0xff]
    %v2409 = vld [vmem:[%s2407 + $0x8] sm:$0xff]
    %v2410 = vld [vmem:[%s2407 + $0x10] sm:$0xff]
    %v2411 = vld [vmem:[%s2407 + $0x18] sm:$0xff]
    %v2412 = vld [vmem:[%s2407 + $0x20] sm:$0xff]
    %v2413 = vld [vmem:[%s2407 + $0x28] sm:$0xff]
    %v2414 = vld [vmem:[%s2407 + $0x30] sm:$0xff]
    %v2415 = vld [vmem:[%s2407 + $0x38] sm:$0xff]
    %v2416 = vmul.f32 %v2408, %v2272
    %v2417 = vmul.f32 %v2409, %v2272
    %v2418 = vmul.f32 %v2410, %v2272
    %v2419 = vmul.f32 %v2411, %v2272
    %v2420 = vmul.f32 %v2412, %v2272
    %v2421 = vmul.f32 %v2413, %v2272
    %v2422 = vmul.f32 %v2414, %v2272
    %v2423 = vmul.f32 %v2415, %v2272
    %v2424 = vadd.f32 %v2399, %v2416
    %v2425 = vadd.f32 %v2400, %v2417
    %v2426 = vadd.f32 %v2401, %v2418
    %v2427 = vadd.f32 %v2402, %v2419
    %v2428 = vadd.f32 %v2403, %v2420
    %v2429 = vadd.f32 %v2404, %v2421
    %v2430 = vadd.f32 %v2405, %v2422
    %v2431 = vadd.f32 %v2406, %v2423
    %s2432 = scalar_lea.vmem [#allocation12], 384
    %v2433 = vld [vmem:[%s2432] sm:$0xff]
    %v2434 = vld [vmem:[%s2432 + $0x8] sm:$0xff]
    %v2435 = vld [vmem:[%s2432 + $0x10] sm:$0xff]
    %v2436 = vld [vmem:[%s2432 + $0x18] sm:$0xff]
    %v2437 = vld [vmem:[%s2432 + $0x20] sm:$0xff]
    %v2438 = vld [vmem:[%s2432 + $0x28] sm:$0xff]
    %v2439 = vld [vmem:[%s2432 + $0x30] sm:$0xff]
    %v2440 = vld [vmem:[%s2432 + $0x38] sm:$0xff]
    %v2441 = vmul.f32 %v2433, %v2273
    %v2442 = vmul.f32 %v2434, %v2273
    %v2443 = vmul.f32 %v2435, %v2273
    %v2444 = vmul.f32 %v2436, %v2273
    %v2445 = vmul.f32 %v2437, %v2273
    %v2446 = vmul.f32 %v2438, %v2273
    %v2447 = vmul.f32 %v2439, %v2273
    %v2448 = vmul.f32 %v2440, %v2273
    %v2449 = vadd.f32 %v2424, %v2441
    %v2450 = vadd.f32 %v2425, %v2442
    %v2451 = vadd.f32 %v2426, %v2443
    %v2452 = vadd.f32 %v2427, %v2444
    %v2453 = vadd.f32 %v2428, %v2445
    %v2454 = vadd.f32 %v2429, %v2446
    %v2455 = vadd.f32 %v2430, %v2447
    %v2456 = vadd.f32 %v2431, %v2448
    %s2457 = scalar_lea.vmem [#allocation12], 448
    %v2458 = vld [vmem:[%s2457] sm:$0xff]
    %v2459 = vld [vmem:[%s2457 + $0x8] sm:$0xff]
    %v2460 = vld [vmem:[%s2457 + $0x10] sm:$0xff]
    %v2461 = vld [vmem:[%s2457 + $0x18] sm:$0xff]
    %v2462 = vld [vmem:[%s2457 + $0x20] sm:$0xff]
    %v2463 = vld [vmem:[%s2457 + $0x28] sm:$0xff]
    %v2464 = vld [vmem:[%s2457 + $0x30] sm:$0xff]
    %v2465 = vld [vmem:[%s2457 + $0x38] sm:$0xff]
    %v2466 = vmul.f32 %v2458, %v2274
    %v2467 = vmul.f32 %v2459, %v2274
    %v2468 = vmul.f32 %v2460, %v2274
    %v2469 = vmul.f32 %v2461, %v2274
    %v2470 = vmul.f32 %v2462, %v2274
    %v2471 = vmul.f32 %v2463, %v2274
    %v2472 = vmul.f32 %v2464, %v2274
    %v2473 = vmul.f32 %v2465, %v2274
    %v2474 = vadd.f32 %v2449, %v2466
    %v2475 = vadd.f32 %v2450, %v2467
    %v2476 = vadd.f32 %v2451, %v2468
    %v2477 = vadd.f32 %v2452, %v2469
    %v2478 = vadd.f32 %v2453, %v2470
    %v2479 = vadd.f32 %v2454, %v2471
    %v2480 = vadd.f32 %v2455, %v2472
    %v2481 = vadd.f32 %v2456, %v2473
    %s2482 = scalar_lea.vmem [#allocation12], 512
    %v2483 = vld [vmem:[%s2482] sm:$0xff]
    %v2484 = vld [vmem:[%s2482 + $0x8] sm:$0xff]
    %v2485 = vld [vmem:[%s2482 + $0x10] sm:$0xff]
    %v2486 = vld [vmem:[%s2482 + $0x18] sm:$0xff]
    %v2487 = vld [vmem:[%s2482 + $0x20] sm:$0xff]
    %v2488 = vld [vmem:[%s2482 + $0x28] sm:$0xff]
    %v2489 = vld [vmem:[%s2482 + $0x30] sm:$0xff]
    %v2490 = vld [vmem:[%s2482 + $0x38] sm:$0xff]
    %2492 = vrot.lane.b32.xlu0 %v2267, 96
    %v2493 = vpop.permute.xlu0 %2492
    %v2495 = vmul.f32 %v2483, %v2493
    %v2496 = vmul.f32 %v2484, %v2493
    %v2497 = vmul.f32 %v2485, %v2493
    %v2498 = vmul.f32 %v2486, %v2493
    %v2499 = vmul.f32 %v2487, %v2493
    %v2500 = vmul.f32 %v2488, %v2493
    %v2501 = vmul.f32 %v2489, %v2493
    %v2502 = vmul.f32 %v2490, %v2493
    %v2503 = vadd.f32 %v2474, %v2495
    %v2504 = vadd.f32 %v2475, %v2496
    %v2505 = vadd.f32 %v2476, %v2497
    %v2506 = vadd.f32 %v2477, %v2498
    %v2507 = vadd.f32 %v2478, %v2499
    %v2508 = vadd.f32 %v2479, %v2500
    %v2509 = vadd.f32 %v2480, %v2501
    %v2510 = vadd.f32 %v2481, %v2502
    %s2511 = scalar_lea.vmem [#allocation12], 576
    %v2512 = vld [vmem:[%s2511] sm:$0xff]
    %v2513 = vld [vmem:[%s2511 + $0x8] sm:$0xff]
    %v2514 = vld [vmem:[%s2511 + $0x10] sm:$0xff]
    %v2515 = vld [vmem:[%s2511 + $0x18] sm:$0xff]
    %v2516 = vld [vmem:[%s2511 + $0x20] sm:$0xff]
    %v2517 = vld [vmem:[%s2511 + $0x28] sm:$0xff]
    %v2518 = vld [vmem:[%s2511 + $0x30] sm:$0xff]
    %v2519 = vld [vmem:[%s2511 + $0x38] sm:$0xff]
    %2521 = vrot.lane.b32.xlu0 %v2268, 96
    %v2522 = vpop.permute.xlu0 %2521
    %v2524 = vmul.f32 %v2512, %v2522
    %v2525 = vmul.f32 %v2513, %v2522
    %v2526 = vmul.f32 %v2514, %v2522
    %v2527 = vmul.f32 %v2515, %v2522
    %v2528 = vmul.f32 %v2516, %v2522
    %v2529 = vmul.f32 %v2517, %v2522
    %v2530 = vmul.f32 %v2518, %v2522
    %v2531 = vmul.f32 %v2519, %v2522
    %v2532 = vadd.f32 %v2503, %v2524
    %v2533 = vadd.f32 %v2504, %v2525
    %v2534 = vadd.f32 %v2505, %v2526
    %v2535 = vadd.f32 %v2506, %v2527
    %v2536 = vadd.f32 %v2507, %v2528
    %v2537 = vadd.f32 %v2508, %v2529
    %v2538 = vadd.f32 %v2509, %v2530
    %v2539 = vadd.f32 %v2510, %v2531
    %s2540 = scalar_lea.vmem [#allocation12], 640
    %v2541 = vld [vmem:[%s2540] sm:$0xff]
    %v2542 = vld [vmem:[%s2540 + $0x8] sm:$0xff]
    %v2543 = vld [vmem:[%s2540 + $0x10] sm:$0xff]
    %v2544 = vld [vmem:[%s2540 + $0x18] sm:$0xff]
    %v2545 = vld [vmem:[%s2540 + $0x20] sm:$0xff]
    %v2546 = vld [vmem:[%s2540 + $0x28] sm:$0xff]
    %v2547 = vld [vmem:[%s2540 + $0x30] sm:$0xff]
    %v2548 = vld [vmem:[%s2540 + $0x38] sm:$0xff]
    %2550 = vrot.lane.b32.xlu0 %v2269, 96
    %v2551 = vpop.permute.xlu0 %2550
    %v2553 = vmul.f32 %v2541, %v2551
    %v2554 = vmul.f32 %v2542, %v2551
    %v2555 = vmul.f32 %v2543, %v2551
    %v2556 = vmul.f32 %v2544, %v2551
    %v2557 = vmul.f32 %v2545, %v2551
    %v2558 = vmul.f32 %v2546, %v2551
    %v2559 = vmul.f32 %v2547, %v2551
    %v2560 = vmul.f32 %v2548, %v2551
    %v2561 = vadd.f32 %v2532, %v2553
    %v2562 = vadd.f32 %v2533, %v2554
    %v2563 = vadd.f32 %v2534, %v2555
    %v2564 = vadd.f32 %v2535, %v2556
    %v2565 = vadd.f32 %v2536, %v2557
    %v2566 = vadd.f32 %v2537, %v2558
    %v2567 = vadd.f32 %v2538, %v2559
    %v2568 = vadd.f32 %v2539, %v2560
    %s2569 = scalar_lea.vmem [#allocation12], 704
    %v2570 = vld [vmem:[%s2569] sm:$0xff]
    %v2571 = vld [vmem:[%s2569 + $0x8] sm:$0xff]
    %v2572 = vld [vmem:[%s2569 + $0x10] sm:$0xff]
    %v2573 = vld [vmem:[%s2569 + $0x18] sm:$0xff]
    %v2574 = vld [vmem:[%s2569 + $0x20] sm:$0xff]
    %v2575 = vld [vmem:[%s2569 + $0x28] sm:$0xff]
    %v2576 = vld [vmem:[%s2569 + $0x30] sm:$0xff]
    %v2577 = vld [vmem:[%s2569 + $0x38] sm:$0xff]
    %2579 = vrot.lane.b32.xlu0 %v2270, 96
    %v2580 = vpop.permute.xlu0 %2579
    %v2582 = vmul.f32 %v2570, %v2580
    %v2583 = vmul.f32 %v2571, %v2580
    %v2584 = vmul.f32 %v2572, %v2580
    %v2585 = vmul.f32 %v2573, %v2580
    %v2586 = vmul.f32 %v2574, %v2580
    %v2587 = vmul.f32 %v2575, %v2580
    %v2588 = vmul.f32 %v2576, %v2580
    %v2589 = vmul.f32 %v2577, %v2580
    %v2590 = vadd.f32 %v2561, %v2582
    %v2591 = vadd.f32 %v2562, %v2583
    %v2592 = vadd.f32 %v2563, %v2584
    %v2593 = vadd.f32 %v2564, %v2585
    %v2594 = vadd.f32 %v2565, %v2586
    %v2595 = vadd.f32 %v2566, %v2587
    %v2596 = vadd.f32 %v2567, %v2588
    %v2597 = vadd.f32 %v2568, %v2589
    %s2598 = scalar_lea.vmem [#allocation12], 768
    %v2599 = vld [vmem:[%s2598] sm:$0xff]
    %v2600 = vld [vmem:[%s2598 + $0x8] sm:$0xff]
    %v2601 = vld [vmem:[%s2598 + $0x10] sm:$0xff]
    %v2602 = vld [vmem:[%s2598 + $0x18] sm:$0xff]
    %v2603 = vld [vmem:[%s2598 + $0x20] sm:$0xff]
    %v2604 = vld [vmem:[%s2598 + $0x28] sm:$0xff]
    %v2605 = vld [vmem:[%s2598 + $0x30] sm:$0xff]
    %v2606 = vld [vmem:[%s2598 + $0x38] sm:$0xff]
    %2608 = vrot.lane.b32.xlu0 %v2271, 96
    %v2609 = vpop.permute.xlu0 %2608
    %v2611 = vmul.f32 %v2599, %v2609
    %v2612 = vmul.f32 %v2600, %v2609
    %v2613 = vmul.f32 %v2601, %v2609
    %v2614 = vmul.f32 %v2602, %v2609
    %v2615 = vmul.f32 %v2603, %v2609
    %v2616 = vmul.f32 %v2604, %v2609
    %v2617 = vmul.f32 %v2605, %v2609
    %v2618 = vmul.f32 %v2606, %v2609
    %v2619 = vadd.f32 %v2590, %v2611
    %v2620 = vadd.f32 %v2591, %v2612
    %v2621 = vadd.f32 %v2592, %v2613
    %v2622 = vadd.f32 %v2593, %v2614
    %v2623 = vadd.f32 %v2594, %v2615
    %v2624 = vadd.f32 %v2595, %v2616
    %v2625 = vadd.f32 %v2596, %v2617
    %v2626 = vadd.f32 %v2597, %v2618
    %s2627 = scalar_lea.vmem [#allocation12], 832
    %v2628 = vld [vmem:[%s2627] sm:$0xff]
    %v2629 = vld [vmem:[%s2627 + $0x8] sm:$0xff]
    %v2630 = vld [vmem:[%s2627 + $0x10] sm:$0xff]
    %v2631 = vld [vmem:[%s2627 + $0x18] sm:$0xff]
    %v2632 = vld [vmem:[%s2627 + $0x20] sm:$0xff]
    %v2633 = vld [vmem:[%s2627 + $0x28] sm:$0xff]
    %v2634 = vld [vmem:[%s2627 + $0x30] sm:$0xff]
    %v2635 = vld [vmem:[%s2627 + $0x38] sm:$0xff]
    %2637 = vrot.lane.b32.xlu0 %v2272, 96
    %v2638 = vpop.permute.xlu0 %2637
    %v2640 = vmul.f32 %v2628, %v2638
    %v2641 = vmul.f32 %v2629, %v2638
    %v2642 = vmul.f32 %v2630, %v2638
    %v2643 = vmul.f32 %v2631, %v2638
    %v2644 = vmul.f32 %v2632, %v2638
    %v2645 = vmul.f32 %v2633, %v2638
    %v2646 = vmul.f32 %v2634, %v2638
    %v2647 = vmul.f32 %v2635, %v2638
    %v2648 = vadd.f32 %v2619, %v2640
    %v2649 = vadd.f32 %v2620, %v2641
    %v2650 = vadd.f32 %v2621, %v2642
    %v2651 = vadd.f32 %v2622, %v2643
    %v2652 = vadd.f32 %v2623, %v2644
    %v2653 = vadd.f32 %v2624, %v2645
    %v2654 = vadd.f32 %v2625, %v2646
    %v2655 = vadd.f32 %v2626, %v2647
    %s2656 = scalar_lea.vmem [#allocation12], 896
    %v2657 = vld [vmem:[%s2656] sm:$0xff]
    %v2658 = vld [vmem:[%s2656 + $0x8] sm:$0xff]
    %v2659 = vld [vmem:[%s2656 + $0x10] sm:$0xff]
    %v2660 = vld [vmem:[%s2656 + $0x18] sm:$0xff]
    %v2661 = vld [vmem:[%s2656 + $0x20] sm:$0xff]
    %v2662 = vld [vmem:[%s2656 + $0x28] sm:$0xff]
    %v2663 = vld [vmem:[%s2656 + $0x30] sm:$0xff]
    %v2664 = vld [vmem:[%s2656 + $0x38] sm:$0xff]
    %2666 = vrot.lane.b32.xlu0 %v2273, 96
    %v2667 = vpop.permute.xlu0 %2666
    %v2669 = vmul.f32 %v2657, %v2667
    %v2670 = vmul.f32 %v2658, %v2667
    %v2671 = vmul.f32 %v2659, %v2667
    %v2672 = vmul.f32 %v2660, %v2667
    %v2673 = vmul.f32 %v2661, %v2667
    %v2674 = vmul.f32 %v2662, %v2667
    %v2675 = vmul.f32 %v2663, %v2667
    %v2676 = vmul.f32 %v2664, %v2667
    %v2677 = vadd.f32 %v2648, %v2669
    %v2678 = vadd.f32 %v2649, %v2670
    %v2679 = vadd.f32 %v2650, %v2671
    %v2680 = vadd.f32 %v2651, %v2672
    %v2681 = vadd.f32 %v2652, %v2673
    %v2682 = vadd.f32 %v2653, %v2674
    %v2683 = vadd.f32 %v2654, %v2675
    %v2684 = vadd.f32 %v2655, %v2676
    %s2685 = scalar_lea.vmem [#allocation12], 960
    %v2686 = vld [vmem:[%s2685] sm:$0xff]
    %v2687 = vld [vmem:[%s2685 + $0x8] sm:$0xff]
    %v2688 = vld [vmem:[%s2685 + $0x10] sm:$0xff]
    %v2689 = vld [vmem:[%s2685 + $0x18] sm:$0xff]
    %v2690 = vld [vmem:[%s2685 + $0x20] sm:$0xff]
    %v2691 = vld [vmem:[%s2685 + $0x28] sm:$0xff]
    %v2692 = vld [vmem:[%s2685 + $0x30] sm:$0xff]
    %v2693 = vld [vmem:[%s2685 + $0x38] sm:$0xff]
    %2695 = vrot.lane.b32.xlu0 %v2274, 96
    %v2696 = vpop.permute.xlu0 %2695
    %v2698 = vmul.f32 %v2686, %v2696
    %v2699 = vmul.f32 %v2687, %v2696
    %v2700 = vmul.f32 %v2688, %v2696
    %v2701 = vmul.f32 %v2689, %v2696
    %v2702 = vmul.f32 %v2690, %v2696
    %v2703 = vmul.f32 %v2691, %v2696
    %v2704 = vmul.f32 %v2692, %v2696
    %v2705 = vmul.f32 %v2693, %v2696
    %v2706 = vadd.f32 %v2677, %v2698
    %v2707 = vadd.f32 %v2678, %v2699
    %v2708 = vadd.f32 %v2679, %v2700
    %v2709 = vadd.f32 %v2680, %v2701
    %v2710 = vadd.f32 %v2681, %v2702
    %v2711 = vadd.f32 %v2682, %v2703
    %v2712 = vadd.f32 %v2683, %v2704
    %v2713 = vadd.f32 %v2684, %v2705
    %vm2714 = vcmask 261120
    %2715 = vst.msk [vmem:[#allocation13] sm:$0xff] %vm2714, %v2706
    %2716 = vst.msk [vmem:[#allocation13 + $0x8] sm:$0xff] %vm2714, %v2707
    %2717 = vst.msk [vmem:[#allocation13 + $0x10] sm:$0xff] %vm2714, %v2708
    %2718 = vst.msk [vmem:[#allocation13 + $0x18] sm:$0xff] %vm2714, %v2709
    %2719 = vst.msk [vmem:[#allocation13 + $0x20] sm:$0xff] %vm2714, %v2710
    %2720 = vst.msk [vmem:[#allocation13 + $0x28] sm:$0xff] %vm2714, %v2711
    %2721 = vst.msk [vmem:[#allocation13 + $0x30] sm:$0xff] %vm2714, %v2712
    %2722 = vst.msk [vmem:[#allocation13 + $0x38] sm:$0xff] %vm2714, %v2713
    // Predicated region
    $region74: #{tpu_custom_call.1} parent=1 // pred_check
      _
    $region75: #{tpu_custom_call.1} parent=1 // pred_check_branch
      %2724 = sbr.rel (0) target = $region77
    $region76: #{tpu_custom_call.1} parent=1 // pred_region
      %s2726 = ssub.s32 1024, 1024
      %2727 = vsyncadd [#allocation6], %s2726
      %s2728 = sshll.u32 [#allocation13], 4
      %s2729 = int_to_ptr.vmem [resolvable:$true] %s2728
      %2734 = dma.vmem_to_hbm [thread:$0]  %s2729, 1024, %s13, [#allocation6], 128, 128, 8
    $region77: #{tpu_custom_call.1} parent=1 // pred_fallthru
      _
    // Predicated region
    $region78: #{tpu_custom_call.1} parent=1 // pred_check
      _
    $region79: #{tpu_custom_call.1} parent=1 // pred_check_branch
      %2736 = sbr.rel (0) target = $region81
    $region80: #{tpu_custom_call.1} parent=1 // pred_region
      %2737 = dma.done [#allocation6], 1024
    $region81: #{tpu_custom_call.1} parent=1 // pred_fallthru
      _
    %2738 = vsyncpa [#allocation5], 1
    %2739 = vsyncpa [#allocation8], 1
    %2740 = vsyncpa [#allocation11], 1
    %2741 = vsyncpa [#allocation6], 1

</llo_original>
